<compile_context>
chip_gen: v5e
topology: v5e:2x2
jax: 0.10.0
libtpu: 0.0.40
codegen_flags: <defaults>
</compile_context>

<pallas_src>
import jax
import jax.numpy as jnp
from jax.experimental import pallas as pl
from jax.experimental.pallas import tpu as pltpu


CONV_CFG = [  # (kernel, Cin, Cout, stride, padding)
    (64, 1, 16, 8, 32),
    (3, 16, 32, 1, 1),
    (3, 32, 64, 1, 1),
    (3, 64, 64, 1, 1),
    (3, 64, 64, 1, 1),
    (3, 64, 64, 1, 1),
]
HEADS = (("size", 10), ("type", 4), ("load", 3))
K1, STRIDE1, PAD1 = 64, 8, 32
DENSE_PAD = 128       # dense 109 -> 128 output lanes
HEAD_HIDDEN = 128
N_OUT_PAD = 128       # merged head output (10+4+3=17) padded to 128 lanes


# ----------------------------------------------------------------------------
# In-kernel helpers (traced inside the Pallas kernel body)
# ----------------------------------------------------------------------------
def _select_rows(n_out, n_in, mult, offset):
    """(n_out, n_in) f32 selection matrix: S[i, j] = 1 iff j == mult*i + offset."""
    i = jax.lax.broadcasted_iota(jnp.int32, (n_out, n_in), 0)
    j = jax.lax.broadcasted_iota(jnp.int32, (n_out, n_in), 1)
    return (j == mult * i + offset).astype(jnp.float32)


def _pool2_relu(y):
    """MaxPool1d(kernel=2, stride=2) over rows + ReLU: (L, C) -> (L//2, C)."""
    lin = y.shape[0]
    lo = lin // 2
    even = jnp.dot(_select_rows(lo, lin, 2, 0), y, preferred_element_type=jnp.float32)
    odd = jnp.dot(_select_rows(lo, lin, 2, 1), y, preferred_element_type=jnp.float32)
    return jnp.maximum(jnp.maximum(even, odd), 0.0)


def _conv3_pool_relu(x, w_ref, b_ref):
    """Conv1d(k=3, s=1, p=1) + MaxPool(2) + ReLU on a (L, Cin) activation."""
    lin = x.shape[0]
    # x[l-1] (zero at l=0) and x[l+1] (zero at l=L-1) via selection matmuls
    x_prev = jnp.dot(_select_rows(lin, lin, 1, -1), x, preferred_element_type=jnp.float32)
    x_next = jnp.dot(_select_rows(lin, lin, 1, 1), x, preferred_element_type=jnp.float32)
    y = (jnp.dot(x_prev, w_ref[0], preferred_element_type=jnp.float32)
         + jnp.dot(x, w_ref[1], preferred_element_type=jnp.float32)
         + jnp.dot(x_next, w_ref[2], preferred_element_type=jnp.float32)
         + b_ref[...])
    return _pool2_relu(y)


# ----------------------------------------------------------------------------
# The fused kernel: full WDCNNP forward for one batch element per grid step
# ----------------------------------------------------------------------------
def _wdcnnp_kernel(x_ref, w1_ref, b1_ref,
                   w2_ref, b2_ref, w3_ref, b3_ref, w4_ref, b4_ref,
                   w5_ref, b5_ref, w6_ref, b6_ref,
                   wd_ref, bd_ref, wh1_ref, bh1_ref, wh2_ref, bh2_ref,
                   o_ref):
    f32 = jnp.float32
    xin = x_ref[0]                                    # (rows, 8): stride-folded padded signal
    rows = xin.shape[0]
    n1 = rows - (K1 // STRIDE1) + 1                   # conv1 output length (65 for L=512)
    c1 = w1_ref.shape[2]

    # conv1 (k=64, s=8, Cin=1) as 8 accumulated matmuls over row-shifted windows
    acc = jnp.zeros((n1, c1), dtype=f32)
    for s in range(K1 // STRIDE1):
        xs = jnp.dot(_select_rows(n1, rows, 1, s), xin, preferred_element_type=f32)  # (n1, 8)
        acc = acc + jnp.dot(xs, w1_ref[s], preferred_element_type=f32)
    act = _pool2_relu(acc + b1_ref[...])              # (32, 16)

    # conv2..conv6, each fused with MaxPool(2)+ReLU
    for w_ref, b_ref in ((w2_ref, b2_ref), (w3_ref, b3_ref), (w4_ref, b4_ref),
                         (w5_ref, b5_ref), (w6_ref, b6_ref)):
        act = _conv3_pool_relu(act, w_ref, b_ref)     # -> (1, 64) at L=512

    # AdaptiveAvgPool1d(1): mean over length (rows); identity when final length == 1
    l6 = act.shape[0]
    if l6 == 1:
        feat = act                                    # (1, 64)
    else:
        feat = jnp.dot(jnp.full((1, l6), 1.0 / l6, dtype=f32), act,
                       preferred_element_type=f32)

    # dense (64 -> 109, padded to 128 lanes) and the 3 merged FC heads
    d = jnp.dot(feat, wd_ref[...], preferred_element_type=f32) + bd_ref[...]           # (1, 128)
    h = jnp.maximum(jnp.dot(d, wh1_ref[...], preferred_element_type=f32) + bh1_ref[...],
                    0.0)                                                                # (1, 384)
    o_ref[0] = jnp.dot(h, wh2_ref[...], preferred_element_type=f32) + bh2_ref[...]     # (1, 128)


# ----------------------------------------------------------------------------
# Parameters: deterministic synthetic init in "logical" layouts, then packed into
# the kernel's VMEM-resident layout (reshaped conv taps, padded/merged FC heads).
# ----------------------------------------------------------------------------
def init_params(key):
    params = {}
    keys = jax.random.split(key, 32)
    ki = 0

    def nrm(shape, scale):
        nonlocal ki
        k = keys[ki]
        ki += 1
        return scale * jax.random.normal(k, shape, dtype=jnp.float32)

    for i, (K, Cin, Cout, _, _) in enumerate(CONV_CFG):
        params[f"conv{i + 1}_w"] = nrm((K * Cin, Cout), 0.05)   # tap-major im2col layout
        params[f"conv{i + 1}_b"] = nrm((Cout,), 0.01)
    params["dense_w"] = nrm((64, 109), 0.05)
    params["dense_b"] = nrm((109,), 0.01)
    for name, n_out in HEADS:
        params[f"{name}_w1"] = nrm((109, HEAD_HIDDEN), 0.05)
        params[f"{name}_b1"] = nrm((HEAD_HIDDEN,), 0.01)
        params[f"{name}_w2"] = nrm((HEAD_HIDDEN, n_out), 0.05)
        params[f"{name}_b2"] = nrm((n_out,), 0.01)
    return params


def pack_params(p):
    f32 = jnp.float32
    packed = []
    # conv1: (64, 16) tap-major -> (8 shifts, 8 folded-stride taps, 16 out-channels)
    packed += [p["conv1_w"].reshape(K1 // STRIDE1, STRIDE1, CONV_CFG[0][2]).astype(f32),
               p["conv1_b"].reshape(1, -1).astype(f32)]
    # conv2..6: (3*Cin, Cout) tap-major -> (3, Cin, Cout)
    for i, (K, Cin, Cout, _, _) in enumerate(CONV_CFG[1:], start=2):
        packed += [p[f"conv{i}_w"].reshape(K, Cin, Cout).astype(f32),
                   p[f"conv{i}_b"].reshape(1, Cout).astype(f32)]
    # dense: 64 -> 109, padded to 128 output lanes
    wd = jnp.zeros((64, DENSE_PAD), f32).at[:, :109].set(p["dense_w"])
    bd = jnp.zeros((1, DENSE_PAD), f32).at[:, :109].set(p["dense_b"])
    packed += [wd, bd]
    # merged head layer 1: (128 padded-in, 3*128)
    wh1 = jnp.zeros((DENSE_PAD, 3 * HEAD_HIDDEN), f32)
    bh1 = jnp.zeros((1, 3 * HEAD_HIDDEN), f32)
    for hi, (name, _) in enumerate(HEADS):
        wh1 = wh1.at[:109, hi * HEAD_HIDDEN:(hi + 1) * HEAD_HIDDEN].set(p[f"{name}_w1"])
        bh1 = bh1.at[:, hi * HEAD_HIDDEN:(hi + 1) * HEAD_HIDDEN].set(p[f"{name}_b1"])
    # merged head layer 2: block-diagonal (3*128, 17) padded to 128 output lanes
    wh2 = jnp.zeros((3 * HEAD_HIDDEN, N_OUT_PAD), f32)
    bh2 = jnp.zeros((1, N_OUT_PAD), f32)
    col = 0
    for hi, (name, n_out) in enumerate(HEADS):
        wh2 = wh2.at[hi * HEAD_HIDDEN:(hi + 1) * HEAD_HIDDEN, col:col + n_out].set(p[f"{name}_w2"])
        bh2 = bh2.at[:, col:col + n_out].set(p[f"{name}_b2"])
        col += n_out
    packed += [wh1, bh1, wh2, bh2]
    return tuple(packed)


# ----------------------------------------------------------------------------
# Forward pass wrapper: one pallas_call for the whole network
# ----------------------------------------------------------------------------
def wdcnnp_forward(x_ncl, packed):
    """x_ncl: (B, 1, L) like the PyTorch module.  Returns (size, type, load) logits."""
    B, cin, L = x_ncl.shape
    assert cin == 1
    lp = L + 2 * PAD1
    assert lp % STRIDE1 == 0
    rows = lp // STRIDE1
    # Fold conv1's stride 8 into a (rows, 8) view of the padded signal (cheap XLA pad+reshape).
    x_r = jnp.pad(x_ncl[:, 0, :].astype(jnp.float32),
                  ((0, 0), (PAD1, PAD1))).reshape(B, rows, STRIDE1)

    def _const_spec(arr):
        zeros = (0,) * arr.ndim
        return pl.BlockSpec(arr.shape, lambda b, z=zeros: z)   # whole array, VMEM-resident

    out = pl.pallas_call(
        _wdcnnp_kernel,
        out_shape=jax.ShapeDtypeStruct((B, 1, N_OUT_PAD), jnp.float32),
        grid=(B,),
        in_specs=[pl.BlockSpec((1, rows, STRIDE1), lambda b: (b, 0, 0))]
                 + [_const_spec(w) for w in packed],
        out_specs=pl.BlockSpec((1, 1, N_OUT_PAD), lambda b: (b, 0, 0)),
        compiler_params=pltpu.CompilerParams(dimension_semantics=("parallel",)),
    )(x_r, *packed)

    out = out.reshape(B, N_OUT_PAD)
    return out[:, :10], out[:, 10:14], out[:, 14:17]


# ----------------------------------------------------------------------------
if __name__ == "__main__":
    # L=512 is the smallest length that survives the 6 conv+pool stages
    # (65 -> 32 -> 16 -> 8 -> 4 -> 2 -> 1).
    key = jax.random.PRNGKey(0)
    x = jax.random.normal(key, (2, 1, 512), dtype=jnp.float32)   # NCL, like PyTorch Conv1d input
    packed = pack_params(init_params(jax.random.PRNGKey(42)))

    fwd = jax.jit(wdcnnp_forward)
    x1, x2, x3 = jax.block_until_ready(fwd(x, packed))

    assert x1.shape == (2, 10)
    assert x2.shape == (2, 4)
    assert x3.shape == (2, 3)
    print("KERNEL_OK")
</pallas_src>

<mosaic_0001>
module attributes {stable_mosaic.version = 11 : i64} {
  func.func @_wdcnnp_kernel(%arg0: i32, %arg1: memref<1x72x8xf32, #tpu.memory_space<vmem>>, %arg2: memref<8x8x16xf32, #tpu.memory_space<vmem>>, %arg3: memref<1x16xf32, #tpu.memory_space<vmem>>, %arg4: memref<3x16x32xf32, #tpu.memory_space<vmem>>, %arg5: memref<1x32xf32, #tpu.memory_space<vmem>>, %arg6: memref<3x32x64xf32, #tpu.memory_space<vmem>>, %arg7: memref<1x64xf32, #tpu.memory_space<vmem>>, %arg8: memref<3x64x64xf32, #tpu.memory_space<vmem>>, %arg9: memref<1x64xf32, #tpu.memory_space<vmem>>, %arg10: memref<3x64x64xf32, #tpu.memory_space<vmem>>, %arg11: memref<1x64xf32, #tpu.memory_space<vmem>>, %arg12: memref<3x64x64xf32, #tpu.memory_space<vmem>>, %arg13: memref<1x64xf32, #tpu.memory_space<vmem>>, %arg14: memref<64x128xf32, #tpu.memory_space<vmem>>, %arg15: memref<1x128xf32, #tpu.memory_space<vmem>>, %arg16: memref<128x384xf32, #tpu.memory_space<vmem>>, %arg17: memref<1x384xf32, #tpu.memory_space<vmem>>, %arg18: memref<384x128xf32, #tpu.memory_space<vmem>>, %arg19: memref<1x128xf32, #tpu.memory_space<vmem>>, %arg20: memref<1x1x128xf32, #tpu.memory_space<vmem>>) attributes {dimension_semantics = [#tpu.dimension_semantics<parallel>], iteration_bounds = array<i64: 2>, scalar_prefetch = 0 : i64, scratch_operands = 0 : i64, tpu.core_type = #tpu.core_type<tc>, window_params = [{transform_indices = @transform_0, window_bounds = array<i64: 1, 72, 8>}, {pipeline_mode = #tpu.pipeline_mode<synchronous>, transform_indices = @transform_1, window_bounds = array<i64: 8, 8, 16>}, {pipeline_mode = #tpu.pipeline_mode<synchronous>, transform_indices = @transform_2, window_bounds = array<i64: 1, 16>}, {pipeline_mode = #tpu.pipeline_mode<synchronous>, transform_indices = @transform_3, window_bounds = array<i64: 3, 16, 32>}, {pipeline_mode = #tpu.pipeline_mode<synchronous>, transform_indices = @transform_4, window_bounds = array<i64: 1, 32>}, {pipeline_mode = #tpu.pipeline_mode<synchronous>, transform_indices = @transform_5, window_bounds = array<i64: 3, 32, 64>}, {pipeline_mode = #tpu.pipeline_mode<synchronous>, transform_indices = @transform_6, window_bounds = array<i64: 1, 64>}, {pipeline_mode = #tpu.pipeline_mode<synchronous>, transform_indices = @transform_7, window_bounds = array<i64: 3, 64, 64>}, {pipeline_mode = #tpu.pipeline_mode<synchronous>, transform_indices = @transform_8, window_bounds = array<i64: 1, 64>}, {pipeline_mode = #tpu.pipeline_mode<synchronous>, transform_indices = @transform_9, window_bounds = array<i64: 3, 64, 64>}, {pipeline_mode = #tpu.pipeline_mode<synchronous>, transform_indices = @transform_10, window_bounds = array<i64: 1, 64>}, {pipeline_mode = #tpu.pipeline_mode<synchronous>, transform_indices = @transform_11, window_bounds = array<i64: 3, 64, 64>}, {pipeline_mode = #tpu.pipeline_mode<synchronous>, transform_indices = @transform_12, window_bounds = array<i64: 1, 64>}, {pipeline_mode = #tpu.pipeline_mode<synchronous>, transform_indices = @transform_13, window_bounds = array<i64: 64, 128>}, {pipeline_mode = #tpu.pipeline_mode<synchronous>, transform_indices = @transform_14, window_bounds = array<i64: 1, 128>}, {pipeline_mode = #tpu.pipeline_mode<synchronous>, transform_indices = @transform_15, window_bounds = array<i64: 128, 384>}, {pipeline_mode = #tpu.pipeline_mode<synchronous>, transform_indices = @transform_16, window_bounds = array<i64: 1, 384>}, {pipeline_mode = #tpu.pipeline_mode<synchronous>, transform_indices = @transform_17, window_bounds = array<i64: 384, 128>}, {pipeline_mode = #tpu.pipeline_mode<synchronous>, transform_indices = @transform_18, window_bounds = array<i64: 1, 128>}, {transform_indices = @transform_19, window_bounds = array<i64: 1, 1, 128>}]} {
    %c0 = arith.constant 0 : index
    %c0_0 = arith.constant 0 : index
    %c0_1 = arith.constant 0 : index
    %0 = vector.load %arg1[%c0, %c0_0, %c0_1] : memref<1x72x8xf32, #tpu.memory_space<vmem>>, vector<1x72x8xf32>
    %1 = vector.shape_cast %0 : vector<1x72x8xf32> to vector<72x8xf32>
    %cst = arith.constant 0.000000e+00 : f32
    %2 = vector.broadcast %cst : f32 to vector<65x16xf32>
    %3 = tpu.iota {dimensions = array<i32: 0>} : vector<65x72xi32>
    %4 = tpu.iota {dimensions = array<i32: 1>} : vector<65x72xi32>
    %c1_i32 = arith.constant 1 : i32
    %5 = vector.broadcast %c1_i32 : i32 to vector<65x72xi32>
    %6 = arith.muli %5, %3 : vector<65x72xi32>
    %c0_i32 = arith.constant 0 : i32
    %7 = vector.broadcast %c0_i32 : i32 to vector<65x72xi32>
    %8 = arith.addi %6, %7 : vector<65x72xi32>
    %9 = arith.cmpi eq, %4, %8 : vector<65x72xi32>
    %10 = arith.extui %9 : vector<65x72xi1> to vector<65x72xi32>
    %11 = arith.sitofp %10 : vector<65x72xi32> to vector<65x72xf32>
    %cst_2 = arith.constant dense<0.000000e+00> : vector<65x8xf32>
    %12 = tpu.matmul %11, %1, %cst_2 {dimension_numbers = #tpu.dot_dimension_numbers<[1], [0], [0], [1], [0, 0, 1, 1], [], []>} : vector<65x72xf32>, vector<72x8xf32>, vector<65x8xf32> -> vector<65x8xf32>
    %c0_3 = arith.constant 0 : index
    %c0_4 = arith.constant 0 : index
    %c0_5 = arith.constant 0 : index
    %13 = vector.load %arg2[%c0_3, %c0_4, %c0_5] : memref<8x8x16xf32, #tpu.memory_space<vmem>>, vector<1x8x16xf32>
    %14 = vector.shape_cast %13 : vector<1x8x16xf32> to vector<8x16xf32>
    %cst_6 = arith.constant dense<0.000000e+00> : vector<65x16xf32>
    %15 = tpu.matmul %12, %14, %cst_6 {dimension_numbers = #tpu.dot_dimension_numbers<[1], [0], [0], [1], [0, 0, 1, 1], [], []>} : vector<65x8xf32>, vector<8x16xf32>, vector<65x16xf32> -> vector<65x16xf32>
    %16 = arith.addf %2, %15 : vector<65x16xf32>
    %17 = tpu.iota {dimensions = array<i32: 0>} : vector<65x72xi32>
    %18 = tpu.iota {dimensions = array<i32: 1>} : vector<65x72xi32>
    %c1_i32_7 = arith.constant 1 : i32
    %19 = vector.broadcast %c1_i32_7 : i32 to vector<65x72xi32>
    %20 = arith.muli %19, %17 : vector<65x72xi32>
    %c1_i32_8 = arith.constant 1 : i32
    %21 = vector.broadcast %c1_i32_8 : i32 to vector<65x72xi32>
    %22 = arith.addi %20, %21 : vector<65x72xi32>
    %23 = arith.cmpi eq, %18, %22 : vector<65x72xi32>
    %24 = arith.extui %23 : vector<65x72xi1> to vector<65x72xi32>
    %25 = arith.sitofp %24 : vector<65x72xi32> to vector<65x72xf32>
    %cst_9 = arith.constant dense<0.000000e+00> : vector<65x8xf32>
    %26 = tpu.matmul %25, %1, %cst_9 {dimension_numbers = #tpu.dot_dimension_numbers<[1], [0], [0], [1], [0, 0, 1, 1], [], []>} : vector<65x72xf32>, vector<72x8xf32>, vector<65x8xf32> -> vector<65x8xf32>
    %c1 = arith.constant 1 : index
    %c0_10 = arith.constant 0 : index
    %c0_11 = arith.constant 0 : index
    %27 = vector.load %arg2[%c1, %c0_10, %c0_11] : memref<8x8x16xf32, #tpu.memory_space<vmem>>, vector<1x8x16xf32>
    %28 = vector.shape_cast %27 : vector<1x8x16xf32> to vector<8x16xf32>
    %cst_12 = arith.constant dense<0.000000e+00> : vector<65x16xf32>
    %29 = tpu.matmul %26, %28, %cst_12 {dimension_numbers = #tpu.dot_dimension_numbers<[1], [0], [0], [1], [0, 0, 1, 1], [], []>} : vector<65x8xf32>, vector<8x16xf32>, vector<65x16xf32> -> vector<65x16xf32>
    %30 = arith.addf %16, %29 : vector<65x16xf32>
    %31 = tpu.iota {dimensions = array<i32: 0>} : vector<65x72xi32>
    %32 = tpu.iota {dimensions = array<i32: 1>} : vector<65x72xi32>
    %c1_i32_13 = arith.constant 1 : i32
    %33 = vector.broadcast %c1_i32_13 : i32 to vector<65x72xi32>
    %34 = arith.muli %33, %31 : vector<65x72xi32>
    %c2_i32 = arith.constant 2 : i32
    %35 = vector.broadcast %c2_i32 : i32 to vector<65x72xi32>
    %36 = arith.addi %34, %35 : vector<65x72xi32>
    %37 = arith.cmpi eq, %32, %36 : vector<65x72xi32>
    %38 = arith.extui %37 : vector<65x72xi1> to vector<65x72xi32>
    %39 = arith.sitofp %38 : vector<65x72xi32> to vector<65x72xf32>
    %cst_14 = arith.constant dense<0.000000e+00> : vector<65x8xf32>
    %40 = tpu.matmul %39, %1, %cst_14 {dimension_numbers = #tpu.dot_dimension_numbers<[1], [0], [0], [1], [0, 0, 1, 1], [], []>} : vector<65x72xf32>, vector<72x8xf32>, vector<65x8xf32> -> vector<65x8xf32>
    %c2 = arith.constant 2 : index
    %c0_15 = arith.constant 0 : index
    %c0_16 = arith.constant 0 : index
    %41 = vector.load %arg2[%c2, %c0_15, %c0_16] : memref<8x8x16xf32, #tpu.memory_space<vmem>>, vector<1x8x16xf32>
    %42 = vector.shape_cast %41 : vector<1x8x16xf32> to vector<8x16xf32>
    %cst_17 = arith.constant dense<0.000000e+00> : vector<65x16xf32>
    %43 = tpu.matmul %40, %42, %cst_17 {dimension_numbers = #tpu.dot_dimension_numbers<[1], [0], [0], [1], [0, 0, 1, 1], [], []>} : vector<65x8xf32>, vector<8x16xf32>, vector<65x16xf32> -> vector<65x16xf32>
    %44 = arith.addf %30, %43 : vector<65x16xf32>
    %45 = tpu.iota {dimensions = array<i32: 0>} : vector<65x72xi32>
    %46 = tpu.iota {dimensions = array<i32: 1>} : vector<65x72xi32>
    %c1_i32_18 = arith.constant 1 : i32
    %47 = vector.broadcast %c1_i32_18 : i32 to vector<65x72xi32>
    %48 = arith.muli %47, %45 : vector<65x72xi32>
    %c3_i32 = arith.constant 3 : i32
    %49 = vector.broadcast %c3_i32 : i32 to vector<65x72xi32>
    %50 = arith.addi %48, %49 : vector<65x72xi32>
    %51 = arith.cmpi eq, %46, %50 : vector<65x72xi32>
    %52 = arith.extui %51 : vector<65x72xi1> to vector<65x72xi32>
    %53 = arith.sitofp %52 : vector<65x72xi32> to vector<65x72xf32>
    %cst_19 = arith.constant dense<0.000000e+00> : vector<65x8xf32>
    %54 = tpu.matmul %53, %1, %cst_19 {dimension_numbers = #tpu.dot_dimension_numbers<[1], [0], [0], [1], [0, 0, 1, 1], [], []>} : vector<65x72xf32>, vector<72x8xf32>, vector<65x8xf32> -> vector<65x8xf32>
    %c3 = arith.constant 3 : index
    %c0_20 = arith.constant 0 : index
    %c0_21 = arith.constant 0 : index
    %55 = vector.load %arg2[%c3, %c0_20, %c0_21] : memref<8x8x16xf32, #tpu.memory_space<vmem>>, vector<1x8x16xf32>
    %56 = vector.shape_cast %55 : vector<1x8x16xf32> to vector<8x16xf32>
    %cst_22 = arith.constant dense<0.000000e+00> : vector<65x16xf32>
    %57 = tpu.matmul %54, %56, %cst_22 {dimension_numbers = #tpu.dot_dimension_numbers<[1], [0], [0], [1], [0, 0, 1, 1], [], []>} : vector<65x8xf32>, vector<8x16xf32>, vector<65x16xf32> -> vector<65x16xf32>
    %58 = arith.addf %44, %57 : vector<65x16xf32>
    %59 = tpu.iota {dimensions = array<i32: 0>} : vector<65x72xi32>
    %60 = tpu.iota {dimensions = array<i32: 1>} : vector<65x72xi32>
    %c1_i32_23 = arith.constant 1 : i32
    %61 = vector.broadcast %c1_i32_23 : i32 to vector<65x72xi32>
    %62 = arith.muli %61, %59 : vector<65x72xi32>
    %c4_i32 = arith.constant 4 : i32
    %63 = vector.broadcast %c4_i32 : i32 to vector<65x72xi32>
    %64 = arith.addi %62, %63 : vector<65x72xi32>
    %65 = arith.cmpi eq, %60, %64 : vector<65x72xi32>
    %66 = arith.extui %65 : vector<65x72xi1> to vector<65x72xi32>
    %67 = arith.sitofp %66 : vector<65x72xi32> to vector<65x72xf32>
    %cst_24 = arith.constant dense<0.000000e+00> : vector<65x8xf32>
    %68 = tpu.matmul %67, %1, %cst_24 {dimension_numbers = #tpu.dot_dimension_numbers<[1], [0], [0], [1], [0, 0, 1, 1], [], []>} : vector<65x72xf32>, vector<72x8xf32>, vector<65x8xf32> -> vector<65x8xf32>
    %c4 = arith.constant 4 : index
    %c0_25 = arith.constant 0 : index
    %c0_26 = arith.constant 0 : index
    %69 = vector.load %arg2[%c4, %c0_25, %c0_26] : memref<8x8x16xf32, #tpu.memory_space<vmem>>, vector<1x8x16xf32>
    %70 = vector.shape_cast %69 : vector<1x8x16xf32> to vector<8x16xf32>
    %cst_27 = arith.constant dense<0.000000e+00> : vector<65x16xf32>
    %71 = tpu.matmul %68, %70, %cst_27 {dimension_numbers = #tpu.dot_dimension_numbers<[1], [0], [0], [1], [0, 0, 1, 1], [], []>} : vector<65x8xf32>, vector<8x16xf32>, vector<65x16xf32> -> vector<65x16xf32>
    %72 = arith.addf %58, %71 : vector<65x16xf32>
    %73 = tpu.iota {dimensions = array<i32: 0>} : vector<65x72xi32>
    %74 = tpu.iota {dimensions = array<i32: 1>} : vector<65x72xi32>
    %c1_i32_28 = arith.constant 1 : i32
    %75 = vector.broadcast %c1_i32_28 : i32 to vector<65x72xi32>
    %76 = arith.muli %75, %73 : vector<65x72xi32>
    %c5_i32 = arith.constant 5 : i32
    %77 = vector.broadcast %c5_i32 : i32 to vector<65x72xi32>
    %78 = arith.addi %76, %77 : vector<65x72xi32>
    %79 = arith.cmpi eq, %74, %78 : vector<65x72xi32>
    %80 = arith.extui %79 : vector<65x72xi1> to vector<65x72xi32>
    %81 = arith.sitofp %80 : vector<65x72xi32> to vector<65x72xf32>
    %cst_29 = arith.constant dense<0.000000e+00> : vector<65x8xf32>
    %82 = tpu.matmul %81, %1, %cst_29 {dimension_numbers = #tpu.dot_dimension_numbers<[1], [0], [0], [1], [0, 0, 1, 1], [], []>} : vector<65x72xf32>, vector<72x8xf32>, vector<65x8xf32> -> vector<65x8xf32>
    %c5 = arith.constant 5 : index
    %c0_30 = arith.constant 0 : index
    %c0_31 = arith.constant 0 : index
    %83 = vector.load %arg2[%c5, %c0_30, %c0_31] : memref<8x8x16xf32, #tpu.memory_space<vmem>>, vector<1x8x16xf32>
    %84 = vector.shape_cast %83 : vector<1x8x16xf32> to vector<8x16xf32>
    %cst_32 = arith.constant dense<0.000000e+00> : vector<65x16xf32>
    %85 = tpu.matmul %82, %84, %cst_32 {dimension_numbers = #tpu.dot_dimension_numbers<[1], [0], [0], [1], [0, 0, 1, 1], [], []>} : vector<65x8xf32>, vector<8x16xf32>, vector<65x16xf32> -> vector<65x16xf32>
    %86 = arith.addf %72, %85 : vector<65x16xf32>
    %87 = tpu.iota {dimensions = array<i32: 0>} : vector<65x72xi32>
    %88 = tpu.iota {dimensions = array<i32: 1>} : vector<65x72xi32>
    %c1_i32_33 = arith.constant 1 : i32
    %89 = vector.broadcast %c1_i32_33 : i32 to vector<65x72xi32>
    %90 = arith.muli %89, %87 : vector<65x72xi32>
    %c6_i32 = arith.constant 6 : i32
    %91 = vector.broadcast %c6_i32 : i32 to vector<65x72xi32>
    %92 = arith.addi %90, %91 : vector<65x72xi32>
    %93 = arith.cmpi eq, %88, %92 : vector<65x72xi32>
    %94 = arith.extui %93 : vector<65x72xi1> to vector<65x72xi32>
    %95 = arith.sitofp %94 : vector<65x72xi32> to vector<65x72xf32>
    %cst_34 = arith.constant dense<0.000000e+00> : vector<65x8xf32>
    %96 = tpu.matmul %95, %1, %cst_34 {dimension_numbers = #tpu.dot_dimension_numbers<[1], [0], [0], [1], [0, 0, 1, 1], [], []>} : vector<65x72xf32>, vector<72x8xf32>, vector<65x8xf32> -> vector<65x8xf32>
    %c6 = arith.constant 6 : index
    %c0_35 = arith.constant 0 : index
    %c0_36 = arith.constant 0 : index
    %97 = vector.load %arg2[%c6, %c0_35, %c0_36] : memref<8x8x16xf32, #tpu.memory_space<vmem>>, vector<1x8x16xf32>
    %98 = vector.shape_cast %97 : vector<1x8x16xf32> to vector<8x16xf32>
    %cst_37 = arith.constant dense<0.000000e+00> : vector<65x16xf32>
    %99 = tpu.matmul %96, %98, %cst_37 {dimension_numbers = #tpu.dot_dimension_numbers<[1], [0], [0], [1], [0, 0, 1, 1], [], []>} : vector<65x8xf32>, vector<8x16xf32>, vector<65x16xf32> -> vector<65x16xf32>
    %100 = arith.addf %86, %99 : vector<65x16xf32>
    %101 = tpu.iota {dimensions = array<i32: 0>} : vector<65x72xi32>
    %102 = tpu.iota {dimensions = array<i32: 1>} : vector<65x72xi32>
    %c1_i32_38 = arith.constant 1 : i32
    %103 = vector.broadcast %c1_i32_38 : i32 to vector<65x72xi32>
    %104 = arith.muli %103, %101 : vector<65x72xi32>
    %c7_i32 = arith.constant 7 : i32
    %105 = vector.broadcast %c7_i32 : i32 to vector<65x72xi32>
    %106 = arith.addi %104, %105 : vector<65x72xi32>
    %107 = arith.cmpi eq, %102, %106 : vector<65x72xi32>
    %108 = arith.extui %107 : vector<65x72xi1> to vector<65x72xi32>
    %109 = arith.sitofp %108 : vector<65x72xi32> to vector<65x72xf32>
    %cst_39 = arith.constant dense<0.000000e+00> : vector<65x8xf32>
    %110 = tpu.matmul %109, %1, %cst_39 {dimension_numbers = #tpu.dot_dimension_numbers<[1], [0], [0], [1], [0, 0, 1, 1], [], []>} : vector<65x72xf32>, vector<72x8xf32>, vector<65x8xf32> -> vector<65x8xf32>
    %c7 = arith.constant 7 : index
    %c0_40 = arith.constant 0 : index
    %c0_41 = arith.constant 0 : index
    %111 = vector.load %arg2[%c7, %c0_40, %c0_41] : memref<8x8x16xf32, #tpu.memory_space<vmem>>, vector<1x8x16xf32>
    %112 = vector.shape_cast %111 : vector<1x8x16xf32> to vector<8x16xf32>
    %cst_42 = arith.constant dense<0.000000e+00> : vector<65x16xf32>
    %113 = tpu.matmul %110, %112, %cst_42 {dimension_numbers = #tpu.dot_dimension_numbers<[1], [0], [0], [1], [0, 0, 1, 1], [], []>} : vector<65x8xf32>, vector<8x16xf32>, vector<65x16xf32> -> vector<65x16xf32>
    %114 = arith.addf %100, %113 : vector<65x16xf32>
    %c0_43 = arith.constant 0 : index
    %c0_44 = arith.constant 0 : index
    %115 = vector.load %arg3[%c0_43, %c0_44] : memref<1x16xf32, #tpu.memory_space<vmem>>, vector<1x16xf32>
    %116 = vector.broadcast %115 : vector<1x16xf32> to vector<65x16xf32>
    %117 = arith.addf %114, %116 : vector<65x16xf32>
    %118 = tpu.iota {dimensions = array<i32: 0>} : vector<32x65xi32>
    %119 = tpu.iota {dimensions = array<i32: 1>} : vector<32x65xi32>
    %c2_i32_45 = arith.constant 2 : i32
    %120 = vector.broadcast %c2_i32_45 : i32 to vector<32x65xi32>
    %121 = arith.muli %120, %118 : vector<32x65xi32>
    %c0_i32_46 = arith.constant 0 : i32
    %122 = vector.broadcast %c0_i32_46 : i32 to vector<32x65xi32>
    %123 = arith.addi %121, %122 : vector<32x65xi32>
    %124 = arith.cmpi eq, %119, %123 : vector<32x65xi32>
    %125 = arith.extui %124 : vector<32x65xi1> to vector<32x65xi32>
    %126 = arith.sitofp %125 : vector<32x65xi32> to vector<32x65xf32>
    %cst_47 = arith.constant dense<0.000000e+00> : vector<32x16xf32>
    %127 = tpu.matmul %126, %117, %cst_47 {dimension_numbers = #tpu.dot_dimension_numbers<[1], [0], [0], [1], [0, 0, 1, 1], [], []>} : vector<32x65xf32>, vector<65x16xf32>, vector<32x16xf32> -> vector<32x16xf32>
    %128 = tpu.iota {dimensions = array<i32: 0>} : vector<32x65xi32>
    %129 = tpu.iota {dimensions = array<i32: 1>} : vector<32x65xi32>
    %c2_i32_48 = arith.constant 2 : i32
    %130 = vector.broadcast %c2_i32_48 : i32 to vector<32x65xi32>
    %131 = arith.muli %130, %128 : vector<32x65xi32>
    %c1_i32_49 = arith.constant 1 : i32
    %132 = vector.broadcast %c1_i32_49 : i32 to vector<32x65xi32>
    %133 = arith.addi %131, %132 : vector<32x65xi32>
    %134 = arith.cmpi eq, %129, %133 : vector<32x65xi32>
    %135 = arith.extui %134 : vector<32x65xi1> to vector<32x65xi32>
    %136 = arith.sitofp %135 : vector<32x65xi32> to vector<32x65xf32>
    %cst_50 = arith.constant dense<0.000000e+00> : vector<32x16xf32>
    %137 = tpu.matmul %136, %117, %cst_50 {dimension_numbers = #tpu.dot_dimension_numbers<[1], [0], [0], [1], [0, 0, 1, 1], [], []>} : vector<32x65xf32>, vector<65x16xf32>, vector<32x16xf32> -> vector<32x16xf32>
    %138 = arith.maximumf %127, %137 : vector<32x16xf32>
    %cst_51 = arith.constant 0.000000e+00 : f32
    %139 = vector.broadcast %cst_51 : f32 to vector<32x16xf32>
    %140 = arith.maximumf %138, %139 : vector<32x16xf32>
    %141 = tpu.iota {dimensions = array<i32: 0>} : vector<32x32xi32>
    %142 = tpu.iota {dimensions = array<i32: 1>} : vector<32x32xi32>
    %c1_i32_52 = arith.constant 1 : i32
    %143 = vector.broadcast %c1_i32_52 : i32 to vector<32x32xi32>
    %144 = arith.muli %143, %141 : vector<32x32xi32>
    %c-1_i32 = arith.constant -1 : i32
    %145 = vector.broadcast %c-1_i32 : i32 to vector<32x32xi32>
    %146 = arith.addi %144, %145 : vector<32x32xi32>
    %147 = arith.cmpi eq, %142, %146 : vector<32x32xi32>
    %148 = arith.extui %147 : vector<32x32xi1> to vector<32x32xi32>
    %149 = arith.sitofp %148 : vector<32x32xi32> to vector<32x32xf32>
    %cst_53 = arith.constant dense<0.000000e+00> : vector<32x16xf32>
    %150 = tpu.matmul %149, %140, %cst_53 {dimension_numbers = #tpu.dot_dimension_numbers<[1], [0], [0], [1], [0, 0, 1, 1], [], []>} : vector<32x32xf32>, vector<32x16xf32>, vector<32x16xf32> -> vector<32x16xf32>
    %151 = tpu.iota {dimensions = array<i32: 0>} : vector<32x32xi32>
    %152 = tpu.iota {dimensions = array<i32: 1>} : vector<32x32xi32>
    %c1_i32_54 = arith.constant 1 : i32
    %153 = vector.broadcast %c1_i32_54 : i32 to vector<32x32xi32>
    %154 = arith.muli %153, %151 : vector<32x32xi32>
    %c1_i32_55 = arith.constant 1 : i32
    %155 = vector.broadcast %c1_i32_55 : i32 to vector<32x32xi32>
    %156 = arith.addi %154, %155 : vector<32x32xi32>
    %157 = arith.cmpi eq, %152, %156 : vector<32x32xi32>
    %158 = arith.extui %157 : vector<32x32xi1> to vector<32x32xi32>
    %159 = arith.sitofp %158 : vector<32x32xi32> to vector<32x32xf32>
    %cst_56 = arith.constant dense<0.000000e+00> : vector<32x16xf32>
    %160 = tpu.matmul %159, %140, %cst_56 {dimension_numbers = #tpu.dot_dimension_numbers<[1], [0], [0], [1], [0, 0, 1, 1], [], []>} : vector<32x32xf32>, vector<32x16xf32>, vector<32x16xf32> -> vector<32x16xf32>
    %c0_57 = arith.constant 0 : index
    %c0_58 = arith.constant 0 : index
    %c0_59 = arith.constant 0 : index
    %161 = vector.load %arg4[%c0_57, %c0_58, %c0_59] : memref<3x16x32xf32, #tpu.memory_space<vmem>>, vector<1x16x32xf32>
    %162 = vector.shape_cast %161 : vector<1x16x32xf32> to vector<16x32xf32>
    %cst_60 = arith.constant dense<0.000000e+00> : vector<32x32xf32>
    %163 = tpu.matmul %150, %162, %cst_60 {dimension_numbers = #tpu.dot_dimension_numbers<[1], [0], [0], [1], [0, 0, 1, 1], [], []>} : vector<32x16xf32>, vector<16x32xf32>, vector<32x32xf32> -> vector<32x32xf32>
    %c1_61 = arith.constant 1 : index
    %c0_62 = arith.constant 0 : index
    %c0_63 = arith.constant 0 : index
    %164 = vector.load %arg4[%c1_61, %c0_62, %c0_63] : memref<3x16x32xf32, #tpu.memory_space<vmem>>, vector<1x16x32xf32>
    %165 = vector.shape_cast %164 : vector<1x16x32xf32> to vector<16x32xf32>
    %cst_64 = arith.constant dense<0.000000e+00> : vector<32x32xf32>
    %166 = tpu.matmul %140, %165, %cst_64 {dimension_numbers = #tpu.dot_dimension_numbers<[1], [0], [0], [1], [0, 0, 1, 1], [], []>} : vector<32x16xf32>, vector<16x32xf32>, vector<32x32xf32> -> vector<32x32xf32>
    %167 = arith.addf %163, %166 : vector<32x32xf32>
    %c2_65 = arith.constant 2 : index
    %c0_66 = arith.constant 0 : index
    %c0_67 = arith.constant 0 : index
    %168 = vector.load %arg4[%c2_65, %c0_66, %c0_67] : memref<3x16x32xf32, #tpu.memory_space<vmem>>, vector<1x16x32xf32>
    %169 = vector.shape_cast %168 : vector<1x16x32xf32> to vector<16x32xf32>
    %cst_68 = arith.constant dense<0.000000e+00> : vector<32x32xf32>
    %170 = tpu.matmul %160, %169, %cst_68 {dimension_numbers = #tpu.dot_dimension_numbers<[1], [0], [0], [1], [0, 0, 1, 1], [], []>} : vector<32x16xf32>, vector<16x32xf32>, vector<32x32xf32> -> vector<32x32xf32>
    %171 = arith.addf %167, %170 : vector<32x32xf32>
    %c0_69 = arith.constant 0 : index
    %c0_70 = arith.constant 0 : index
    %172 = vector.load %arg5[%c0_69, %c0_70] : memref<1x32xf32, #tpu.memory_space<vmem>>, vector<1x32xf32>
    %173 = vector.broadcast %172 : vector<1x32xf32> to vector<32x32xf32>
    %174 = arith.addf %171, %173 : vector<32x32xf32>
    %175 = tpu.iota {dimensions = array<i32: 0>} : vector<16x32xi32>
    %176 = tpu.iota {dimensions = array<i32: 1>} : vector<16x32xi32>
    %c2_i32_71 = arith.constant 2 : i32
    %177 = vector.broadcast %c2_i32_71 : i32 to vector<16x32xi32>
    %178 = arith.muli %177, %175 : vector<16x32xi32>
    %c0_i32_72 = arith.constant 0 : i32
    %179 = vector.broadcast %c0_i32_72 : i32 to vector<16x32xi32>
    %180 = arith.addi %178, %179 : vector<16x32xi32>
    %181 = arith.cmpi eq, %176, %180 : vector<16x32xi32>
    %182 = arith.extui %181 : vector<16x32xi1> to vector<16x32xi32>
    %183 = arith.sitofp %182 : vector<16x32xi32> to vector<16x32xf32>
    %cst_73 = arith.constant dense<0.000000e+00> : vector<16x32xf32>
    %184 = tpu.matmul %183, %174, %cst_73 {dimension_numbers = #tpu.dot_dimension_numbers<[1], [0], [0], [1], [0, 0, 1, 1], [], []>} : vector<16x32xf32>, vector<32x32xf32>, vector<16x32xf32> -> vector<16x32xf32>
    %185 = tpu.iota {dimensions = array<i32: 0>} : vector<16x32xi32>
    %186 = tpu.iota {dimensions = array<i32: 1>} : vector<16x32xi32>
    %c2_i32_74 = arith.constant 2 : i32
    %187 = vector.broadcast %c2_i32_74 : i32 to vector<16x32xi32>
    %188 = arith.muli %187, %185 : vector<16x32xi32>
    %c1_i32_75 = arith.constant 1 : i32
    %189 = vector.broadcast %c1_i32_75 : i32 to vector<16x32xi32>
    %190 = arith.addi %188, %189 : vector<16x32xi32>
    %191 = arith.cmpi eq, %186, %190 : vector<16x32xi32>
    %192 = arith.extui %191 : vector<16x32xi1> to vector<16x32xi32>
    %193 = arith.sitofp %192 : vector<16x32xi32> to vector<16x32xf32>
    %cst_76 = arith.constant dense<0.000000e+00> : vector<16x32xf32>
    %194 = tpu.matmul %193, %174, %cst_76 {dimension_numbers = #tpu.dot_dimension_numbers<[1], [0], [0], [1], [0, 0, 1, 1], [], []>} : vector<16x32xf32>, vector<32x32xf32>, vector<16x32xf32> -> vector<16x32xf32>
    %195 = arith.maximumf %184, %194 : vector<16x32xf32>
    %cst_77 = arith.constant 0.000000e+00 : f32
    %196 = vector.broadcast %cst_77 : f32 to vector<16x32xf32>
    %197 = arith.maximumf %195, %196 : vector<16x32xf32>
    %198 = tpu.iota {dimensions = array<i32: 0>} : vector<16x16xi32>
    %199 = tpu.iota {dimensions = array<i32: 1>} : vector<16x16xi32>
    %c1_i32_78 = arith.constant 1 : i32
    %200 = vector.broadcast %c1_i32_78 : i32 to vector<16x16xi32>
    %201 = arith.muli %200, %198 : vector<16x16xi32>
    %c-1_i32_79 = arith.constant -1 : i32
    %202 = vector.broadcast %c-1_i32_79 : i32 to vector<16x16xi32>
    %203 = arith.addi %201, %202 : vector<16x16xi32>
    %204 = arith.cmpi eq, %199, %203 : vector<16x16xi32>
    %205 = arith.extui %204 : vector<16x16xi1> to vector<16x16xi32>
    %206 = arith.sitofp %205 : vector<16x16xi32> to vector<16x16xf32>
    %cst_80 = arith.constant dense<0.000000e+00> : vector<16x32xf32>
    %207 = tpu.matmul %206, %197, %cst_80 {dimension_numbers = #tpu.dot_dimension_numbers<[1], [0], [0], [1], [0, 0, 1, 1], [], []>} : vector<16x16xf32>, vector<16x32xf32>, vector<16x32xf32> -> vector<16x32xf32>
    %208 = tpu.iota {dimensions = array<i32: 0>} : vector<16x16xi32>
    %209 = tpu.iota {dimensions = array<i32: 1>} : vector<16x16xi32>
    %c1_i32_81 = arith.constant 1 : i32
    %210 = vector.broadcast %c1_i32_81 : i32 to vector<16x16xi32>
    %211 = arith.muli %210, %208 : vector<16x16xi32>
    %c1_i32_82 = arith.constant 1 : i32
    %212 = vector.broadcast %c1_i32_82 : i32 to vector<16x16xi32>
    %213 = arith.addi %211, %212 : vector<16x16xi32>
    %214 = arith.cmpi eq, %209, %213 : vector<16x16xi32>
    %215 = arith.extui %214 : vector<16x16xi1> to vector<16x16xi32>
    %216 = arith.sitofp %215 : vector<16x16xi32> to vector<16x16xf32>
    %cst_83 = arith.constant dense<0.000000e+00> : vector<16x32xf32>
    %217 = tpu.matmul %216, %197, %cst_83 {dimension_numbers = #tpu.dot_dimension_numbers<[1], [0], [0], [1], [0, 0, 1, 1], [], []>} : vector<16x16xf32>, vector<16x32xf32>, vector<16x32xf32> -> vector<16x32xf32>
    %c0_84 = arith.constant 0 : index
    %c0_85 = arith.constant 0 : index
    %c0_86 = arith.constant 0 : index
    %218 = vector.load %arg6[%c0_84, %c0_85, %c0_86] : memref<3x32x64xf32, #tpu.memory_space<vmem>>, vector<1x32x64xf32>
    %219 = vector.shape_cast %218 : vector<1x32x64xf32> to vector<32x64xf32>
    %cst_87 = arith.constant dense<0.000000e+00> : vector<16x64xf32>
    %220 = tpu.matmul %207, %219, %cst_87 {dimension_numbers = #tpu.dot_dimension_numbers<[1], [0], [0], [1], [0, 0, 1, 1], [], []>} : vector<16x32xf32>, vector<32x64xf32>, vector<16x64xf32> -> vector<16x64xf32>
    %c1_88 = arith.constant 1 : index
    %c0_89 = arith.constant 0 : index
    %c0_90 = arith.constant 0 : index
    %221 = vector.load %arg6[%c1_88, %c0_89, %c0_90] : memref<3x32x64xf32, #tpu.memory_space<vmem>>, vector<1x32x64xf32>
    %222 = vector.shape_cast %221 : vector<1x32x64xf32> to vector<32x64xf32>
    %cst_91 = arith.constant dense<0.000000e+00> : vector<16x64xf32>
    %223 = tpu.matmul %197, %222, %cst_91 {dimension_numbers = #tpu.dot_dimension_numbers<[1], [0], [0], [1], [0, 0, 1, 1], [], []>} : vector<16x32xf32>, vector<32x64xf32>, vector<16x64xf32> -> vector<16x64xf32>
    %224 = arith.addf %220, %223 : vector<16x64xf32>
    %c2_92 = arith.constant 2 : index
    %c0_93 = arith.constant 0 : index
    %c0_94 = arith.constant 0 : index
    %225 = vector.load %arg6[%c2_92, %c0_93, %c0_94] : memref<3x32x64xf32, #tpu.memory_space<vmem>>, vector<1x32x64xf32>
    %226 = vector.shape_cast %225 : vector<1x32x64xf32> to vector<32x64xf32>
    %cst_95 = arith.constant dense<0.000000e+00> : vector<16x64xf32>
    %227 = tpu.matmul %217, %226, %cst_95 {dimension_numbers = #tpu.dot_dimension_numbers<[1], [0], [0], [1], [0, 0, 1, 1], [], []>} : vector<16x32xf32>, vector<32x64xf32>, vector<16x64xf32> -> vector<16x64xf32>
    %228 = arith.addf %224, %227 : vector<16x64xf32>
    %c0_96 = arith.constant 0 : index
    %c0_97 = arith.constant 0 : index
    %229 = vector.load %arg7[%c0_96, %c0_97] : memref<1x64xf32, #tpu.memory_space<vmem>>, vector<1x64xf32>
    %230 = vector.broadcast %229 : vector<1x64xf32> to vector<16x64xf32>
    %231 = arith.addf %228, %230 : vector<16x64xf32>
    %232 = tpu.iota {dimensions = array<i32: 0>} : vector<8x16xi32>
    %233 = tpu.iota {dimensions = array<i32: 1>} : vector<8x16xi32>
    %c2_i32_98 = arith.constant 2 : i32
    %234 = vector.broadcast %c2_i32_98 : i32 to vector<8x16xi32>
    %235 = arith.muli %234, %232 : vector<8x16xi32>
    %c0_i32_99 = arith.constant 0 : i32
    %236 = vector.broadcast %c0_i32_99 : i32 to vector<8x16xi32>
    %237 = arith.addi %235, %236 : vector<8x16xi32>
    %238 = arith.cmpi eq, %233, %237 : vector<8x16xi32>
    %239 = arith.extui %238 : vector<8x16xi1> to vector<8x16xi32>
    %240 = arith.sitofp %239 : vector<8x16xi32> to vector<8x16xf32>
    %cst_100 = arith.constant dense<0.000000e+00> : vector<8x64xf32>
    %241 = tpu.matmul %240, %231, %cst_100 {dimension_numbers = #tpu.dot_dimension_numbers<[1], [0], [0], [1], [0, 0, 1, 1], [], []>} : vector<8x16xf32>, vector<16x64xf32>, vector<8x64xf32> -> vector<8x64xf32>
    %242 = tpu.iota {dimensions = array<i32: 0>} : vector<8x16xi32>
    %243 = tpu.iota {dimensions = array<i32: 1>} : vector<8x16xi32>
    %c2_i32_101 = arith.constant 2 : i32
    %244 = vector.broadcast %c2_i32_101 : i32 to vector<8x16xi32>
    %245 = arith.muli %244, %242 : vector<8x16xi32>
    %c1_i32_102 = arith.constant 1 : i32
    %246 = vector.broadcast %c1_i32_102 : i32 to vector<8x16xi32>
    %247 = arith.addi %245, %246 : vector<8x16xi32>
    %248 = arith.cmpi eq, %243, %247 : vector<8x16xi32>
    %249 = arith.extui %248 : vector<8x16xi1> to vector<8x16xi32>
    %250 = arith.sitofp %249 : vector<8x16xi32> to vector<8x16xf32>
    %cst_103 = arith.constant dense<0.000000e+00> : vector<8x64xf32>
    %251 = tpu.matmul %250, %231, %cst_103 {dimension_numbers = #tpu.dot_dimension_numbers<[1], [0], [0], [1], [0, 0, 1, 1], [], []>} : vector<8x16xf32>, vector<16x64xf32>, vector<8x64xf32> -> vector<8x64xf32>
    %252 = arith.maximumf %241, %251 : vector<8x64xf32>
    %cst_104 = arith.constant 0.000000e+00 : f32
    %253 = vector.broadcast %cst_104 : f32 to vector<8x64xf32>
    %254 = arith.maximumf %252, %253 : vector<8x64xf32>
    %255 = tpu.iota {dimensions = array<i32: 0>} : vector<8x8xi32>
    %256 = tpu.iota {dimensions = array<i32: 1>} : vector<8x8xi32>
    %c1_i32_105 = arith.constant 1 : i32
    %257 = vector.broadcast %c1_i32_105 : i32 to vector<8x8xi32>
    %258 = arith.muli %257, %255 : vector<8x8xi32>
    %c-1_i32_106 = arith.constant -1 : i32
    %259 = vector.broadcast %c-1_i32_106 : i32 to vector<8x8xi32>
    %260 = arith.addi %258, %259 : vector<8x8xi32>
    %261 = arith.cmpi eq, %256, %260 : vector<8x8xi32>
    %262 = arith.extui %261 : vector<8x8xi1> to vector<8x8xi32>
    %263 = arith.sitofp %262 : vector<8x8xi32> to vector<8x8xf32>
    %cst_107 = arith.constant dense<0.000000e+00> : vector<8x64xf32>
    %264 = tpu.matmul %263, %254, %cst_107 {dimension_numbers = #tpu.dot_dimension_numbers<[1], [0], [0], [1], [0, 0, 1, 1], [], []>} : vector<8x8xf32>, vector<8x64xf32>, vector<8x64xf32> -> vector<8x64xf32>
    %265 = tpu.iota {dimensions = array<i32: 0>} : vector<8x8xi32>
    %266 = tpu.iota {dimensions = array<i32: 1>} : vector<8x8xi32>
    %c1_i32_108 = arith.constant 1 : i32
    %267 = vector.broadcast %c1_i32_108 : i32 to vector<8x8xi32>
    %268 = arith.muli %267, %265 : vector<8x8xi32>
    %c1_i32_109 = arith.constant 1 : i32
    %269 = vector.broadcast %c1_i32_109 : i32 to vector<8x8xi32>
    %270 = arith.addi %268, %269 : vector<8x8xi32>
    %271 = arith.cmpi eq, %266, %270 : vector<8x8xi32>
    %272 = arith.extui %271 : vector<8x8xi1> to vector<8x8xi32>
    %273 = arith.sitofp %272 : vector<8x8xi32> to vector<8x8xf32>
    %cst_110 = arith.constant dense<0.000000e+00> : vector<8x64xf32>
    %274 = tpu.matmul %273, %254, %cst_110 {dimension_numbers = #tpu.dot_dimension_numbers<[1], [0], [0], [1], [0, 0, 1, 1], [], []>} : vector<8x8xf32>, vector<8x64xf32>, vector<8x64xf32> -> vector<8x64xf32>
    %c0_111 = arith.constant 0 : index
    %c0_112 = arith.constant 0 : index
    %c0_113 = arith.constant 0 : index
    %275 = vector.load %arg8[%c0_111, %c0_112, %c0_113] : memref<3x64x64xf32, #tpu.memory_space<vmem>>, vector<1x64x64xf32>
    %276 = vector.shape_cast %275 : vector<1x64x64xf32> to vector<64x64xf32>
    %cst_114 = arith.constant dense<0.000000e+00> : vector<8x64xf32>
    %277 = tpu.matmul %264, %276, %cst_114 {dimension_numbers = #tpu.dot_dimension_numbers<[1], [0], [0], [1], [0, 0, 1, 1], [], []>} : vector<8x64xf32>, vector<64x64xf32>, vector<8x64xf32> -> vector<8x64xf32>
    %c1_115 = arith.constant 1 : index
    %c0_116 = arith.constant 0 : index
    %c0_117 = arith.constant 0 : index
    %278 = vector.load %arg8[%c1_115, %c0_116, %c0_117] : memref<3x64x64xf32, #tpu.memory_space<vmem>>, vector<1x64x64xf32>
    %279 = vector.shape_cast %278 : vector<1x64x64xf32> to vector<64x64xf32>
    %cst_118 = arith.constant dense<0.000000e+00> : vector<8x64xf32>
    %280 = tpu.matmul %254, %279, %cst_118 {dimension_numbers = #tpu.dot_dimension_numbers<[1], [0], [0], [1], [0, 0, 1, 1], [], []>} : vector<8x64xf32>, vector<64x64xf32>, vector<8x64xf32> -> vector<8x64xf32>
    %281 = arith.addf %277, %280 : vector<8x64xf32>
    %c2_119 = arith.constant 2 : index
    %c0_120 = arith.constant 0 : index
    %c0_121 = arith.constant 0 : index
    %282 = vector.load %arg8[%c2_119, %c0_120, %c0_121] : memref<3x64x64xf32, #tpu.memory_space<vmem>>, vector<1x64x64xf32>
    %283 = vector.shape_cast %282 : vector<1x64x64xf32> to vector<64x64xf32>
    %cst_122 = arith.constant dense<0.000000e+00> : vector<8x64xf32>
    %284 = tpu.matmul %274, %283, %cst_122 {dimension_numbers = #tpu.dot_dimension_numbers<[1], [0], [0], [1], [0, 0, 1, 1], [], []>} : vector<8x64xf32>, vector<64x64xf32>, vector<8x64xf32> -> vector<8x64xf32>
    %285 = arith.addf %281, %284 : vector<8x64xf32>
    %c0_123 = arith.constant 0 : index
    %c0_124 = arith.constant 0 : index
    %286 = vector.load %arg9[%c0_123, %c0_124] : memref<1x64xf32, #tpu.memory_space<vmem>>, vector<1x64xf32>
    %287 = vector.broadcast %286 : vector<1x64xf32> to vector<8x64xf32>
    %288 = arith.addf %285, %287 : vector<8x64xf32>
    %289 = tpu.iota {dimensions = array<i32: 0>} : vector<4x8xi32>
    %290 = tpu.iota {dimensions = array<i32: 1>} : vector<4x8xi32>
    %c2_i32_125 = arith.constant 2 : i32
    %291 = vector.broadcast %c2_i32_125 : i32 to vector<4x8xi32>
    %292 = arith.muli %291, %289 : vector<4x8xi32>
    %c0_i32_126 = arith.constant 0 : i32
    %293 = vector.broadcast %c0_i32_126 : i32 to vector<4x8xi32>
    %294 = arith.addi %292, %293 : vector<4x8xi32>
    %295 = arith.cmpi eq, %290, %294 : vector<4x8xi32>
    %296 = arith.extui %295 : vector<4x8xi1> to vector<4x8xi32>
    %297 = arith.sitofp %296 : vector<4x8xi32> to vector<4x8xf32>
    %cst_127 = arith.constant dense<0.000000e+00> : vector<4x64xf32>
    %298 = tpu.matmul %297, %288, %cst_127 {dimension_numbers = #tpu.dot_dimension_numbers<[1], [0], [0], [1], [0, 0, 1, 1], [], []>} : vector<4x8xf32>, vector<8x64xf32>, vector<4x64xf32> -> vector<4x64xf32>
    %299 = tpu.iota {dimensions = array<i32: 0>} : vector<4x8xi32>
    %300 = tpu.iota {dimensions = array<i32: 1>} : vector<4x8xi32>
    %c2_i32_128 = arith.constant 2 : i32
    %301 = vector.broadcast %c2_i32_128 : i32 to vector<4x8xi32>
    %302 = arith.muli %301, %299 : vector<4x8xi32>
    %c1_i32_129 = arith.constant 1 : i32
    %303 = vector.broadcast %c1_i32_129 : i32 to vector<4x8xi32>
    %304 = arith.addi %302, %303 : vector<4x8xi32>
    %305 = arith.cmpi eq, %300, %304 : vector<4x8xi32>
    %306 = arith.extui %305 : vector<4x8xi1> to vector<4x8xi32>
    %307 = arith.sitofp %306 : vector<4x8xi32> to vector<4x8xf32>
    %cst_130 = arith.constant dense<0.000000e+00> : vector<4x64xf32>
    %308 = tpu.matmul %307, %288, %cst_130 {dimension_numbers = #tpu.dot_dimension_numbers<[1], [0], [0], [1], [0, 0, 1, 1], [], []>} : vector<4x8xf32>, vector<8x64xf32>, vector<4x64xf32> -> vector<4x64xf32>
    %309 = arith.maximumf %298, %308 : vector<4x64xf32>
    %cst_131 = arith.constant 0.000000e+00 : f32
    %310 = vector.broadcast %cst_131 : f32 to vector<4x64xf32>
    %311 = arith.maximumf %309, %310 : vector<4x64xf32>
    %312 = tpu.iota {dimensions = array<i32: 0>} : vector<4x4xi32>
    %313 = tpu.iota {dimensions = array<i32: 1>} : vector<4x4xi32>
    %c1_i32_132 = arith.constant 1 : i32
    %314 = vector.broadcast %c1_i32_132 : i32 to vector<4x4xi32>
    %315 = arith.muli %314, %312 : vector<4x4xi32>
    %c-1_i32_133 = arith.constant -1 : i32
    %316 = vector.broadcast %c-1_i32_133 : i32 to vector<4x4xi32>
    %317 = arith.addi %315, %316 : vector<4x4xi32>
    %318 = arith.cmpi eq, %313, %317 : vector<4x4xi32>
    %319 = arith.extui %318 : vector<4x4xi1> to vector<4x4xi32>
    %320 = arith.sitofp %319 : vector<4x4xi32> to vector<4x4xf32>
    %cst_134 = arith.constant dense<0.000000e+00> : vector<4x64xf32>
    %321 = tpu.matmul %320, %311, %cst_134 {dimension_numbers = #tpu.dot_dimension_numbers<[1], [0], [0], [1], [0, 0, 1, 1], [], []>} : vector<4x4xf32>, vector<4x64xf32>, vector<4x64xf32> -> vector<4x64xf32>
    %322 = tpu.iota {dimensions = array<i32: 0>} : vector<4x4xi32>
    %323 = tpu.iota {dimensions = array<i32: 1>} : vector<4x4xi32>
    %c1_i32_135 = arith.constant 1 : i32
    %324 = vector.broadcast %c1_i32_135 : i32 to vector<4x4xi32>
    %325 = arith.muli %324, %322 : vector<4x4xi32>
    %c1_i32_136 = arith.constant 1 : i32
    %326 = vector.broadcast %c1_i32_136 : i32 to vector<4x4xi32>
    %327 = arith.addi %325, %326 : vector<4x4xi32>
    %328 = arith.cmpi eq, %323, %327 : vector<4x4xi32>
    %329 = arith.extui %328 : vector<4x4xi1> to vector<4x4xi32>
    %330 = arith.sitofp %329 : vector<4x4xi32> to vector<4x4xf32>
    %cst_137 = arith.constant dense<0.000000e+00> : vector<4x64xf32>
    %331 = tpu.matmul %330, %311, %cst_137 {dimension_numbers = #tpu.dot_dimension_numbers<[1], [0], [0], [1], [0, 0, 1, 1], [], []>} : vector<4x4xf32>, vector<4x64xf32>, vector<4x64xf32> -> vector<4x64xf32>
    %c0_138 = arith.constant 0 : index
    %c0_139 = arith.constant 0 : index
    %c0_140 = arith.constant 0 : index
    %332 = vector.load %arg10[%c0_138, %c0_139, %c0_140] : memref<3x64x64xf32, #tpu.memory_space<vmem>>, vector<1x64x64xf32>
    %333 = vector.shape_cast %332 : vector<1x64x64xf32> to vector<64x64xf32>
    %cst_141 = arith.constant dense<0.000000e+00> : vector<4x64xf32>
    %334 = tpu.matmul %321, %333, %cst_141 {dimension_numbers = #tpu.dot_dimension_numbers<[1], [0], [0], [1], [0, 0, 1, 1], [], []>} : vector<4x64xf32>, vector<64x64xf32>, vector<4x64xf32> -> vector<4x64xf32>
    %c1_142 = arith.constant 1 : index
    %c0_143 = arith.constant 0 : index
    %c0_144 = arith.constant 0 : index
    %335 = vector.load %arg10[%c1_142, %c0_143, %c0_144] : memref<3x64x64xf32, #tpu.memory_space<vmem>>, vector<1x64x64xf32>
    %336 = vector.shape_cast %335 : vector<1x64x64xf32> to vector<64x64xf32>
    %cst_145 = arith.constant dense<0.000000e+00> : vector<4x64xf32>
    %337 = tpu.matmul %311, %336, %cst_145 {dimension_numbers = #tpu.dot_dimension_numbers<[1], [0], [0], [1], [0, 0, 1, 1], [], []>} : vector<4x64xf32>, vector<64x64xf32>, vector<4x64xf32> -> vector<4x64xf32>
    %338 = arith.addf %334, %337 : vector<4x64xf32>
    %c2_146 = arith.constant 2 : index
    %c0_147 = arith.constant 0 : index
    %c0_148 = arith.constant 0 : index
    %339 = vector.load %arg10[%c2_146, %c0_147, %c0_148] : memref<3x64x64xf32, #tpu.memory_space<vmem>>, vector<1x64x64xf32>
    %340 = vector.shape_cast %339 : vector<1x64x64xf32> to vector<64x64xf32>
    %cst_149 = arith.constant dense<0.000000e+00> : vector<4x64xf32>
    %341 = tpu.matmul %331, %340, %cst_149 {dimension_numbers = #tpu.dot_dimension_numbers<[1], [0], [0], [1], [0, 0, 1, 1], [], []>} : vector<4x64xf32>, vector<64x64xf32>, vector<4x64xf32> -> vector<4x64xf32>
    %342 = arith.addf %338, %341 : vector<4x64xf32>
    %c0_150 = arith.constant 0 : index
    %c0_151 = arith.constant 0 : index
    %343 = vector.load %arg11[%c0_150, %c0_151] : memref<1x64xf32, #tpu.memory_space<vmem>>, vector<1x64xf32>
    %344 = vector.broadcast %343 : vector<1x64xf32> to vector<4x64xf32>
    %345 = arith.addf %342, %344 : vector<4x64xf32>
    %346 = tpu.iota {dimensions = array<i32: 0>} : vector<2x4xi32>
    %347 = tpu.iota {dimensions = array<i32: 1>} : vector<2x4xi32>
    %c2_i32_152 = arith.constant 2 : i32
    %348 = vector.broadcast %c2_i32_152 : i32 to vector<2x4xi32>
    %349 = arith.muli %348, %346 : vector<2x4xi32>
    %c0_i32_153 = arith.constant 0 : i32
    %350 = vector.broadcast %c0_i32_153 : i32 to vector<2x4xi32>
    %351 = arith.addi %349, %350 : vector<2x4xi32>
    %352 = arith.cmpi eq, %347, %351 : vector<2x4xi32>
    %353 = arith.extui %352 : vector<2x4xi1> to vector<2x4xi32>
    %354 = arith.sitofp %353 : vector<2x4xi32> to vector<2x4xf32>
    %cst_154 = arith.constant dense<0.000000e+00> : vector<2x64xf32>
    %355 = tpu.matmul %354, %345, %cst_154 {dimension_numbers = #tpu.dot_dimension_numbers<[1], [0], [0], [1], [0, 0, 1, 1], [], []>} : vector<2x4xf32>, vector<4x64xf32>, vector<2x64xf32> -> vector<2x64xf32>
    %356 = tpu.iota {dimensions = array<i32: 0>} : vector<2x4xi32>
    %357 = tpu.iota {dimensions = array<i32: 1>} : vector<2x4xi32>
    %c2_i32_155 = arith.constant 2 : i32
    %358 = vector.broadcast %c2_i32_155 : i32 to vector<2x4xi32>
    %359 = arith.muli %358, %356 : vector<2x4xi32>
    %c1_i32_156 = arith.constant 1 : i32
    %360 = vector.broadcast %c1_i32_156 : i32 to vector<2x4xi32>
    %361 = arith.addi %359, %360 : vector<2x4xi32>
    %362 = arith.cmpi eq, %357, %361 : vector<2x4xi32>
    %363 = arith.extui %362 : vector<2x4xi1> to vector<2x4xi32>
    %364 = arith.sitofp %363 : vector<2x4xi32> to vector<2x4xf32>
    %cst_157 = arith.constant dense<0.000000e+00> : vector<2x64xf32>
    %365 = tpu.matmul %364, %345, %cst_157 {dimension_numbers = #tpu.dot_dimension_numbers<[1], [0], [0], [1], [0, 0, 1, 1], [], []>} : vector<2x4xf32>, vector<4x64xf32>, vector<2x64xf32> -> vector<2x64xf32>
    %366 = arith.maximumf %355, %365 : vector<2x64xf32>
    %cst_158 = arith.constant 0.000000e+00 : f32
    %367 = vector.broadcast %cst_158 : f32 to vector<2x64xf32>
    %368 = arith.maximumf %366, %367 : vector<2x64xf32>
    %369 = tpu.iota {dimensions = array<i32: 0>} : vector<2x2xi32>
    %370 = tpu.iota {dimensions = array<i32: 1>} : vector<2x2xi32>
    %c1_i32_159 = arith.constant 1 : i32
    %371 = vector.broadcast %c1_i32_159 : i32 to vector<2x2xi32>
    %372 = arith.muli %371, %369 : vector<2x2xi32>
    %c-1_i32_160 = arith.constant -1 : i32
    %373 = vector.broadcast %c-1_i32_160 : i32 to vector<2x2xi32>
    %374 = arith.addi %372, %373 : vector<2x2xi32>
    %375 = arith.cmpi eq, %370, %374 : vector<2x2xi32>
    %376 = arith.extui %375 : vector<2x2xi1> to vector<2x2xi32>
    %377 = arith.sitofp %376 : vector<2x2xi32> to vector<2x2xf32>
    %cst_161 = arith.constant dense<0.000000e+00> : vector<2x64xf32>
    %378 = tpu.matmul %377, %368, %cst_161 {dimension_numbers = #tpu.dot_dimension_numbers<[1], [0], [0], [1], [0, 0, 1, 1], [], []>} : vector<2x2xf32>, vector<2x64xf32>, vector<2x64xf32> -> vector<2x64xf32>
    %379 = tpu.iota {dimensions = array<i32: 0>} : vector<2x2xi32>
    %380 = tpu.iota {dimensions = array<i32: 1>} : vector<2x2xi32>
    %c1_i32_162 = arith.constant 1 : i32
    %381 = vector.broadcast %c1_i32_162 : i32 to vector<2x2xi32>
    %382 = arith.muli %381, %379 : vector<2x2xi32>
    %c1_i32_163 = arith.constant 1 : i32
    %383 = vector.broadcast %c1_i32_163 : i32 to vector<2x2xi32>
    %384 = arith.addi %382, %383 : vector<2x2xi32>
    %385 = arith.cmpi eq, %380, %384 : vector<2x2xi32>
    %386 = arith.extui %385 : vector<2x2xi1> to vector<2x2xi32>
    %387 = arith.sitofp %386 : vector<2x2xi32> to vector<2x2xf32>
    %cst_164 = arith.constant dense<0.000000e+00> : vector<2x64xf32>
    %388 = tpu.matmul %387, %368, %cst_164 {dimension_numbers = #tpu.dot_dimension_numbers<[1], [0], [0], [1], [0, 0, 1, 1], [], []>} : vector<2x2xf32>, vector<2x64xf32>, vector<2x64xf32> -> vector<2x64xf32>
    %c0_165 = arith.constant 0 : index
    %c0_166 = arith.constant 0 : index
    %c0_167 = arith.constant 0 : index
    %389 = vector.load %arg12[%c0_165, %c0_166, %c0_167] : memref<3x64x64xf32, #tpu.memory_space<vmem>>, vector<1x64x64xf32>
    %390 = vector.shape_cast %389 : vector<1x64x64xf32> to vector<64x64xf32>
    %cst_168 = arith.constant dense<0.000000e+00> : vector<2x64xf32>
    %391 = tpu.matmul %378, %390, %cst_168 {dimension_numbers = #tpu.dot_dimension_numbers<[1], [0], [0], [1], [0, 0, 1, 1], [], []>} : vector<2x64xf32>, vector<64x64xf32>, vector<2x64xf32> -> vector<2x64xf32>
    %c1_169 = arith.constant 1 : index
    %c0_170 = arith.constant 0 : index
    %c0_171 = arith.constant 0 : index
    %392 = vector.load %arg12[%c1_169, %c0_170, %c0_171] : memref<3x64x64xf32, #tpu.memory_space<vmem>>, vector<1x64x64xf32>
    %393 = vector.shape_cast %392 : vector<1x64x64xf32> to vector<64x64xf32>
    %cst_172 = arith.constant dense<0.000000e+00> : vector<2x64xf32>
    %394 = tpu.matmul %368, %393, %cst_172 {dimension_numbers = #tpu.dot_dimension_numbers<[1], [0], [0], [1], [0, 0, 1, 1], [], []>} : vector<2x64xf32>, vector<64x64xf32>, vector<2x64xf32> -> vector<2x64xf32>
    %395 = arith.addf %391, %394 : vector<2x64xf32>
    %c2_173 = arith.constant 2 : index
    %c0_174 = arith.constant 0 : index
    %c0_175 = arith.constant 0 : index
    %396 = vector.load %arg12[%c2_173, %c0_174, %c0_175] : memref<3x64x64xf32, #tpu.memory_space<vmem>>, vector<1x64x64xf32>
    %397 = vector.shape_cast %396 : vector<1x64x64xf32> to vector<64x64xf32>
    %cst_176 = arith.constant dense<0.000000e+00> : vector<2x64xf32>
    %398 = tpu.matmul %388, %397, %cst_176 {dimension_numbers = #tpu.dot_dimension_numbers<[1], [0], [0], [1], [0, 0, 1, 1], [], []>} : vector<2x64xf32>, vector<64x64xf32>, vector<2x64xf32> -> vector<2x64xf32>
    %399 = arith.addf %395, %398 : vector<2x64xf32>
    %c0_177 = arith.constant 0 : index
    %c0_178 = arith.constant 0 : index
    %400 = vector.load %arg13[%c0_177, %c0_178] : memref<1x64xf32, #tpu.memory_space<vmem>>, vector<1x64xf32>
    %401 = vector.broadcast %400 : vector<1x64xf32> to vector<2x64xf32>
    %402 = arith.addf %399, %401 : vector<2x64xf32>
    %403 = tpu.iota {dimensions = array<i32: 0>} : vector<1x2xi32>
    %404 = tpu.iota {dimensions = array<i32: 1>} : vector<1x2xi32>
    %c2_i32_179 = arith.constant 2 : i32
    %405 = vector.broadcast %c2_i32_179 : i32 to vector<1x2xi32>
    %406 = arith.muli %405, %403 : vector<1x2xi32>
    %c0_i32_180 = arith.constant 0 : i32
    %407 = vector.broadcast %c0_i32_180 : i32 to vector<1x2xi32>
    %408 = arith.addi %406, %407 : vector<1x2xi32>
    %409 = arith.cmpi eq, %404, %408 : vector<1x2xi32>
    %410 = arith.extui %409 : vector<1x2xi1> to vector<1x2xi32>
    %411 = arith.sitofp %410 : vector<1x2xi32> to vector<1x2xf32>
    %cst_181 = arith.constant dense<0.000000e+00> : vector<1x64xf32>
    %412 = tpu.matmul %411, %402, %cst_181 {dimension_numbers = #tpu.dot_dimension_numbers<[1], [0], [0], [1], [0, 0, 1, 1], [], []>} : vector<1x2xf32>, vector<2x64xf32>, vector<1x64xf32> -> vector<1x64xf32>
    %413 = tpu.iota {dimensions = array<i32: 0>} : vector<1x2xi32>
    %414 = tpu.iota {dimensions = array<i32: 1>} : vector<1x2xi32>
    %c2_i32_182 = arith.constant 2 : i32
    %415 = vector.broadcast %c2_i32_182 : i32 to vector<1x2xi32>
    %416 = arith.muli %415, %413 : vector<1x2xi32>
    %c1_i32_183 = arith.constant 1 : i32
    %417 = vector.broadcast %c1_i32_183 : i32 to vector<1x2xi32>
    %418 = arith.addi %416, %417 : vector<1x2xi32>
    %419 = arith.cmpi eq, %414, %418 : vector<1x2xi32>
    %420 = arith.extui %419 : vector<1x2xi1> to vector<1x2xi32>
    %421 = arith.sitofp %420 : vector<1x2xi32> to vector<1x2xf32>
    %cst_184 = arith.constant dense<0.000000e+00> : vector<1x64xf32>
    %422 = tpu.matmul %421, %402, %cst_184 {dimension_numbers = #tpu.dot_dimension_numbers<[1], [0], [0], [1], [0, 0, 1, 1], [], []>} : vector<1x2xf32>, vector<2x64xf32>, vector<1x64xf32> -> vector<1x64xf32>
    %423 = arith.maximumf %412, %422 : vector<1x64xf32>
    %cst_185 = arith.constant 0.000000e+00 : f32
    %424 = vector.broadcast %cst_185 : f32 to vector<1x64xf32>
    %425 = arith.maximumf %423, %424 : vector<1x64xf32>
    %c0_186 = arith.constant 0 : index
    %c0_187 = arith.constant 0 : index
    %426 = vector.load %arg14[%c0_186, %c0_187] : memref<64x128xf32, #tpu.memory_space<vmem>>, vector<64x128xf32>
    %cst_188 = arith.constant dense<0.000000e+00> : vector<1x128xf32>
    %427 = tpu.matmul %425, %426, %cst_188 {dimension_numbers = #tpu.dot_dimension_numbers<[1], [0], [0], [1], [0, 0, 1, 1], [], []>} : vector<1x64xf32>, vector<64x128xf32>, vector<1x128xf32> -> vector<1x128xf32>
    %c0_189 = arith.constant 0 : index
    %c0_190 = arith.constant 0 : index
    %428 = vector.load %arg15[%c0_189, %c0_190] : memref<1x128xf32, #tpu.memory_space<vmem>>, vector<1x128xf32>
    %429 = arith.addf %427, %428 : vector<1x128xf32>
    %c0_191 = arith.constant 0 : index
    %c0_192 = arith.constant 0 : index
    %430 = vector.load %arg16[%c0_191, %c0_192] : memref<128x384xf32, #tpu.memory_space<vmem>>, vector<128x384xf32>
    %cst_193 = arith.constant dense<0.000000e+00> : vector<1x384xf32>
    %431 = tpu.matmul %429, %430, %cst_193 {dimension_numbers = #tpu.dot_dimension_numbers<[1], [0], [0], [1], [0, 0, 1, 1], [], []>} : vector<1x128xf32>, vector<128x384xf32>, vector<1x384xf32> -> vector<1x384xf32>
    %c0_194 = arith.constant 0 : index
    %c0_195 = arith.constant 0 : index
    %432 = vector.load %arg17[%c0_194, %c0_195] : memref<1x384xf32, #tpu.memory_space<vmem>>, vector<1x384xf32>
    %433 = arith.addf %431, %432 : vector<1x384xf32>
    %cst_196 = arith.constant 0.000000e+00 : f32
    %434 = vector.broadcast %cst_196 : f32 to vector<1x384xf32>
    %435 = arith.maximumf %433, %434 : vector<1x384xf32>
    %c0_197 = arith.constant 0 : index
    %c0_198 = arith.constant 0 : index
    %436 = vector.load %arg18[%c0_197, %c0_198] : memref<384x128xf32, #tpu.memory_space<vmem>>, vector<384x128xf32>
    %cst_199 = arith.constant dense<0.000000e+00> : vector<1x128xf32>
    %437 = tpu.matmul %435, %436, %cst_199 {dimension_numbers = #tpu.dot_dimension_numbers<[1], [0], [0], [1], [0, 0, 1, 1], [], []>} : vector<1x384xf32>, vector<384x128xf32>, vector<1x128xf32> -> vector<1x128xf32>
    %c0_200 = arith.constant 0 : index
    %c0_201 = arith.constant 0 : index
    %438 = vector.load %arg19[%c0_200, %c0_201] : memref<1x128xf32, #tpu.memory_space<vmem>>, vector<1x128xf32>
    %439 = arith.addf %437, %438 : vector<1x128xf32>
    %c0_202 = arith.constant 0 : index
    %c0_203 = arith.constant 0 : index
    %c0_204 = arith.constant 0 : index
    %440 = vector.load %arg20[%c0_202, %c0_203, %c0_204] : memref<1x1x128xf32, #tpu.memory_space<vmem>>, vector<1x1x128xf32>
    %441 = vector.shape_cast %440 : vector<1x1x128xf32> to vector<1x128xf32>
    %442 = vector.shape_cast %439 : vector<1x128xf32> to vector<1x1x128xf32>
    tpu.vector_store %arg20[%c0_202, %c0_203, %c0_204], %442 {strides = array<i32>} : memref<1x1x128xf32, #tpu.memory_space<vmem>>, vector<1x1x128xf32>,
    return
  }
  func.func @transform_0(%arg0: i32) -> (i32, i32, i32) {
    %c0_i32 = arith.constant 0 : i32
    %c0_i32_0 = arith.constant 0 : i32
    %c0_i32_1 = arith.constant 0 : i32
    return %arg0, %c0_i32, %c0_i32_0 : i32, i32, i32
  }
  func.func @transform_1(%arg0: i32) -> (i32, i32, i32) {
    %c0_i32 = arith.constant 0 : i32
    %c0_i32_0 = arith.constant 0 : i32
    %c0_i32_1 = arith.constant 0 : i32
    %c0_i32_2 = arith.constant 0 : i32
    return %c0_i32, %c0_i32_0, %c0_i32_1 : i32, i32, i32
  }
  func.func @transform_2(%arg0: i32) -> (i32, i32) {
    %c0_i32 = arith.constant 0 : i32
    %c0_i32_0 = arith.constant 0 : i32
    %c0_i32_1 = arith.constant 0 : i32
    return %c0_i32, %c0_i32_0 : i32, i32
  }
  func.func @transform_3(%arg0: i32) -> (i32, i32, i32) {
    %c0_i32 = arith.constant 0 : i32
    %c0_i32_0 = arith.constant 0 : i32
    %c0_i32_1 = arith.constant 0 : i32
    %c0_i32_2 = arith.constant 0 : i32
    return %c0_i32, %c0_i32_0, %c0_i32_1 : i32, i32, i32
  }
  func.func @transform_4(%arg0: i32) -> (i32, i32) {
    %c0_i32 = arith.constant 0 : i32
    %c0_i32_0 = arith.constant 0 : i32
    %c0_i32_1 = arith.constant 0 : i32
    return %c0_i32, %c0_i32_0 : i32, i32
  }
  func.func @transform_5(%arg0: i32) -> (i32, i32, i32) {
    %c0_i32 = arith.constant 0 : i32
    %c0_i32_0 = arith.constant 0 : i32
    %c0_i32_1 = arith.constant 0 : i32
    %c0_i32_2 = arith.constant 0 : i32
    return %c0_i32, %c0_i32_0, %c0_i32_1 : i32, i32, i32
  }
  func.func @transform_6(%arg0: i32) -> (i32, i32) {
    %c0_i32 = arith.constant 0 : i32
    %c0_i32_0 = arith.constant 0 : i32
    %c0_i32_1 = arith.constant 0 : i32
    return %c0_i32, %c0_i32_0 : i32, i32
  }
  func.func @transform_7(%arg0: i32) -> (i32, i32, i32) {
    %c0_i32 = arith.constant 0 : i32
    %c0_i32_0 = arith.constant 0 : i32
    %c0_i32_1 = arith.constant 0 : i32
    %c0_i32_2 = arith.constant 0 : i32
    return %c0_i32, %c0_i32_0, %c0_i32_1 : i32, i32, i32
  }
  func.func @transform_8(%arg0: i32) -> (i32, i32) {
    %c0_i32 = arith.constant 0 : i32
    %c0_i32_0 = arith.constant 0 : i32
    %c0_i32_1 = arith.constant 0 : i32
    return %c0_i32, %c0_i32_0 : i32, i32
  }
  func.func @transform_9(%arg0: i32) -> (i32, i32, i32) {
    %c0_i32 = arith.constant 0 : i32
    %c0_i32_0 = arith.constant 0 : i32
    %c0_i32_1 = arith.constant 0 : i32
    %c0_i32_2 = arith.constant 0 : i32
    return %c0_i32, %c0_i32_0, %c0_i32_1 : i32, i32, i32
  }
  func.func @transform_10(%arg0: i32) -> (i32, i32) {
    %c0_i32 = arith.constant 0 : i32
    %c0_i32_0 = arith.constant 0 : i32
    %c0_i32_1 = arith.constant 0 : i32
    return %c0_i32, %c0_i32_0 : i32, i32
  }
  func.func @transform_11(%arg0: i32) -> (i32, i32, i32) {
    %c0_i32 = arith.constant 0 : i32
    %c0_i32_0 = arith.constant 0 : i32
    %c0_i32_1 = arith.constant 0 : i32
    %c0_i32_2 = arith.constant 0 : i32
    return %c0_i32, %c0_i32_0, %c0_i32_1 : i32, i32, i32
  }
  func.func @transform_12(%arg0: i32) -> (i32, i32) {
    %c0_i32 = arith.constant 0 : i32
    %c0_i32_0 = arith.constant 0 : i32
    %c0_i32_1 = arith.constant 0 : i32
    return %c0_i32, %c0_i32_0 : i32, i32
  }
  func.func @transform_13(%arg0: i32) -> (i32, i32) {
    %c0_i32 = arith.constant 0 : i32
    %c0_i32_0 = arith.constant 0 : i32
    %c0_i32_1 = arith.constant 0 : i32
    return %c0_i32, %c0_i32_0 : i32, i32
  }
  func.func @transform_14(%arg0: i32) -> (i32, i32) {
    %c0_i32 = arith.constant 0 : i32
    %c0_i32_0 = arith.constant 0 : i32
    %c0_i32_1 = arith.constant 0 : i32
    return %c0_i32, %c0_i32_0 : i32, i32
  }
  func.func @transform_15(%arg0: i32) -> (i32, i32) {
    %c0_i32 = arith.constant 0 : i32
    %c0_i32_0 = arith.constant 0 : i32
    %c0_i32_1 = arith.constant 0 : i32
    return %c0_i32, %c0_i32_0 : i32, i32
  }
  func.func @transform_16(%arg0: i32) -> (i32, i32) {
    %c0_i32 = arith.constant 0 : i32
    %c0_i32_0 = arith.constant 0 : i32
    %c0_i32_1 = arith.constant 0 : i32
    return %c0_i32, %c0_i32_0 : i32, i32
  }
  func.func @transform_17(%arg0: i32) -> (i32, i32) {
    %c0_i32 = arith.constant 0 : i32
    %c0_i32_0 = arith.constant 0 : i32
    %c0_i32_1 = arith.constant 0 : i32
    return %c0_i32, %c0_i32_0 : i32, i32
  }
  func.func @transform_18(%arg0: i32) -> (i32, i32) {
    %c0_i32 = arith.constant 0 : i32
    %c0_i32_0 = arith.constant 0 : i32
    %c0_i32_1 = arith.constant 0 : i32
    return %c0_i32, %c0_i32_0 : i32, i32
  }
  func.func @transform_19(%arg0: i32) -> (i32, i32, i32) {
    %c0_i32 = arith.constant 0 : i32
    %c0_i32_0 = arith.constant 0 : i32
    %c0_i32_1 = arith.constant 0 : i32
    return %arg0, %c0_i32, %c0_i32_0 : i32, i32, i32
  }
}

</mosaic_0001>

<llo_original>
// kernel: wdcnnp_forward.1
$region0: #{wdcnnp_forward.1}
  #allocation0 [shape = 'u32[]', space=smem, size = 0x4, offset = 0x4, fixed_abs, tag = 'smem constant byte address 0x4 - core index']
  #allocation1 [shape = 'u32[72,128]{1,0:T(1,128)}', space=vmem, size = 0x9000, scoped, tag = 'internal scratch']
  %s0 = inlined_call_operand.vmem [shape: f32[2,72,8], index: 0, kind: input, shape index: {}]
  %s1 = inlined_call_operand.hbm [shape: f32[8,8,16], index: 1, kind: input, shape index: {}]
  %s2 = inlined_call_operand.hbm [shape: f32[1,16], index: 2, kind: input, shape index: {}]
  %s3 = inlined_call_operand.hbm [shape: f32[3,16,32], index: 3, kind: input, shape index: {}]
  %s4 = inlined_call_operand.hbm [shape: f32[1,32], index: 4, kind: input, shape index: {}]
  %s5 = inlined_call_operand.hbm [shape: f32[3,32,64], index: 5, kind: input, shape index: {}]
  %s6 = inlined_call_operand.hbm [shape: f32[1,64], index: 6, kind: input, shape index: {}]
  %s7 = inlined_call_operand.vmem [shape: f32[3,64,64], index: 7, kind: input, shape index: {}]
  %s8 = inlined_call_operand.hbm [shape: f32[1,64], index: 8, kind: input, shape index: {}]
  %s9 = inlined_call_operand.hbm [shape: f32[3,64,64], index: 9, kind: input, shape index: {}]
  %s10 = inlined_call_operand.vmem [shape: f32[1,64], index: 10, kind: input, shape index: {}]
  %s11 = inlined_call_operand.hbm [shape: f32[3,64,64], index: 11, kind: input, shape index: {}]
  %s12 = inlined_call_operand.vmem [shape: f32[1,64], index: 12, kind: input, shape index: {}]
  %s13 = inlined_call_operand.hbm [shape: f32[64,128], index: 13, kind: input, shape index: {}]
  %s14 = inlined_call_operand.vmem [shape: f32[1,128], index: 14, kind: input, shape index: {}]
  %s15 = inlined_call_operand.hbm [shape: f32[128,384], index: 15, kind: input, shape index: {}]
  %s16 = inlined_call_operand.vmem [shape: f32[1,384], index: 16, kind: input, shape index: {}]
  %s17 = inlined_call_operand.hbm [shape: f32[384,128], index: 17, kind: input, shape index: {}]
  %s18 = inlined_call_operand.vmem [shape: f32[1,128], index: 18, kind: input, shape index: {}]
  %s19 = inlined_call_operand.vmem [shape: f32[2,1,128], index: 19, kind: output, shape index: {}]
  %s20 = sld [smem:[#allocation0]]
  $region157: #{wdcnnp_forward.1} parent=0
    _
  %s22 = ssub.s32 1, %s20
  %s23 = scalar_select 0, %s22, %s20
  $region1: #{wdcnnp_forward.1} parent=0
    #allocation2 [shape = 'u8[32768]{0}', space=vmem, size = 0x8000, scoped, tag = 'input window, operand 1, single buffered']
    #allocation3 [shape = 's32[2]{0}', space=sflag, size = 0x8, scoped, tag = 'scoped memory for wdcnnp_forward.1']
    #allocation4 [shape = 'u8[512]{0}', space=vmem, size = 0x400, scoped, tag = 'input window, operand 2, single buffered']
    #allocation5 [shape = 's32[1]{0}', space=sflag, size = 0x4, scoped, tag = 'scoped memory for wdcnnp_forward.1']
    #allocation6 [shape = 'u8[24576]{0}', space=vmem, size = 0x6000, scoped, tag = 'input window, operand 3, single buffered']
    #allocation7 [shape = 'u8[512]{0}', space=vmem, size = 0x400, scoped, tag = 'input window, operand 4, single buffered']
    #allocation8 [shape = 's32[1]{0}', space=sflag, size = 0x4, scoped, tag = 'scoped memory for wdcnnp_forward.1']
    #allocation9 [shape = 'u8[49152]{0}', space=vmem, size = 0xc000, scoped, tag = 'input window, operand 5, single buffered']
    #allocation10 [shape = 'u8[512]{0}', space=vmem, size = 0x400, scoped, tag = 'input window, operand 6, single buffered']
    #allocation11 [shape = 's32[1]{0}', space=sflag, size = 0x4, scoped, tag = 'scoped memory for wdcnnp_forward.1']
    #allocation12 [shape = 'u8[512]{0}', space=vmem, size = 0x400, scoped, tag = 'input window, operand 8, single buffered']
    #allocation13 [shape = 'u8[98304]{0}', space=vmem, size = 0x18000, scoped, tag = 'input window, operand 9, single buffered']
    #allocation14 [shape = 's32[1]{0}', space=sflag, size = 0x4, scoped, tag = 'scoped memory for wdcnnp_forward.1']
    #allocation15 [shape = 'u8[98304]{0}', space=vmem, size = 0x18000, scoped, tag = 'input window, operand 11, single buffered']
    #allocation16 [shape = 'u8[32768]{0}', space=vmem, size = 0x8000, scoped, tag = 'input window, operand 13, single buffered']
    #allocation17 [shape = 's32[1]{0}', space=sflag, size = 0x4, scoped, tag = 'scoped memory for wdcnnp_forward.1']
    #allocation18 [shape = 'u8[196608]{0}', space=vmem, size = 0x30000, scoped, tag = 'input window, operand 15, single buffered']
    #allocation19 [shape = 'u8[196608]{0}', space=vmem, size = 0x30000, scoped, tag = 'input window, operand 17, single buffered']
    #allocation20 [shape = 's32[1]{0}', space=sflag, size = 0x4, scoped, tag = 'scoped memory for wdcnnp_forward.1']
    %24 = vsyncpa [#allocation3], 0
    %25 = vsyncpa [#allocation5], 0
    %26 = vsyncpa [#allocation8], 0
    %27 = vsyncpa [#allocation11], 0
    %28 = vsyncpa [#allocation14], 0
    %29 = vsyncpa [#allocation17], 0
    %30 = vsyncpa [#allocation20], 0
    loop: start=0, step=1, limit=4
    $region2: #{wdcnnp_forward.1} parent=1 // loop_pre_header
      _
    $region3: #{wdcnnp_forward.1} parent=1 // loop_header
      %s32 = sphi 0, %s36
      %p33 = scmp.ge.s32.totalorder %s32, 4
      %s42 = sphi 0, %s44
      %s45 = sphi 0, %s42
      %s46 = sphi 0, %s45
      %s62 = sphi 0, %s46
      %s66 = sphi 0, %s66
      %s68 = sphi 0, %s66
      %s69 = sphi 0, %s68
      %s83 = sphi 0, %s69
      %s87 = sphi 0, %s87
      %s89 = sphi 0, %s87
      %s90 = sphi 0, %s89
      %s104 = sphi 0, %s90
      %s108 = sphi 0, %s108
      %s110 = sphi 0, %s108
      %s111 = sphi 0, %s110
      %s125 = sphi 0, %s111
      %s129 = sphi 0, %s129
      %s131 = sphi 0, %s129
      %s132 = sphi 0, %s131
      %s146 = sphi 0, %s132
      %s150 = sphi 0, %s150
      %s152 = sphi 0, %s150
      %s153 = sphi 0, %s152
      %s167 = sphi 0, %s153
      %s171 = sphi 0, %s171
      %s173 = sphi 0, %s171
      %s174 = sphi 0, %s173
      %s188 = sphi 0, %s174
      %s192 = sphi 0, %s192
      %s194 = sphi 0, %s192
      %s195 = sphi 0, %s194
      %s209 = sphi 0, %s195
      %s213 = sphi 0, %s213
      %s215 = sphi 0, %s213
      %s216 = sphi 0, %s215
      %s230 = sphi 0, %s216
      %s234 = sphi 0, %s234
      %s236 = sphi 0, %s234
      %s237 = sphi 0, %s236
      %s251 = sphi 0, %s237
      %s255 = sphi 0, %s255
      %s257 = sphi 0, %s255
      %s258 = sphi 0, %s257
      %s272 = sphi 0, %s258
      %s276 = sphi 0, %s276
      %s278 = sphi 0, %s276
      %s279 = sphi 0, %s278
      %s293 = sphi 0, %s279
      %s297 = sphi 0, %s297
      %s299 = sphi 0, %s297
      %s300 = sphi 0, %s299
      %s314 = sphi 0, %s300
      %s318 = sphi 0, %s318
      %s320 = sphi 0, %s318
      %s321 = sphi 0, %s320
      %s335 = sphi 0, %s321
      %s339 = sphi 0, %s339
      %s341 = sphi 0, %s339
      %s342 = sphi 0, %s341
      %s356 = sphi 0, %s342
      %s360 = sphi 0, %s360
      %s362 = sphi 0, %s360
      %s363 = sphi 0, %s362
      %s377 = sphi 0, %s363
      %s381 = sphi 0, %s381
      %s383 = sphi 0, %s381
      %s384 = sphi 0, %s383
      %s398 = sphi 0, %s384
      %s402 = sphi 0, %s402
      %s404 = sphi 0, %s402
      %s405 = sphi 0, %s404
      %s419 = sphi 0, %s405
      %s423 = sphi 0, %s423
      %s425 = sphi 0, %s423
      %s426 = sphi 0, %s425
      %s440 = sphi 0, %s426
      %s446 = sphi 0, %s448
      %s449 = sphi 0, %s446
      %s450 = sphi 0, %s449
      %s466 = sphi 0, %s450
    $region4: #{wdcnnp_forward.1} parent=1 // loop_header_branch
      %35 = sbr.rel (%p33) target = $region8
    $region5: #{wdcnnp_forward.1} parent=1 // loop_body
      %s37 = ssub.s32 %s32, 1
      %s38 = ssub.s32 %s32, 2
      %s39 = sadd.s32 %s32, 1
      %s40 = ssub.s32 %s32, %s39
      %p41 = scmp.eq.s32.totalorder %s40, 0
      %s43 = sadd.s32 %s42, 1
      %s44 = scalar_select %p41, %s42, %s43
      %p47 = pneg %p41
      %p48 = scmp.eq.s32.totalorder %s32, 1
      %p49 = por %p47, %p48
      %p50 = scmp.ne.s32.totalorder %s42, %s45
      %p51 = scmp.eq.s32.totalorder %s32, 0
      %p52 = por %p50, %p51
      %p53 = scmp.ne.s32.totalorder %s42, %s45
      %p54 = scmp.eq.s32.totalorder %s37, 1
      %p55 = por %p53, %p54
      %p56 = scmp.ne.s32.totalorder %s45, %s46
      %p57 = scmp.eq.s32.totalorder %s37, 0
      %p58 = por %p56, %p57
      %p59 = scmp.ne.s32.totalorder %s45, %s46
      %p60 = scmp.eq.s32.totalorder %s38, 1
      %p61 = por %p59, %p60
      %p63 = scmp.ne.s32.totalorder %s46, %s62
      %p64 = scmp.eq.s32.totalorder %s38, 0
      %p65 = por %p63, %p64
      %s67 = sadd.s32 %s66, 1
      %p70 = scmp.eq.s32.totalorder %s32, 1
      %p71 = scmp.ne.s32.totalorder %s66, %s68
      %p72 = scmp.eq.s32.totalorder %s32, 0
      %p73 = por %p71, %p72
      %p74 = scmp.ne.s32.totalorder %s66, %s68
      %p75 = scmp.eq.s32.totalorder %s37, 1
      %p76 = por %p74, %p75
      %p77 = scmp.ne.s32.totalorder %s68, %s69
      %p78 = scmp.eq.s32.totalorder %s37, 0
      %p79 = por %p77, %p78
      %p80 = scmp.ne.s32.totalorder %s68, %s69
      %p81 = scmp.eq.s32.totalorder %s38, 1
      %p82 = por %p80, %p81
      %p84 = scmp.ne.s32.totalorder %s69, %s83
      %p85 = scmp.eq.s32.totalorder %s38, 0
      %p86 = por %p84, %p85
      %s88 = sadd.s32 %s87, 1
      %p91 = scmp.eq.s32.totalorder %s32, 1
      %p92 = scmp.ne.s32.totalorder %s87, %s89
      %p93 = scmp.eq.s32.totalorder %s32, 0
      %p94 = por %p92, %p93
      %p95 = scmp.ne.s32.totalorder %s87, %s89
      %p96 = scmp.eq.s32.totalorder %s37, 1
      %p97 = por %p95, %p96
      %p98 = scmp.ne.s32.totalorder %s89, %s90
      %p99 = scmp.eq.s32.totalorder %s37, 0
      %p100 = por %p98, %p99
      %p101 = scmp.ne.s32.totalorder %s89, %s90
      %p102 = scmp.eq.s32.totalorder %s38, 1
      %p103 = por %p101, %p102
      %p105 = scmp.ne.s32.totalorder %s90, %s104
      %p106 = scmp.eq.s32.totalorder %s38, 0
      %p107 = por %p105, %p106
      %s109 = sadd.s32 %s108, 1
      %p112 = scmp.eq.s32.totalorder %s32, 1
      %p113 = scmp.ne.s32.totalorder %s108, %s110
      %p114 = scmp.eq.s32.totalorder %s32, 0
      %p115 = por %p113, %p114
      %p116 = scmp.ne.s32.totalorder %s108, %s110
      %p117 = scmp.eq.s32.totalorder %s37, 1
      %p118 = por %p116, %p117
      %p119 = scmp.ne.s32.totalorder %s110, %s111
      %p120 = scmp.eq.s32.totalorder %s37, 0
      %p121 = por %p119, %p120
      %p122 = scmp.ne.s32.totalorder %s110, %s111
      %p123 = scmp.eq.s32.totalorder %s38, 1
      %p124 = por %p122, %p123
      %p126 = scmp.ne.s32.totalorder %s111, %s125
      %p127 = scmp.eq.s32.totalorder %s38, 0
      %p128 = por %p126, %p127
      %s130 = sadd.s32 %s129, 1
      %p133 = scmp.eq.s32.totalorder %s32, 1
      %p134 = scmp.ne.s32.totalorder %s129, %s131
      %p135 = scmp.eq.s32.totalorder %s32, 0
      %p136 = por %p134, %p135
      %p137 = scmp.ne.s32.totalorder %s129, %s131
      %p138 = scmp.eq.s32.totalorder %s37, 1
      %p139 = por %p137, %p138
      %p140 = scmp.ne.s32.totalorder %s131, %s132
      %p141 = scmp.eq.s32.totalorder %s37, 0
      %p142 = por %p140, %p141
      %p143 = scmp.ne.s32.totalorder %s131, %s132
      %p144 = scmp.eq.s32.totalorder %s38, 1
      %p145 = por %p143, %p144
      %p147 = scmp.ne.s32.totalorder %s132, %s146
      %p148 = scmp.eq.s32.totalorder %s38, 0
      %p149 = por %p147, %p148
      %s151 = sadd.s32 %s150, 1
      %p154 = scmp.eq.s32.totalorder %s32, 1
      %p155 = scmp.ne.s32.totalorder %s150, %s152
      %p156 = scmp.eq.s32.totalorder %s32, 0
      %p157 = por %p155, %p156
      %p158 = scmp.ne.s32.totalorder %s150, %s152
      %p159 = scmp.eq.s32.totalorder %s37, 1
      %p160 = por %p158, %p159
      %p161 = scmp.ne.s32.totalorder %s152, %s153
      %p162 = scmp.eq.s32.totalorder %s37, 0
      %p163 = por %p161, %p162
      %p164 = scmp.ne.s32.totalorder %s152, %s153
      %p165 = scmp.eq.s32.totalorder %s38, 1
      %p166 = por %p164, %p165
      %p168 = scmp.ne.s32.totalorder %s153, %s167
      %p169 = scmp.eq.s32.totalorder %s38, 0
      %p170 = por %p168, %p169
      %s172 = sadd.s32 %s171, 1
      %p175 = scmp.eq.s32.totalorder %s32, 1
      %p176 = scmp.ne.s32.totalorder %s171, %s173
      %p177 = scmp.eq.s32.totalorder %s32, 0
      %p178 = por %p176, %p177
      %p179 = scmp.ne.s32.totalorder %s171, %s173
      %p180 = scmp.eq.s32.totalorder %s37, 1
      %p181 = por %p179, %p180
      %p182 = scmp.ne.s32.totalorder %s173, %s174
      %p183 = scmp.eq.s32.totalorder %s37, 0
      %p184 = por %p182, %p183
      %p185 = scmp.ne.s32.totalorder %s173, %s174
      %p186 = scmp.eq.s32.totalorder %s38, 1
      %p187 = por %p185, %p186
      %p189 = scmp.ne.s32.totalorder %s174, %s188
      %p190 = scmp.eq.s32.totalorder %s38, 0
      %p191 = por %p189, %p190
      %s193 = sadd.s32 %s192, 1
      %p196 = scmp.eq.s32.totalorder %s32, 1
      %p197 = scmp.ne.s32.totalorder %s192, %s194
      %p198 = scmp.eq.s32.totalorder %s32, 0
      %p199 = por %p197, %p198
      %p200 = scmp.ne.s32.totalorder %s192, %s194
      %p201 = scmp.eq.s32.totalorder %s37, 1
      %p202 = por %p200, %p201
      %p203 = scmp.ne.s32.totalorder %s194, %s195
      %p204 = scmp.eq.s32.totalorder %s37, 0
      %p205 = por %p203, %p204
      %p206 = scmp.ne.s32.totalorder %s194, %s195
      %p207 = scmp.eq.s32.totalorder %s38, 1
      %p208 = por %p206, %p207
      %p210 = scmp.ne.s32.totalorder %s195, %s209
      %p211 = scmp.eq.s32.totalorder %s38, 0
      %p212 = por %p210, %p211
      %s214 = sadd.s32 %s213, 1
      %p217 = scmp.eq.s32.totalorder %s32, 1
      %p218 = scmp.ne.s32.totalorder %s213, %s215
      %p219 = scmp.eq.s32.totalorder %s32, 0
      %p220 = por %p218, %p219
      %p221 = scmp.ne.s32.totalorder %s213, %s215
      %p222 = scmp.eq.s32.totalorder %s37, 1
      %p223 = por %p221, %p222
      %p224 = scmp.ne.s32.totalorder %s215, %s216
      %p225 = scmp.eq.s32.totalorder %s37, 0
      %p226 = por %p224, %p225
      %p227 = scmp.ne.s32.totalorder %s215, %s216
      %p228 = scmp.eq.s32.totalorder %s38, 1
      %p229 = por %p227, %p228
      %p231 = scmp.ne.s32.totalorder %s216, %s230
      %p232 = scmp.eq.s32.totalorder %s38, 0
      %p233 = por %p231, %p232
      %s235 = sadd.s32 %s234, 1
      %p238 = scmp.eq.s32.totalorder %s32, 1
      %p239 = scmp.ne.s32.totalorder %s234, %s236
      %p240 = scmp.eq.s32.totalorder %s32, 0
      %p241 = por %p239, %p240
      %p242 = scmp.ne.s32.totalorder %s234, %s236
      %p243 = scmp.eq.s32.totalorder %s37, 1
      %p244 = por %p242, %p243
      %p245 = scmp.ne.s32.totalorder %s236, %s237
      %p246 = scmp.eq.s32.totalorder %s37, 0
      %p247 = por %p245, %p246
      %p248 = scmp.ne.s32.totalorder %s236, %s237
      %p249 = scmp.eq.s32.totalorder %s38, 1
      %p250 = por %p248, %p249
      %p252 = scmp.ne.s32.totalorder %s237, %s251
      %p253 = scmp.eq.s32.totalorder %s38, 0
      %p254 = por %p252, %p253
      %s256 = sadd.s32 %s255, 1
      %p259 = scmp.eq.s32.totalorder %s32, 1
      %p260 = scmp.ne.s32.totalorder %s255, %s257
      %p261 = scmp.eq.s32.totalorder %s32, 0
      %p262 = por %p260, %p261
      %p263 = scmp.ne.s32.totalorder %s255, %s257
      %p264 = scmp.eq.s32.totalorder %s37, 1
      %p265 = por %p263, %p264
      %p266 = scmp.ne.s32.totalorder %s257, %s258
      %p267 = scmp.eq.s32.totalorder %s37, 0
      %p268 = por %p266, %p267
      %p269 = scmp.ne.s32.totalorder %s257, %s258
      %p270 = scmp.eq.s32.totalorder %s38, 1
      %p271 = por %p269, %p270
      %p273 = scmp.ne.s32.totalorder %s258, %s272
      %p274 = scmp.eq.s32.totalorder %s38, 0
      %p275 = por %p273, %p274
      %s277 = sadd.s32 %s276, 1
      %p280 = scmp.eq.s32.totalorder %s32, 1
      %p281 = scmp.ne.s32.totalorder %s276, %s278
      %p282 = scmp.eq.s32.totalorder %s32, 0
      %p283 = por %p281, %p282
      %p284 = scmp.ne.s32.totalorder %s276, %s278
      %p285 = scmp.eq.s32.totalorder %s37, 1
      %p286 = por %p284, %p285
      %p287 = scmp.ne.s32.totalorder %s278, %s279
      %p288 = scmp.eq.s32.totalorder %s37, 0
      %p289 = por %p287, %p288
      %p290 = scmp.ne.s32.totalorder %s278, %s279
      %p291 = scmp.eq.s32.totalorder %s38, 1
      %p292 = por %p290, %p291
      %p294 = scmp.ne.s32.totalorder %s279, %s293
      %p295 = scmp.eq.s32.totalorder %s38, 0
      %p296 = por %p294, %p295
      %s298 = sadd.s32 %s297, 1
      %p301 = scmp.eq.s32.totalorder %s32, 1
      %p302 = scmp.ne.s32.totalorder %s297, %s299
      %p303 = scmp.eq.s32.totalorder %s32, 0
      %p304 = por %p302, %p303
      %p305 = scmp.ne.s32.totalorder %s297, %s299
      %p306 = scmp.eq.s32.totalorder %s37, 1
      %p307 = por %p305, %p306
      %p308 = scmp.ne.s32.totalorder %s299, %s300
      %p309 = scmp.eq.s32.totalorder %s37, 0
      %p310 = por %p308, %p309
      %p311 = scmp.ne.s32.totalorder %s299, %s300
      %p312 = scmp.eq.s32.totalorder %s38, 1
      %p313 = por %p311, %p312
      %p315 = scmp.ne.s32.totalorder %s300, %s314
      %p316 = scmp.eq.s32.totalorder %s38, 0
      %p317 = por %p315, %p316
      %s319 = sadd.s32 %s318, 1
      %p322 = scmp.eq.s32.totalorder %s32, 1
      %p323 = scmp.ne.s32.totalorder %s318, %s320
      %p324 = scmp.eq.s32.totalorder %s32, 0
      %p325 = por %p323, %p324
      %p326 = scmp.ne.s32.totalorder %s318, %s320
      %p327 = scmp.eq.s32.totalorder %s37, 1
      %p328 = por %p326, %p327
      %p329 = scmp.ne.s32.totalorder %s320, %s321
      %p330 = scmp.eq.s32.totalorder %s37, 0
      %p331 = por %p329, %p330
      %p332 = scmp.ne.s32.totalorder %s320, %s321
      %p333 = scmp.eq.s32.totalorder %s38, 1
      %p334 = por %p332, %p333
      %p336 = scmp.ne.s32.totalorder %s321, %s335
      %p337 = scmp.eq.s32.totalorder %s38, 0
      %p338 = por %p336, %p337
      %s340 = sadd.s32 %s339, 1
      %p343 = scmp.eq.s32.totalorder %s32, 1
      %p344 = scmp.ne.s32.totalorder %s339, %s341
      %p345 = scmp.eq.s32.totalorder %s32, 0
      %p346 = por %p344, %p345
      %p347 = scmp.ne.s32.totalorder %s339, %s341
      %p348 = scmp.eq.s32.totalorder %s37, 1
      %p349 = por %p347, %p348
      %p350 = scmp.ne.s32.totalorder %s341, %s342
      %p351 = scmp.eq.s32.totalorder %s37, 0
      %p352 = por %p350, %p351
      %p353 = scmp.ne.s32.totalorder %s341, %s342
      %p354 = scmp.eq.s32.totalorder %s38, 1
      %p355 = por %p353, %p354
      %p357 = scmp.ne.s32.totalorder %s342, %s356
      %p358 = scmp.eq.s32.totalorder %s38, 0
      %p359 = por %p357, %p358
      %s361 = sadd.s32 %s360, 1
      %p364 = scmp.eq.s32.totalorder %s32, 1
      %p365 = scmp.ne.s32.totalorder %s360, %s362
      %p366 = scmp.eq.s32.totalorder %s32, 0
      %p367 = por %p365, %p366
      %p368 = scmp.ne.s32.totalorder %s360, %s362
      %p369 = scmp.eq.s32.totalorder %s37, 1
      %p370 = por %p368, %p369
      %p371 = scmp.ne.s32.totalorder %s362, %s363
      %p372 = scmp.eq.s32.totalorder %s37, 0
      %p373 = por %p371, %p372
      %p374 = scmp.ne.s32.totalorder %s362, %s363
      %p375 = scmp.eq.s32.totalorder %s38, 1
      %p376 = por %p374, %p375
      %p378 = scmp.ne.s32.totalorder %s363, %s377
      %p379 = scmp.eq.s32.totalorder %s38, 0
      %p380 = por %p378, %p379
      %s382 = sadd.s32 %s381, 1
      %p385 = scmp.eq.s32.totalorder %s32, 1
      %p386 = scmp.ne.s32.totalorder %s381, %s383
      %p387 = scmp.eq.s32.totalorder %s32, 0
      %p388 = por %p386, %p387
      %p389 = scmp.ne.s32.totalorder %s381, %s383
      %p390 = scmp.eq.s32.totalorder %s37, 1
      %p391 = por %p389, %p390
      %p392 = scmp.ne.s32.totalorder %s383, %s384
      %p393 = scmp.eq.s32.totalorder %s37, 0
      %p394 = por %p392, %p393
      %p395 = scmp.ne.s32.totalorder %s383, %s384
      %p396 = scmp.eq.s32.totalorder %s38, 1
      %p397 = por %p395, %p396
      %p399 = scmp.ne.s32.totalorder %s384, %s398
      %p400 = scmp.eq.s32.totalorder %s38, 0
      %p401 = por %p399, %p400
      %s403 = sadd.s32 %s402, 1
      %p406 = scmp.eq.s32.totalorder %s32, 1
      %p407 = scmp.ne.s32.totalorder %s402, %s404
      %p408 = scmp.eq.s32.totalorder %s32, 0
      %p409 = por %p407, %p408
      %p410 = scmp.ne.s32.totalorder %s402, %s404
      %p411 = scmp.eq.s32.totalorder %s37, 1
      %p412 = por %p410, %p411
      %p413 = scmp.ne.s32.totalorder %s404, %s405
      %p414 = scmp.eq.s32.totalorder %s37, 0
      %p415 = por %p413, %p414
      %p416 = scmp.ne.s32.totalorder %s404, %s405
      %p417 = scmp.eq.s32.totalorder %s38, 1
      %p418 = por %p416, %p417
      %p420 = scmp.ne.s32.totalorder %s405, %s419
      %p421 = scmp.eq.s32.totalorder %s38, 0
      %p422 = por %p420, %p421
      %s424 = sadd.s32 %s423, 1
      %p427 = scmp.eq.s32.totalorder %s32, 1
      %p428 = scmp.ne.s32.totalorder %s423, %s425
      %p429 = scmp.eq.s32.totalorder %s32, 0
      %p430 = por %p428, %p429
      %p431 = scmp.ne.s32.totalorder %s423, %s425
      %p432 = scmp.eq.s32.totalorder %s37, 1
      %p433 = por %p431, %p432
      %p434 = scmp.ne.s32.totalorder %s425, %s426
      %p435 = scmp.eq.s32.totalorder %s37, 0
      %p436 = por %p434, %p435
      %p437 = scmp.ne.s32.totalorder %s425, %s426
      %p438 = scmp.eq.s32.totalorder %s38, 1
      %p439 = por %p437, %p438
      %p441 = scmp.ne.s32.totalorder %s426, %s440
      %p442 = scmp.eq.s32.totalorder %s38, 0
      %p443 = por %p441, %p442
      %s444 = ssub.s32 %s32, %s39
      %p445 = scmp.eq.s32.totalorder %s444, 0
      %s447 = sadd.s32 %s446, 1
      %s448 = scalar_select %p445, %s446, %s447
      %p451 = pneg %p445
      %p452 = scmp.eq.s32.totalorder %s32, 1
      %p453 = por %p451, %p452
      %p454 = scmp.ne.s32.totalorder %s446, %s449
      %p455 = scmp.eq.s32.totalorder %s32, 0
      %p456 = por %p454, %p455
      %p457 = scmp.ne.s32.totalorder %s446, %s449
      %p458 = scmp.eq.s32.totalorder %s37, 1
      %p459 = por %p457, %p458
      %p460 = scmp.ne.s32.totalorder %s449, %s450
      %p461 = scmp.eq.s32.totalorder %s37, 0
      %p462 = por %p460, %p461
      %p463 = scmp.ne.s32.totalorder %s449, %s450
      %p464 = scmp.eq.s32.totalorder %s38, 1
      %p465 = por %p463, %p464
      %p467 = scmp.ne.s32.totalorder %s450, %s466
      %p468 = scmp.eq.s32.totalorder %s38, 0
      %p469 = por %p467, %p468
      %p470 = scmp.le.s32.totalorder 1, %s32
      %p471 = scmp.lt.s32.totalorder %s32, 3
      %p472 = pnand %p470, %p471
      %p473 = pneg %p472
      // Predicated region
      $region9: #{wdcnnp_forward.1} parent=5 // pred_check
        _
      $region10: #{wdcnnp_forward.1} parent=5 // pred_check_branch
        %475 = sbr.rel (%p472) target = $region12
      $region11: #{wdcnnp_forward.1} parent=5 // pred_region
        %s476 = ssub.s32 %s32, 1
        // Predicated region
        $region13: #{wdcnnp_forward.1} parent=11 // pred_check
          %p477 = pneg %p79
        $region14: #{wdcnnp_forward.1} parent=11 // pred_check_branch
          %479 = sbr.rel (%p477) target = $region16
        $region15: #{wdcnnp_forward.1} parent=11 // pred_region
          %481 = vsyncadd [#allocation3], 0
          %s482 = sshll.u32 %s1, 4
          %s483 = int_to_ptr.hbm [resolvable:$true] %s482
          %s484 = sshll.u32 [#allocation2], 4
          %s485 = int_to_ptr.vmem [resolvable:$true] %s484
          %490 = dma.hbm_to_vmem [thread:$0]  %s483, 1024, %s485, [#allocation3], 128, 128, 8
        $region16: #{wdcnnp_forward.1} parent=11 // pred_fallthru
          _
        // Predicated region
        $region17: #{wdcnnp_forward.1} parent=11 // pred_check
          %p491 = pneg %p100
        $region18: #{wdcnnp_forward.1} parent=11 // pred_check_branch
          %493 = sbr.rel (%p491) target = $region20
        $region19: #{wdcnnp_forward.1} parent=11 // pred_region
          %495 = vsyncadd [#allocation5], 0
          %s497 = sshll.u32 %s2, 4
          %s498 = int_to_ptr.hbm [resolvable:$true] %s497
          %s499 = sshll.u32 [#allocation4], 4
          %s500 = int_to_ptr.vmem [resolvable:$true] %s499
          %502 = dma.hbm_to_vmem [thread:$0]  %s498, 16, %s500, [#allocation5]
        $region20: #{wdcnnp_forward.1} parent=11 // pred_fallthru
          _
        // Predicated region
        $region21: #{wdcnnp_forward.1} parent=11 // pred_check
          %p503 = pneg %p121
        $region22: #{wdcnnp_forward.1} parent=11 // pred_check_branch
          %505 = sbr.rel (%p503) target = $region24
        $region23: #{wdcnnp_forward.1} parent=11 // pred_region
          %507 = vsyncadd [#allocation5], 0
          %s508 = sshll.u32 %s3, 4
          %s509 = int_to_ptr.hbm [resolvable:$true] %s508
          %s510 = sshll.u32 [#allocation6], 4
          %s511 = int_to_ptr.vmem [resolvable:$true] %s510
          %516 = dma.hbm_to_vmem [thread:$0]  %s509, 768, %s511, [#allocation5], 128, 128, 8
        $region24: #{wdcnnp_forward.1} parent=11 // pred_fallthru
          _
        // Predicated region
        $region25: #{wdcnnp_forward.1} parent=11 // pred_check
          %p517 = pneg %p142
        $region26: #{wdcnnp_forward.1} parent=11 // pred_check_branch
          %519 = sbr.rel (%p517) target = $region28
        $region27: #{wdcnnp_forward.1} parent=11 // pred_region
          %521 = vsyncadd [#allocation8], 0
          %s523 = sshll.u32 %s4, 4
          %s524 = int_to_ptr.hbm [resolvable:$true] %s523
          %s525 = sshll.u32 [#allocation7], 4
          %s526 = int_to_ptr.vmem [resolvable:$true] %s525
          %528 = dma.hbm_to_vmem [thread:$0]  %s524, 16, %s526, [#allocation8]
        $region28: #{wdcnnp_forward.1} parent=11 // pred_fallthru
          _
        // Predicated region
        $region29: #{wdcnnp_forward.1} parent=11 // pred_check
          %p529 = pneg %p163
        $region30: #{wdcnnp_forward.1} parent=11 // pred_check_branch
          %531 = sbr.rel (%p529) target = $region32
        $region31: #{wdcnnp_forward.1} parent=11 // pred_region
          %533 = vsyncadd [#allocation8], 0
          %s534 = sshll.u32 %s5, 4
          %s535 = int_to_ptr.hbm [resolvable:$true] %s534
          %s536 = sshll.u32 [#allocation9], 4
          %s537 = int_to_ptr.vmem [resolvable:$true] %s536
          %542 = dma.hbm_to_vmem [thread:$0]  %s535, 1536, %s537, [#allocation8], 128, 128, 8
        $region32: #{wdcnnp_forward.1} parent=11 // pred_fallthru
          _
        // Predicated region
        $region33: #{wdcnnp_forward.1} parent=11 // pred_check
          %p543 = pneg %p184
        $region34: #{wdcnnp_forward.1} parent=11 // pred_check_branch
          %545 = sbr.rel (%p543) target = $region36
        $region35: #{wdcnnp_forward.1} parent=11 // pred_region
          %547 = vsyncadd [#allocation11], 0
          %s549 = sshll.u32 %s6, 4
          %s550 = int_to_ptr.hbm [resolvable:$true] %s549
          %s551 = sshll.u32 [#allocation10], 4
          %s552 = int_to_ptr.vmem [resolvable:$true] %s551
          %554 = dma.hbm_to_vmem [thread:$0]  %s550, 16, %s552, [#allocation11]
        $region36: #{wdcnnp_forward.1} parent=11 // pred_fallthru
          _
        // Predicated region
        $region37: #{wdcnnp_forward.1} parent=11 // pred_check
          %p555 = pneg %p205
        $region38: #{wdcnnp_forward.1} parent=11 // pred_check_branch
          %557 = sbr.rel (%p555) target = $region40
        $region39: #{wdcnnp_forward.1} parent=11 // pred_region
          _
        $region40: #{wdcnnp_forward.1} parent=11 // pred_fallthru
          _
        // Predicated region
        $region41: #{wdcnnp_forward.1} parent=11 // pred_check
          %p558 = pneg %p226
        $region42: #{wdcnnp_forward.1} parent=11 // pred_check_branch
          %560 = sbr.rel (%p558) target = $region44
        $region43: #{wdcnnp_forward.1} parent=11 // pred_region
          %562 = vsyncadd [#allocation11], 0
          %s564 = sshll.u32 %s8, 4
          %s565 = int_to_ptr.hbm [resolvable:$true] %s564
          %s566 = sshll.u32 [#allocation12], 4
          %s567 = int_to_ptr.vmem [resolvable:$true] %s566
          %569 = dma.hbm_to_vmem [thread:$0]  %s565, 16, %s567, [#allocation11]
        $region44: #{wdcnnp_forward.1} parent=11 // pred_fallthru
          _
        // Predicated region
        $region45: #{wdcnnp_forward.1} parent=11 // pred_check
          %p570 = pneg %p247
        $region46: #{wdcnnp_forward.1} parent=11 // pred_check_branch
          %572 = sbr.rel (%p570) target = $region48
        $region47: #{wdcnnp_forward.1} parent=11 // pred_region
          %574 = vsyncadd [#allocation14], 0
          %s575 = sshll.u32 %s9, 4
          %s576 = int_to_ptr.hbm [resolvable:$true] %s575
          %s577 = sshll.u32 [#allocation13], 4
          %s578 = int_to_ptr.vmem [resolvable:$true] %s577
          %583 = dma.hbm_to_vmem [thread:$0]  %s576, 3072, %s578, [#allocation14], 128, 128, 8
        $region48: #{wdcnnp_forward.1} parent=11 // pred_fallthru
          _
        // Predicated region
        $region49: #{wdcnnp_forward.1} parent=11 // pred_check
          %p584 = pneg %p268
        $region50: #{wdcnnp_forward.1} parent=11 // pred_check_branch
          %586 = sbr.rel (%p584) target = $region52
        $region51: #{wdcnnp_forward.1} parent=11 // pred_region
          _
        $region52: #{wdcnnp_forward.1} parent=11 // pred_fallthru
          _
        // Predicated region
        $region53: #{wdcnnp_forward.1} parent=11 // pred_check
          %p587 = pneg %p289
        $region54: #{wdcnnp_forward.1} parent=11 // pred_check_branch
          %589 = sbr.rel (%p587) target = $region56
        $region55: #{wdcnnp_forward.1} parent=11 // pred_region
          %591 = vsyncadd [#allocation14], 0
          %s592 = sshll.u32 %s11, 4
          %s593 = int_to_ptr.hbm [resolvable:$true] %s592
          %s594 = sshll.u32 [#allocation15], 4
          %s595 = int_to_ptr.vmem [resolvable:$true] %s594
          %600 = dma.hbm_to_vmem [thread:$0]  %s593, 3072, %s595, [#allocation14], 128, 128, 8
        $region56: #{wdcnnp_forward.1} parent=11 // pred_fallthru
          _
        // Predicated region
        $region57: #{wdcnnp_forward.1} parent=11 // pred_check
          %p601 = pneg %p310
        $region58: #{wdcnnp_forward.1} parent=11 // pred_check_branch
          %603 = sbr.rel (%p601) target = $region60
        $region59: #{wdcnnp_forward.1} parent=11 // pred_region
          _
        $region60: #{wdcnnp_forward.1} parent=11 // pred_fallthru
          _
        // Predicated region
        $region61: #{wdcnnp_forward.1} parent=11 // pred_check
          %p604 = pneg %p331
        $region62: #{wdcnnp_forward.1} parent=11 // pred_check_branch
          %606 = sbr.rel (%p604) target = $region64
        $region63: #{wdcnnp_forward.1} parent=11 // pred_region
          %608 = vsyncadd [#allocation17], 0
          %s609 = sshll.u32 %s13, 4
          %s610 = int_to_ptr.hbm [resolvable:$true] %s609
          %s611 = sshll.u32 [#allocation16], 4
          %s612 = int_to_ptr.vmem [resolvable:$true] %s611
          %617 = dma.hbm_to_vmem [thread:$0]  %s610, 1024, %s612, [#allocation17], 128, 128, 8
        $region64: #{wdcnnp_forward.1} parent=11 // pred_fallthru
          _
        // Predicated region
        $region65: #{wdcnnp_forward.1} parent=11 // pred_check
          %p618 = pneg %p352
        $region66: #{wdcnnp_forward.1} parent=11 // pred_check_branch
          %620 = sbr.rel (%p618) target = $region68
        $region67: #{wdcnnp_forward.1} parent=11 // pred_region
          _
        $region68: #{wdcnnp_forward.1} parent=11 // pred_fallthru
          _
        // Predicated region
        $region69: #{wdcnnp_forward.1} parent=11 // pred_check
          %p621 = pneg %p373
        $region70: #{wdcnnp_forward.1} parent=11 // pred_check_branch
          %623 = sbr.rel (%p621) target = $region72
        $region71: #{wdcnnp_forward.1} parent=11 // pred_region
          %625 = vsyncadd [#allocation17], 0
          %s626 = sshll.u32 %s15, 4
          %s627 = int_to_ptr.hbm [resolvable:$true] %s626
          %s628 = sshll.u32 [#allocation18], 4
          %s629 = int_to_ptr.vmem [resolvable:$true] %s628
          %634 = dma.hbm_to_vmem [thread:$0]  %s627, 6144, %s629, [#allocation17], 384, 384, 24
        $region72: #{wdcnnp_forward.1} parent=11 // pred_fallthru
          _
        // Predicated region
        $region73: #{wdcnnp_forward.1} parent=11 // pred_check
          %p635 = pneg %p394
        $region74: #{wdcnnp_forward.1} parent=11 // pred_check_branch
          %637 = sbr.rel (%p635) target = $region76
        $region75: #{wdcnnp_forward.1} parent=11 // pred_region
          _
        $region76: #{wdcnnp_forward.1} parent=11 // pred_fallthru
          _
        // Predicated region
        $region77: #{wdcnnp_forward.1} parent=11 // pred_check
          %p638 = pneg %p415
        $region78: #{wdcnnp_forward.1} parent=11 // pred_check_branch
          %640 = sbr.rel (%p638) target = $region80
        $region79: #{wdcnnp_forward.1} parent=11 // pred_region
          %642 = vsyncadd [#allocation20], 0
          %s643 = sshll.u32 %s17, 4
          %s644 = int_to_ptr.hbm [resolvable:$true] %s643
          %s645 = sshll.u32 [#allocation19], 4
          %s646 = int_to_ptr.vmem [resolvable:$true] %s645
          %651 = dma.hbm_to_vmem [thread:$0]  %s644, 6144, %s646, [#allocation20], 128, 128, 8
        $region80: #{wdcnnp_forward.1} parent=11 // pred_fallthru
          _
        // Predicated region
        $region81: #{wdcnnp_forward.1} parent=11 // pred_check
          %p652 = pneg %p436
        $region82: #{wdcnnp_forward.1} parent=11 // pred_check_branch
          %654 = sbr.rel (%p652) target = $region84
        $region83: #{wdcnnp_forward.1} parent=11 // pred_region
          _
        $region84: #{wdcnnp_forward.1} parent=11 // pred_fallthru
          _
      $region12: #{wdcnnp_forward.1} parent=5 // pred_fallthru
        _
      %p655 = scmp.lt.s32.totalorder %s32, 2
      // Predicated region
      $region85: #{wdcnnp_forward.1} parent=5 // pred_check
        %p656 = pneg %p655
      $region86: #{wdcnnp_forward.1} parent=5 // pred_check_branch
        %658 = sbr.rel (%p656) target = $region88
      $region87: #{wdcnnp_forward.1} parent=5 // pred_region
        // Predicated region
        $region89: #{wdcnnp_forward.1} parent=87 // pred_check
          %p659 = pneg %p52
        $region90: #{wdcnnp_forward.1} parent=87 // pred_check_branch
          %661 = sbr.rel (%p659) target = $region92
        $region91: #{wdcnnp_forward.1} parent=87 // pred_region
          %p662 = scmp.lt.s32.totalorder %s32, 1
          %s663 = scalar_select %p662, %s32, 1
          %s664 = smul.addr %s663, 9
          %s665 = smul.addr %s664, 8
          %s666 = scalar_lea.vmem %s0, %s665
        $region92: #{wdcnnp_forward.1} parent=87 // pred_fallthru
          _
      $region88: #{wdcnnp_forward.1} parent=5 // pred_fallthru
        _
      %p667 = scmp.le.s32.totalorder 1, %s32
      %p668 = scmp.lt.s32.totalorder %s32, 3
      %p669 = pnand %p667, %p668
      %p670 = pneg %p669
      // Predicated region
      $region93: #{wdcnnp_forward.1} parent=5 // pred_check
        _
      $region94: #{wdcnnp_forward.1} parent=5 // pred_check_branch
        %672 = sbr.rel (%p669) target = $region96
      $region95: #{wdcnnp_forward.1} parent=5 // pred_region
        %s673 = ssub.s32 %s32, 1
        // Predicated region
        $region97: #{wdcnnp_forward.1} parent=95 // pred_check
          %p674 = pneg %p79
        $region98: #{wdcnnp_forward.1} parent=95 // pred_check_branch
          %676 = sbr.rel (%p674) target = $region100
        $region99: #{wdcnnp_forward.1} parent=95 // pred_region
          %678 = dma.done [#allocation3], 1024
        $region100: #{wdcnnp_forward.1} parent=95 // pred_fallthru
          _
        // Predicated region
        $region101: #{wdcnnp_forward.1} parent=95 // pred_check
          %p679 = pneg %p100
        $region102: #{wdcnnp_forward.1} parent=95 // pred_check_branch
          %681 = sbr.rel (%p679) target = $region104
        $region103: #{wdcnnp_forward.1} parent=95 // pred_region
          %683 = dma.done [#allocation5], 16
        $region104: #{wdcnnp_forward.1} parent=95 // pred_fallthru
          _
        // Predicated region
        $region105: #{wdcnnp_forward.1} parent=95 // pred_check
          %p684 = pneg %p121
        $region106: #{wdcnnp_forward.1} parent=95 // pred_check_branch
          %686 = sbr.rel (%p684) target = $region108
        $region107: #{wdcnnp_forward.1} parent=95 // pred_region
          %688 = dma.done [#allocation5], 768
        $region108: #{wdcnnp_forward.1} parent=95 // pred_fallthru
          _
        // Predicated region
        $region109: #{wdcnnp_forward.1} parent=95 // pred_check
          %p689 = pneg %p142
        $region110: #{wdcnnp_forward.1} parent=95 // pred_check_branch
          %691 = sbr.rel (%p689) target = $region112
        $region111: #{wdcnnp_forward.1} parent=95 // pred_region
          %693 = dma.done [#allocation8], 16
        $region112: #{wdcnnp_forward.1} parent=95 // pred_fallthru
          _
        // Predicated region
        $region113: #{wdcnnp_forward.1} parent=95 // pred_check
          %p694 = pneg %p163
        $region114: #{wdcnnp_forward.1} parent=95 // pred_check_branch
          %696 = sbr.rel (%p694) target = $region116
        $region115: #{wdcnnp_forward.1} parent=95 // pred_region
          %698 = dma.done [#allocation8], 1536
        $region116: #{wdcnnp_forward.1} parent=95 // pred_fallthru
          _
        // Predicated region
        $region117: #{wdcnnp_forward.1} parent=95 // pred_check
          %p699 = pneg %p184
        $region118: #{wdcnnp_forward.1} parent=95 // pred_check_branch
          %701 = sbr.rel (%p699) target = $region120
        $region119: #{wdcnnp_forward.1} parent=95 // pred_region
          %703 = dma.done [#allocation11], 16
        $region120: #{wdcnnp_forward.1} parent=95 // pred_fallthru
          _
        // Predicated region
        $region121: #{wdcnnp_forward.1} parent=95 // pred_check
          %p704 = pneg %p226
        $region122: #{wdcnnp_forward.1} parent=95 // pred_check_branch
          %706 = sbr.rel (%p704) target = $region124
        $region123: #{wdcnnp_forward.1} parent=95 // pred_region
          %708 = dma.done [#allocation11], 16
        $region124: #{wdcnnp_forward.1} parent=95 // pred_fallthru
          _
        // Predicated region
        $region125: #{wdcnnp_forward.1} parent=95 // pred_check
          %p709 = pneg %p247
        $region126: #{wdcnnp_forward.1} parent=95 // pred_check_branch
          %711 = sbr.rel (%p709) target = $region128
        $region127: #{wdcnnp_forward.1} parent=95 // pred_region
          %713 = dma.done [#allocation14], 3072
        $region128: #{wdcnnp_forward.1} parent=95 // pred_fallthru
          _
        // Predicated region
        $region129: #{wdcnnp_forward.1} parent=95 // pred_check
          %p714 = pneg %p289
        $region130: #{wdcnnp_forward.1} parent=95 // pred_check_branch
          %716 = sbr.rel (%p714) target = $region132
        $region131: #{wdcnnp_forward.1} parent=95 // pred_region
          %718 = dma.done [#allocation14], 3072
        $region132: #{wdcnnp_forward.1} parent=95 // pred_fallthru
          _
        // Predicated region
        $region133: #{wdcnnp_forward.1} parent=95 // pred_check
          %p719 = pneg %p331
        $region134: #{wdcnnp_forward.1} parent=95 // pred_check_branch
          %721 = sbr.rel (%p719) target = $region136
        $region135: #{wdcnnp_forward.1} parent=95 // pred_region
          %723 = dma.done [#allocation17], 1024
        $region136: #{wdcnnp_forward.1} parent=95 // pred_fallthru
          _
        // Predicated region
        $region137: #{wdcnnp_forward.1} parent=95 // pred_check
          %p724 = pneg %p373
        $region138: #{wdcnnp_forward.1} parent=95 // pred_check_branch
          %726 = sbr.rel (%p724) target = $region140
        $region139: #{wdcnnp_forward.1} parent=95 // pred_region
          %728 = dma.done [#allocation17], 6144
        $region140: #{wdcnnp_forward.1} parent=95 // pred_fallthru
          _
        // Predicated region
        $region141: #{wdcnnp_forward.1} parent=95 // pred_check
          %p729 = pneg %p415
        $region142: #{wdcnnp_forward.1} parent=95 // pred_check_branch
          %731 = sbr.rel (%p729) target = $region144
        $region143: #{wdcnnp_forward.1} parent=95 // pred_region
          %733 = dma.done [#allocation20], 6144
        $region144: #{wdcnnp_forward.1} parent=95 // pred_fallthru
          _
        %p734 = scmp.lt.s32.totalorder %s37, 1
        %s735 = scalar_select %p734, %s37, 1
        %s736 = smul.addr %s735, 9
        %s737 = smul.addr %s736, 8
        %s738 = scalar_lea.vmem %s0, %s737
        %p739 = pneg %p58
        %p740 = pneg %p55
        %p741 = pneg %p79
        %p742 = pneg %p76
        %p743 = pneg %p100
        %p744 = pneg %p97
        %p745 = pneg %p121
        %p746 = pneg %p118
        %p747 = pneg %p142
        %p748 = pneg %p139
        %p749 = pneg %p163
        %p750 = pneg %p160
        %p751 = pneg %p184
        %p752 = pneg %p181
        %p753 = pneg %p205
        %p754 = pneg %p202
        %p755 = pneg %p226
        %p756 = pneg %p223
        %p757 = pneg %p247
        %p758 = pneg %p244
        %p759 = pneg %p268
        %p760 = pneg %p265
        %p761 = pneg %p289
        %p762 = pneg %p286
        %p763 = pneg %p310
        %p764 = pneg %p307
        %p765 = pneg %p331
        %p766 = pneg %p328
        %p767 = pneg %p352
        %p768 = pneg %p349
        %p769 = pneg %p373
        %p770 = pneg %p370
        %p771 = pneg %p394
        %p772 = pneg %p391
        %p773 = pneg %p415
        %p774 = pneg %p412
        %p775 = pneg %p436
        %p776 = pneg %p433
        %p777 = pneg %p462
        %p778 = pneg %p459
        %p779 = scmp.lt.s32.totalorder %s37, 1
        %s780 = scalar_select %p779, %s37, 1
        %s781 = scalar_lea.vmem %s19, %s780
        %p782 = scmp.lt.s32.totalorder %s37, 1
        %s783 = scalar_select %p782, %s37, 1
        %s784 = smul.addr %s783, 9
        %s785 = smul.addr %s784, 8
        %s786 = scalar_lea.vmem %s0, %s785
        %p787 = scmp.lt.s32.totalorder %s37, 1
        %s788 = scalar_select %p787, %s37, 1
        %s789 = scalar_lea.vmem %s19, %s788
        %v790 = vld [vmem:[%s786] sm:$0xff]
        %v791 = vld [vmem:[%s786 + $0x8] sm:$0xff]
        %v792 = vld [vmem:[%s786 + $0x10] sm:$0xff]
        %v793 = vld [vmem:[%s786 + $0x18] sm:$0xff]
        %v794 = vld [vmem:[%s786 + $0x20] sm:$0xff]
        %v795 = vld [vmem:[%s786 + $0x28] sm:$0xff]
        %v796 = vld [vmem:[%s786 + $0x30] sm:$0xff]
        %v797 = vld [vmem:[%s786 + $0x38] sm:$0xff]
        %v798 = vld [vmem:[%s786 + $0x40] sm:$0xff]
        %v799 = vlaneseq
        %v800 = vshrl.u32 %v799, 7
        %v801 = vadd.s32 %v800, 8
        %v802 = vadd.s32 %v800, 16
        %v803 = vadd.s32 %v800, 24
        %v804 = vadd.s32 %v800, 32
        %v805 = vadd.s32 %v800, 40
        %v806 = vadd.s32 %v800, 48
        %v807 = vadd.s32 %v800, 56
        %v808 = vadd.s32 %v800, 64
        %v809 = vlaneseq
        %v810 = vand.u32 %v809, 127
        %vm811 = vcmp.eq.s32.totalorder %v810, %v800
        %vm812 = vcmp.eq.s32.totalorder %v810, %v801
        %vm813 = vcmp.eq.s32.totalorder %v810, %v802
        %vm814 = vcmp.eq.s32.totalorder %v810, %v803
        %vm815 = vcmp.eq.s32.totalorder %v810, %v804
        %vm816 = vcmp.eq.s32.totalorder %v810, %v805
        %vm817 = vcmp.eq.s32.totalorder %v810, %v806
        %vm818 = vcmp.eq.s32.totalorder %v810, %v807
        %vm819 = vcmp.eq.s32.totalorder %v810, %v808
        %v820 = vsel %vm811, 1, 0
        %v821 = vsel %vm812, 1, 0
        %v822 = vsel %vm813, 1, 0
        %v823 = vsel %vm814, 1, 0
        %v824 = vsel %vm815, 1, 0
        %v825 = vsel %vm816, 1, 0
        %v826 = vsel %vm817, 1, 0
        %v827 = vsel %vm818, 1, 0
        %v828 = vsel %vm819, 1, 0
        %v829 = vcvt.s32.f32 %v820
        %v830 = vcvt.s32.f32 %v821
        %v831 = vcvt.s32.f32 %v822
        %v832 = vcvt.s32.f32 %v823
        %v833 = vcvt.s32.f32 %v824
        %v834 = vcvt.s32.f32 %v825
        %v835 = vcvt.s32.f32 %v826
        %v836 = vcvt.s32.f32 %v827
        %v837 = vcvt.s32.f32 %v828
        %vm838 = vcmask 588800
        %v840 = vsel %vm838, %v829, 0
        %v843 = vsel %vm838, %v830, 0
        %v846 = vsel %vm838, %v831, 0
        %v849 = vsel %vm838, %v832, 0
        %v852 = vsel %vm838, %v833, 0
        %v855 = vsel %vm838, %v834, 0
        %v858 = vsel %vm838, %v835, 0
        %v861 = vsel %vm838, %v836, 0
        %v864 = vsel %vm838, %v837, 0
        %866 = vmatpush.msra.mxu0 0.0
        %867 = vmatpush.msra.mxu0 0.0
        %868 = vmatpush.msra.mxu0 0.0
        %869 = vmatpush.msra.mxu0 0.0
        %870 = vmatpush.msra.mxu0 0.0
        %871 = vmatpush.msra.mxu0 0.0
        %872 = vmatpush.msra.mxu0 0.0
        %873 = vmatpush.msra.mxu0 %v798
        %874 = vmatpush.msra.mxu0 %v797
        %875 = vmatpush.msra.mxu0 %v796
        %876 = vmatpush.msra.mxu0 %v795
        %877 = vmatpush.msra.mxu0 %v794
        %878 = vmatpush.msra.mxu0 %v793
        %879 = vmatpush.msra.mxu0 %v792
        %880 = vmatpush.msra.mxu0 %v791
        %881 = vmatpush.msra.mxu0 %v790
        %882 = vmatmul.f32.gmra.mxu0 %v840
        %v883 = vpop.f32.mrf.mxu0
        %v884 = vadd.f32 0.0, %v883
        %885 = vmatmul.f32.gmra.mxu0 %v843
        %v886 = vpop.f32.mrf.mxu0
        %v887 = vadd.f32 0.0, %v886
        %888 = vmatmul.f32.gmra.mxu0 %v846
        %v889 = vpop.f32.mrf.mxu0
        %v890 = vadd.f32 0.0, %v889
        %891 = vmatmul.f32.gmra.mxu0 %v849
        %v892 = vpop.f32.mrf.mxu0
        %v893 = vadd.f32 0.0, %v892
        %894 = vmatmul.f32.gmra.mxu0 %v852
        %v895 = vpop.f32.mrf.mxu0
        %v896 = vadd.f32 0.0, %v895
        %897 = vmatmul.f32.gmra.mxu0 %v855
        %v898 = vpop.f32.mrf.mxu0
        %v899 = vadd.f32 0.0, %v898
        %900 = vmatmul.f32.gmra.mxu0 %v858
        %v901 = vpop.f32.mrf.mxu0
        %v902 = vadd.f32 0.0, %v901
        %903 = vmatmul.f32.gmra.mxu0 %v861
        %v904 = vpop.f32.mrf.mxu0
        %v905 = vadd.f32 0.0, %v904
        %906 = vmatmul.f32.gmra.mxu0 %v864
        %v907 = vpop.f32.mrf.mxu0
        %v908 = vadd.f32 0.0, %v907
        %909 = vdwg.mxu0
        %v910 = vld [vmem:[#allocation2] sm:$0xff]
        %v911 = vadd.s32 %v800, 1
        %v912 = vadd.s32 %v801, 1
        %v913 = vadd.s32 %v802, 1
        %v914 = vadd.s32 %v803, 1
        %v915 = vadd.s32 %v804, 1
        %v916 = vadd.s32 %v805, 1
        %v917 = vadd.s32 %v806, 1
        %v918 = vadd.s32 %v807, 1
        %v919 = vadd.s32 %v808, 1
        %vm920 = vcmp.eq.s32.totalorder %v810, %v911
        %vm921 = vcmp.eq.s32.totalorder %v810, %v912
        %vm922 = vcmp.eq.s32.totalorder %v810, %v913
        %vm923 = vcmp.eq.s32.totalorder %v810, %v914
        %vm924 = vcmp.eq.s32.totalorder %v810, %v915
        %vm925 = vcmp.eq.s32.totalorder %v810, %v916
        %vm926 = vcmp.eq.s32.totalorder %v810, %v917
        %vm927 = vcmp.eq.s32.totalorder %v810, %v918
        %vm928 = vcmp.eq.s32.totalorder %v810, %v919
        %v929 = vsel %vm920, 1, 0
        %v930 = vsel %vm921, 1, 0
        %v931 = vsel %vm922, 1, 0
        %v932 = vsel %vm923, 1, 0
        %v933 = vsel %vm924, 1, 0
        %v934 = vsel %vm925, 1, 0
        %v935 = vsel %vm926, 1, 0
        %v936 = vsel %vm927, 1, 0
        %v937 = vsel %vm928, 1, 0
        %v938 = vcvt.s32.f32 %v929
        %v939 = vcvt.s32.f32 %v930
        %v940 = vcvt.s32.f32 %v931
        %v941 = vcvt.s32.f32 %v932
        %v942 = vcvt.s32.f32 %v933
        %v943 = vcvt.s32.f32 %v934
        %v944 = vcvt.s32.f32 %v935
        %v945 = vcvt.s32.f32 %v936
        %v946 = vcvt.s32.f32 %v937
        %v948 = vsel %vm838, %v938, 0
        %v951 = vsel %vm838, %v939, 0
        %v954 = vsel %vm838, %v940, 0
        %v957 = vsel %vm838, %v941, 0
        %v960 = vsel %vm838, %v942, 0
        %v963 = vsel %vm838, %v943, 0
        %v966 = vsel %vm838, %v944, 0
        %v969 = vsel %vm838, %v945, 0
        %v972 = vsel %vm838, %v946, 0
        %974 = vmatpush.msra.mxu0 0.0
        %975 = vmatpush.msra.mxu0 0.0
        %976 = vmatpush.msra.mxu0 0.0
        %977 = vmatpush.msra.mxu0 0.0
        %978 = vmatpush.msra.mxu0 0.0
        %979 = vmatpush.msra.mxu0 0.0
        %980 = vmatpush.msra.mxu0 0.0
        %981 = vmatpush.msra.mxu0 %v798
        %982 = vmatpush.msra.mxu0 %v797
        %983 = vmatpush.msra.mxu0 %v796
        %984 = vmatpush.msra.mxu0 %v795
        %985 = vmatpush.msra.mxu0 %v794
        %986 = vmatpush.msra.mxu0 %v793
        %987 = vmatpush.msra.mxu0 %v792
        %988 = vmatpush.msra.mxu0 %v791
        %989 = vmatpush.msra.mxu0 %v790
        %990 = vmatmul.f32.gmra.mxu0 %v948
        %v991 = vpop.f32.mrf.mxu0
        %v992 = vadd.f32 0.0, %v991
        %993 = vmatmul.f32.gmra.mxu0 %v951
        %v994 = vpop.f32.mrf.mxu0
        %v995 = vadd.f32 0.0, %v994
        %996 = vmatmul.f32.gmra.mxu0 %v954
        %v997 = vpop.f32.mrf.mxu0
        %v998 = vadd.f32 0.0, %v997
        %999 = vmatmul.f32.gmra.mxu0 %v957
        %v1000 = vpop.f32.mrf.mxu0
        %v1001 = vadd.f32 0.0, %v1000
        %1002 = vmatmul.f32.gmra.mxu0 %v960
        %v1003 = vpop.f32.mrf.mxu0
        %v1004 = vadd.f32 0.0, %v1003
        %1005 = vmatmul.f32.gmra.mxu0 %v963
        %v1006 = vpop.f32.mrf.mxu0
        %v1007 = vadd.f32 0.0, %v1006
        %1008 = vmatmul.f32.gmra.mxu0 %v966
        %v1009 = vpop.f32.mrf.mxu0
        %v1010 = vadd.f32 0.0, %v1009
        %1011 = vmatmul.f32.gmra.mxu0 %v969
        %v1012 = vpop.f32.mrf.mxu0
        %v1013 = vadd.f32 0.0, %v1012
        %1014 = vmatmul.f32.gmra.mxu0 %v972
        %v1015 = vpop.f32.mrf.mxu0
        %v1016 = vadd.f32 0.0, %v1015
        %1017 = vdwg.mxu0
        %s1018 = scalar_lea.vmem [#allocation2], 8
        %v1019 = vld [vmem:[%s1018] sm:$0xff]
        %vm1020 = vcmask 64512
        %v1022 = vsel %vm1020, %v992, 0
        %v1025 = vsel %vm1020, %v995, 0
        %v1028 = vsel %vm1020, %v998, 0
        %v1031 = vsel %vm1020, %v1001, 0
        %v1034 = vsel %vm1020, %v1004, 0
        %v1037 = vsel %vm1020, %v1007, 0
        %v1040 = vsel %vm1020, %v1010, 0
        %v1043 = vsel %vm1020, %v1013, 0
        %v1046 = vsel %vm1020, %v1016, 0
        %1048 = vmatpush.msra.mxu0 0.0
        %1049 = vmatpush.msra.mxu0 0.0
        %1050 = vmatpush.msra.mxu0 0.0
        %1051 = vmatpush.msra.mxu0 0.0
        %1052 = vmatpush.msra.mxu0 0.0
        %1053 = vmatpush.msra.mxu0 0.0
        %1054 = vmatpush.msra.mxu0 0.0
        %1055 = vmatpush.msra.mxu0 0.0
        %1056 = vmatpush.msra.mxu0 0.0
        %1057 = vmatpush.msra.mxu0 0.0
        %1058 = vmatpush.msra.mxu0 0.0
        %1059 = vmatpush.msra.mxu0 0.0
        %1060 = vmatpush.msra.mxu0 0.0
        %1061 = vmatpush.msra.mxu0 0.0
        %1062 = vmatpush.msra.mxu0 0.0
        %1063 = vmatpush.msra.mxu0 %v1019
        %1064 = vmatmul.f32.gmra.mxu0 %v1022
        %v1065 = vpop.f32.mrf.mxu0
        %v1066 = vadd.f32 0.0, %v1065
        %1067 = vmatmul.f32.gmra.mxu0 %v1025
        %v1068 = vpop.f32.mrf.mxu0
        %v1069 = vadd.f32 0.0, %v1068
        %1070 = vmatmul.f32.gmra.mxu0 %v1028
        %v1071 = vpop.f32.mrf.mxu0
        %v1072 = vadd.f32 0.0, %v1071
        %1073 = vmatmul.f32.gmra.mxu0 %v1031
        %v1074 = vpop.f32.mrf.mxu0
        %v1075 = vadd.f32 0.0, %v1074
        %1076 = vmatmul.f32.gmra.mxu0 %v1034
        %v1077 = vpop.f32.mrf.mxu0
        %v1078 = vadd.f32 0.0, %v1077
        %1079 = vmatmul.f32.gmra.mxu0 %v1037
        %v1080 = vpop.f32.mrf.mxu0
        %v1081 = vadd.f32 0.0, %v1080
        %1082 = vmatmul.f32.gmra.mxu0 %v1040
        %v1083 = vpop.f32.mrf.mxu0
        %v1084 = vadd.f32 0.0, %v1083
        %1085 = vmatmul.f32.gmra.mxu0 %v1043
        %v1086 = vpop.f32.mrf.mxu0
        %v1087 = vadd.f32 0.0, %v1086
        %1088 = vmatmul.f32.gmra.mxu0 %v1046
        %v1089 = vpop.f32.mrf.mxu0
        %v1090 = vadd.f32 0.0, %v1089
        %1091 = vdwg.mxu0
        %v1093 = vsel %vm1020, %v884, 0
        %v1096 = vsel %vm1020, %v887, 0
        %v1099 = vsel %vm1020, %v890, 0
        %v1102 = vsel %vm1020, %v893, 0
        %v1105 = vsel %vm1020, %v896, 0
        %v1108 = vsel %vm1020, %v899, 0
        %v1111 = vsel %vm1020, %v902, 0
        %v1114 = vsel %vm1020, %v905, 0
        %v1117 = vsel %vm1020, %v908, 0
        %1119 = vmatpush.msra.mxu0 0.0
        %1120 = vmatpush.msra.mxu0 0.0
        %1121 = vmatpush.msra.mxu0 0.0
        %1122 = vmatpush.msra.mxu0 0.0
        %1123 = vmatpush.msra.mxu0 0.0
        %1124 = vmatpush.msra.mxu0 0.0
        %1125 = vmatpush.msra.mxu0 0.0
        %1126 = vmatpush.msra.mxu0 0.0
        %1127 = vmatpush.msra.mxu0 0.0
        %1128 = vmatpush.msra.mxu0 0.0
        %1129 = vmatpush.msra.mxu0 0.0
        %1130 = vmatpush.msra.mxu0 0.0
        %1131 = vmatpush.msra.mxu0 0.0
        %1132 = vmatpush.msra.mxu0 0.0
        %1133 = vmatpush.msra.mxu0 0.0
        %1134 = vmatpush.msra.mxu0 %v910
        %1135 = vmatmul.f32.gmra.mxu0 %v1093
        %v1136 = vpop.f32.mrf.mxu0
        %v1137 = vadd.f32 %v1066, %v1136
        %1138 = vmatmul.f32.gmra.mxu0 %v1096
        %v1139 = vpop.f32.mrf.mxu0
        %v1140 = vadd.f32 %v1069, %v1139
        %1141 = vmatmul.f32.gmra.mxu0 %v1099
        %v1142 = vpop.f32.mrf.mxu0
        %v1143 = vadd.f32 %v1072, %v1142
        %1144 = vmatmul.f32.gmra.mxu0 %v1102
        %v1145 = vpop.f32.mrf.mxu0
        %v1146 = vadd.f32 %v1075, %v1145
        %1147 = vmatmul.f32.gmra.mxu0 %v1105
        %v1148 = vpop.f32.mrf.mxu0
        %v1149 = vadd.f32 %v1078, %v1148
        %1150 = vmatmul.f32.gmra.mxu0 %v1108
        %v1151 = vpop.f32.mrf.mxu0
        %v1152 = vadd.f32 %v1081, %v1151
        %1153 = vmatmul.f32.gmra.mxu0 %v1111
        %v1154 = vpop.f32.mrf.mxu0
        %v1155 = vadd.f32 %v1084, %v1154
        %1156 = vmatmul.f32.gmra.mxu0 %v1114
        %v1157 = vpop.f32.mrf.mxu0
        %v1158 = vadd.f32 %v1087, %v1157
        %1159 = vmatmul.f32.gmra.mxu0 %v1117
        %v1160 = vpop.f32.mrf.mxu0
        %v1161 = vadd.f32 %v1090, %v1160
        %1162 = vdwg.mxu0
        %v1163 = vadd.s32 %v800, 2
        %v1164 = vadd.s32 %v801, 2
        %v1165 = vadd.s32 %v802, 2
        %v1166 = vadd.s32 %v803, 2
        %v1167 = vadd.s32 %v804, 2
        %v1168 = vadd.s32 %v805, 2
        %v1169 = vadd.s32 %v806, 2
        %v1170 = vadd.s32 %v807, 2
        %v1171 = vadd.s32 %v808, 2
        %vm1172 = vcmp.eq.s32.totalorder %v810, %v1163
        %vm1173 = vcmp.eq.s32.totalorder %v810, %v1164
        %vm1174 = vcmp.eq.s32.totalorder %v810, %v1165
        %vm1175 = vcmp.eq.s32.totalorder %v810, %v1166
        %vm1176 = vcmp.eq.s32.totalorder %v810, %v1167
        %vm1177 = vcmp.eq.s32.totalorder %v810, %v1168
        %vm1178 = vcmp.eq.s32.totalorder %v810, %v1169
        %vm1179 = vcmp.eq.s32.totalorder %v810, %v1170
        %vm1180 = vcmp.eq.s32.totalorder %v810, %v1171
        %v1181 = vsel %vm1172, 1, 0
        %v1182 = vsel %vm1173, 1, 0
        %v1183 = vsel %vm1174, 1, 0
        %v1184 = vsel %vm1175, 1, 0
        %v1185 = vsel %vm1176, 1, 0
        %v1186 = vsel %vm1177, 1, 0
        %v1187 = vsel %vm1178, 1, 0
        %v1188 = vsel %vm1179, 1, 0
        %v1189 = vsel %vm1180, 1, 0
        %v1190 = vcvt.s32.f32 %v1181
        %v1191 = vcvt.s32.f32 %v1182
        %v1192 = vcvt.s32.f32 %v1183
        %v1193 = vcvt.s32.f32 %v1184
        %v1194 = vcvt.s32.f32 %v1185
        %v1195 = vcvt.s32.f32 %v1186
        %v1196 = vcvt.s32.f32 %v1187
        %v1197 = vcvt.s32.f32 %v1188
        %v1198 = vcvt.s32.f32 %v1189
        %v1200 = vsel %vm838, %v1190, 0
        %v1203 = vsel %vm838, %v1191, 0
        %v1206 = vsel %vm838, %v1192, 0
        %v1209 = vsel %vm838, %v1193, 0
        %v1212 = vsel %vm838, %v1194, 0
        %v1215 = vsel %vm838, %v1195, 0
        %v1218 = vsel %vm838, %v1196, 0
        %v1221 = vsel %vm838, %v1197, 0
        %v1224 = vsel %vm838, %v1198, 0
        %1226 = vmatpush.msra.mxu0 0.0
        %1227 = vmatpush.msra.mxu0 0.0
        %1228 = vmatpush.msra.mxu0 0.0
        %1229 = vmatpush.msra.mxu0 0.0
        %1230 = vmatpush.msra.mxu0 0.0
        %1231 = vmatpush.msra.mxu0 0.0
        %1232 = vmatpush.msra.mxu0 0.0
        %1233 = vmatpush.msra.mxu0 %v798
        %1234 = vmatpush.msra.mxu0 %v797
        %1235 = vmatpush.msra.mxu0 %v796
        %1236 = vmatpush.msra.mxu0 %v795
        %1237 = vmatpush.msra.mxu0 %v794
        %1238 = vmatpush.msra.mxu0 %v793
        %1239 = vmatpush.msra.mxu0 %v792
        %1240 = vmatpush.msra.mxu0 %v791
        %1241 = vmatpush.msra.mxu0 %v790
        %1242 = vmatmul.f32.gmra.mxu0 %v1200
        %v1243 = vpop.f32.mrf.mxu0
        %v1244 = vadd.f32 0.0, %v1243
        %1245 = vmatmul.f32.gmra.mxu0 %v1203
        %v1246 = vpop.f32.mrf.mxu0
        %v1247 = vadd.f32 0.0, %v1246
        %1248 = vmatmul.f32.gmra.mxu0 %v1206
        %v1249 = vpop.f32.mrf.mxu0
        %v1250 = vadd.f32 0.0, %v1249
        %1251 = vmatmul.f32.gmra.mxu0 %v1209
        %v1252 = vpop.f32.mrf.mxu0
        %v1253 = vadd.f32 0.0, %v1252
        %1254 = vmatmul.f32.gmra.mxu0 %v1212
        %v1255 = vpop.f32.mrf.mxu0
        %v1256 = vadd.f32 0.0, %v1255
        %1257 = vmatmul.f32.gmra.mxu0 %v1215
        %v1258 = vpop.f32.mrf.mxu0
        %v1259 = vadd.f32 0.0, %v1258
        %1260 = vmatmul.f32.gmra.mxu0 %v1218
        %v1261 = vpop.f32.mrf.mxu0
        %v1262 = vadd.f32 0.0, %v1261
        %1263 = vmatmul.f32.gmra.mxu0 %v1221
        %v1264 = vpop.f32.mrf.mxu0
        %v1265 = vadd.f32 0.0, %v1264
        %1266 = vmatmul.f32.gmra.mxu0 %v1224
        %v1267 = vpop.f32.mrf.mxu0
        %v1268 = vadd.f32 0.0, %v1267
        %1269 = vdwg.mxu0
        %s1270 = scalar_lea.vmem [#allocation2], 16
        %v1271 = vld [vmem:[%s1270] sm:$0xff]
        %v1273 = vsel %vm1020, %v1244, 0
        %v1276 = vsel %vm1020, %v1247, 0
        %v1279 = vsel %vm1020, %v1250, 0
        %v1282 = vsel %vm1020, %v1253, 0
        %v1285 = vsel %vm1020, %v1256, 0
        %v1288 = vsel %vm1020, %v1259, 0
        %v1291 = vsel %vm1020, %v1262, 0
        %v1294 = vsel %vm1020, %v1265, 0
        %v1297 = vsel %vm1020, %v1268, 0
        %1299 = vmatpush.msra.mxu0 0.0
        %1300 = vmatpush.msra.mxu0 0.0
        %1301 = vmatpush.msra.mxu0 0.0
        %1302 = vmatpush.msra.mxu0 0.0
        %1303 = vmatpush.msra.mxu0 0.0
        %1304 = vmatpush.msra.mxu0 0.0
        %1305 = vmatpush.msra.mxu0 0.0
        %1306 = vmatpush.msra.mxu0 0.0
        %1307 = vmatpush.msra.mxu0 0.0
        %1308 = vmatpush.msra.mxu0 0.0
        %1309 = vmatpush.msra.mxu0 0.0
        %1310 = vmatpush.msra.mxu0 0.0
        %1311 = vmatpush.msra.mxu0 0.0
        %1312 = vmatpush.msra.mxu0 0.0
        %1313 = vmatpush.msra.mxu0 0.0
        %1314 = vmatpush.msra.mxu0 %v1271
        %1315 = vmatmul.f32.gmra.mxu0 %v1273
        %v1316 = vpop.f32.mrf.mxu0
        %v1317 = vadd.f32 0.0, %v1316
        %1318 = vmatmul.f32.gmra.mxu0 %v1276
        %v1319 = vpop.f32.mrf.mxu0
        %v1320 = vadd.f32 0.0, %v1319
        %1321 = vmatmul.f32.gmra.mxu0 %v1279
        %v1322 = vpop.f32.mrf.mxu0
        %v1323 = vadd.f32 0.0, %v1322
        %1324 = vmatmul.f32.gmra.mxu0 %v1282
        %v1325 = vpop.f32.mrf.mxu0
        %v1326 = vadd.f32 0.0, %v1325
        %1327 = vmatmul.f32.gmra.mxu0 %v1285
        %v1328 = vpop.f32.mrf.mxu0
        %v1329 = vadd.f32 0.0, %v1328
        %1330 = vmatmul.f32.gmra.mxu0 %v1288
        %v1331 = vpop.f32.mrf.mxu0
        %v1332 = vadd.f32 0.0, %v1331
        %1333 = vmatmul.f32.gmra.mxu0 %v1291
        %v1334 = vpop.f32.mrf.mxu0
        %v1335 = vadd.f32 0.0, %v1334
        %1336 = vmatmul.f32.gmra.mxu0 %v1294
        %v1337 = vpop.f32.mrf.mxu0
        %v1338 = vadd.f32 0.0, %v1337
        %1339 = vmatmul.f32.gmra.mxu0 %v1297
        %v1340 = vpop.f32.mrf.mxu0
        %v1341 = vadd.f32 0.0, %v1340
        %1342 = vdwg.mxu0
        %v1343 = vadd.f32 %v1137, %v1317
        %v1344 = vadd.f32 %v1140, %v1320
        %v1345 = vadd.f32 %v1143, %v1323
        %v1346 = vadd.f32 %v1146, %v1326
        %v1347 = vadd.f32 %v1149, %v1329
        %v1348 = vadd.f32 %v1152, %v1332
        %v1349 = vadd.f32 %v1155, %v1335
        %v1350 = vadd.f32 %v1158, %v1338
        %v1351 = vadd.f32 %v1161, %v1341
        %v1352 = vadd.s32 %v800, 3
        %v1353 = vadd.s32 %v801, 3
        %v1354 = vadd.s32 %v802, 3
        %v1355 = vadd.s32 %v803, 3
        %v1356 = vadd.s32 %v804, 3
        %v1357 = vadd.s32 %v805, 3
        %v1358 = vadd.s32 %v806, 3
        %v1359 = vadd.s32 %v807, 3
        %v1360 = vadd.s32 %v808, 3
        %vm1361 = vcmp.eq.s32.totalorder %v810, %v1352
        %vm1362 = vcmp.eq.s32.totalorder %v810, %v1353
        %vm1363 = vcmp.eq.s32.totalorder %v810, %v1354
        %vm1364 = vcmp.eq.s32.totalorder %v810, %v1355
        %vm1365 = vcmp.eq.s32.totalorder %v810, %v1356
        %vm1366 = vcmp.eq.s32.totalorder %v810, %v1357
        %vm1367 = vcmp.eq.s32.totalorder %v810, %v1358
        %vm1368 = vcmp.eq.s32.totalorder %v810, %v1359
        %vm1369 = vcmp.eq.s32.totalorder %v810, %v1360
        %v1370 = vsel %vm1361, 1, 0
        %v1371 = vsel %vm1362, 1, 0
        %v1372 = vsel %vm1363, 1, 0
        %v1373 = vsel %vm1364, 1, 0
        %v1374 = vsel %vm1365, 1, 0
        %v1375 = vsel %vm1366, 1, 0
        %v1376 = vsel %vm1367, 1, 0
        %v1377 = vsel %vm1368, 1, 0
        %v1378 = vsel %vm1369, 1, 0
        %v1379 = vcvt.s32.f32 %v1370
        %v1380 = vcvt.s32.f32 %v1371
        %v1381 = vcvt.s32.f32 %v1372
        %v1382 = vcvt.s32.f32 %v1373
        %v1383 = vcvt.s32.f32 %v1374
        %v1384 = vcvt.s32.f32 %v1375
        %v1385 = vcvt.s32.f32 %v1376
        %v1386 = vcvt.s32.f32 %v1377
        %v1387 = vcvt.s32.f32 %v1378
        %v1389 = vsel %vm838, %v1379, 0
        %v1392 = vsel %vm838, %v1380, 0
        %v1395 = vsel %vm838, %v1381, 0
        %v1398 = vsel %vm838, %v1382, 0
        %v1401 = vsel %vm838, %v1383, 0
        %v1404 = vsel %vm838, %v1384, 0
        %v1407 = vsel %vm838, %v1385, 0
        %v1410 = vsel %vm838, %v1386, 0
        %v1413 = vsel %vm838, %v1387, 0
        %1415 = vmatpush.msra.mxu0 0.0
        %1416 = vmatpush.msra.mxu0 0.0
        %1417 = vmatpush.msra.mxu0 0.0
        %1418 = vmatpush.msra.mxu0 0.0
        %1419 = vmatpush.msra.mxu0 0.0
        %1420 = vmatpush.msra.mxu0 0.0
        %1421 = vmatpush.msra.mxu0 0.0
        %1422 = vmatpush.msra.mxu0 %v798
        %1423 = vmatpush.msra.mxu0 %v797
        %1424 = vmatpush.msra.mxu0 %v796
        %1425 = vmatpush.msra.mxu0 %v795
        %1426 = vmatpush.msra.mxu0 %v794
        %1427 = vmatpush.msra.mxu0 %v793
        %1428 = vmatpush.msra.mxu0 %v792
        %1429 = vmatpush.msra.mxu0 %v791
        %1430 = vmatpush.msra.mxu0 %v790
        %1431 = vmatmul.f32.gmra.mxu0 %v1389
        %v1432 = vpop.f32.mrf.mxu0
        %v1433 = vadd.f32 0.0, %v1432
        %1434 = vmatmul.f32.gmra.mxu0 %v1392
        %v1435 = vpop.f32.mrf.mxu0
        %v1436 = vadd.f32 0.0, %v1435
        %1437 = vmatmul.f32.gmra.mxu0 %v1395
        %v1438 = vpop.f32.mrf.mxu0
        %v1439 = vadd.f32 0.0, %v1438
        %1440 = vmatmul.f32.gmra.mxu0 %v1398
        %v1441 = vpop.f32.mrf.mxu0
        %v1442 = vadd.f32 0.0, %v1441
        %1443 = vmatmul.f32.gmra.mxu0 %v1401
        %v1444 = vpop.f32.mrf.mxu0
        %v1445 = vadd.f32 0.0, %v1444
        %1446 = vmatmul.f32.gmra.mxu0 %v1404
        %v1447 = vpop.f32.mrf.mxu0
        %v1448 = vadd.f32 0.0, %v1447
        %1449 = vmatmul.f32.gmra.mxu0 %v1407
        %v1450 = vpop.f32.mrf.mxu0
        %v1451 = vadd.f32 0.0, %v1450
        %1452 = vmatmul.f32.gmra.mxu0 %v1410
        %v1453 = vpop.f32.mrf.mxu0
        %v1454 = vadd.f32 0.0, %v1453
        %1455 = vmatmul.f32.gmra.mxu0 %v1413
        %v1456 = vpop.f32.mrf.mxu0
        %v1457 = vadd.f32 0.0, %v1456
        %1458 = vdwg.mxu0
        %s1459 = scalar_lea.vmem [#allocation2], 24
        %v1460 = vld [vmem:[%s1459] sm:$0xff]
        %v1462 = vsel %vm1020, %v1433, 0
        %v1465 = vsel %vm1020, %v1436, 0
        %v1468 = vsel %vm1020, %v1439, 0
        %v1471 = vsel %vm1020, %v1442, 0
        %v1474 = vsel %vm1020, %v1445, 0
        %v1477 = vsel %vm1020, %v1448, 0
        %v1480 = vsel %vm1020, %v1451, 0
        %v1483 = vsel %vm1020, %v1454, 0
        %v1486 = vsel %vm1020, %v1457, 0
        %1488 = vmatpush.msra.mxu0 0.0
        %1489 = vmatpush.msra.mxu0 0.0
        %1490 = vmatpush.msra.mxu0 0.0
        %1491 = vmatpush.msra.mxu0 0.0
        %1492 = vmatpush.msra.mxu0 0.0
        %1493 = vmatpush.msra.mxu0 0.0
        %1494 = vmatpush.msra.mxu0 0.0
        %1495 = vmatpush.msra.mxu0 0.0
        %1496 = vmatpush.msra.mxu0 0.0
        %1497 = vmatpush.msra.mxu0 0.0
        %1498 = vmatpush.msra.mxu0 0.0
        %1499 = vmatpush.msra.mxu0 0.0
        %1500 = vmatpush.msra.mxu0 0.0
        %1501 = vmatpush.msra.mxu0 0.0
        %1502 = vmatpush.msra.mxu0 0.0
        %1503 = vmatpush.msra.mxu0 %v1460
        %1504 = vmatmul.f32.gmra.mxu0 %v1462
        %v1505 = vpop.f32.mrf.mxu0
        %v1506 = vadd.f32 0.0, %v1505
        %1507 = vmatmul.f32.gmra.mxu0 %v1465
        %v1508 = vpop.f32.mrf.mxu0
        %v1509 = vadd.f32 0.0, %v1508
        %1510 = vmatmul.f32.gmra.mxu0 %v1468
        %v1511 = vpop.f32.mrf.mxu0
        %v1512 = vadd.f32 0.0, %v1511
        %1513 = vmatmul.f32.gmra.mxu0 %v1471
        %v1514 = vpop.f32.mrf.mxu0
        %v1515 = vadd.f32 0.0, %v1514
        %1516 = vmatmul.f32.gmra.mxu0 %v1474
        %v1517 = vpop.f32.mrf.mxu0
        %v1518 = vadd.f32 0.0, %v1517
        %1519 = vmatmul.f32.gmra.mxu0 %v1477
        %v1520 = vpop.f32.mrf.mxu0
        %v1521 = vadd.f32 0.0, %v1520
        %1522 = vmatmul.f32.gmra.mxu0 %v1480
        %v1523 = vpop.f32.mrf.mxu0
        %v1524 = vadd.f32 0.0, %v1523
        %1525 = vmatmul.f32.gmra.mxu0 %v1483
        %v1526 = vpop.f32.mrf.mxu0
        %v1527 = vadd.f32 0.0, %v1526
        %1528 = vmatmul.f32.gmra.mxu0 %v1486
        %v1529 = vpop.f32.mrf.mxu0
        %v1530 = vadd.f32 0.0, %v1529
        %1531 = vdwg.mxu0
        %v1532 = vadd.f32 %v1343, %v1506
        %v1533 = vadd.f32 %v1344, %v1509
        %v1534 = vadd.f32 %v1345, %v1512
        %v1535 = vadd.f32 %v1346, %v1515
        %v1536 = vadd.f32 %v1347, %v1518
        %v1537 = vadd.f32 %v1348, %v1521
        %v1538 = vadd.f32 %v1349, %v1524
        %v1539 = vadd.f32 %v1350, %v1527
        %v1540 = vadd.f32 %v1351, %v1530
        %v1541 = vadd.s32 %v800, 4
        %v1542 = vadd.s32 %v801, 4
        %v1543 = vadd.s32 %v802, 4
        %v1544 = vadd.s32 %v803, 4
        %v1545 = vadd.s32 %v804, 4
        %v1546 = vadd.s32 %v805, 4
        %v1547 = vadd.s32 %v806, 4
        %v1548 = vadd.s32 %v807, 4
        %v1549 = vadd.s32 %v808, 4
        %vm1550 = vcmp.eq.s32.totalorder %v810, %v1541
        %vm1551 = vcmp.eq.s32.totalorder %v810, %v1542
        %vm1552 = vcmp.eq.s32.totalorder %v810, %v1543
        %vm1553 = vcmp.eq.s32.totalorder %v810, %v1544
        %vm1554 = vcmp.eq.s32.totalorder %v810, %v1545
        %vm1555 = vcmp.eq.s32.totalorder %v810, %v1546
        %vm1556 = vcmp.eq.s32.totalorder %v810, %v1547
        %vm1557 = vcmp.eq.s32.totalorder %v810, %v1548
        %vm1558 = vcmp.eq.s32.totalorder %v810, %v1549
        %v1559 = vsel %vm1550, 1, 0
        %v1560 = vsel %vm1551, 1, 0
        %v1561 = vsel %vm1552, 1, 0
        %v1562 = vsel %vm1553, 1, 0
        %v1563 = vsel %vm1554, 1, 0
        %v1564 = vsel %vm1555, 1, 0
        %v1565 = vsel %vm1556, 1, 0
        %v1566 = vsel %vm1557, 1, 0
        %v1567 = vsel %vm1558, 1, 0
        %v1568 = vcvt.s32.f32 %v1559
        %v1569 = vcvt.s32.f32 %v1560
        %v1570 = vcvt.s32.f32 %v1561
        %v1571 = vcvt.s32.f32 %v1562
        %v1572 = vcvt.s32.f32 %v1563
        %v1573 = vcvt.s32.f32 %v1564
        %v1574 = vcvt.s32.f32 %v1565
        %v1575 = vcvt.s32.f32 %v1566
        %v1576 = vcvt.s32.f32 %v1567
        %v1578 = vsel %vm838, %v1568, 0
        %v1581 = vsel %vm838, %v1569, 0
        %v1584 = vsel %vm838, %v1570, 0
        %v1587 = vsel %vm838, %v1571, 0
        %v1590 = vsel %vm838, %v1572, 0
        %v1593 = vsel %vm838, %v1573, 0
        %v1596 = vsel %vm838, %v1574, 0
        %v1599 = vsel %vm838, %v1575, 0
        %v1602 = vsel %vm838, %v1576, 0
        %1604 = vmatpush.msra.mxu0 0.0
        %1605 = vmatpush.msra.mxu0 0.0
        %1606 = vmatpush.msra.mxu0 0.0
        %1607 = vmatpush.msra.mxu0 0.0
        %1608 = vmatpush.msra.mxu0 0.0
        %1609 = vmatpush.msra.mxu0 0.0
        %1610 = vmatpush.msra.mxu0 0.0
        %1611 = vmatpush.msra.mxu0 %v798
        %1612 = vmatpush.msra.mxu0 %v797
        %1613 = vmatpush.msra.mxu0 %v796
        %1614 = vmatpush.msra.mxu0 %v795
        %1615 = vmatpush.msra.mxu0 %v794
        %1616 = vmatpush.msra.mxu0 %v793
        %1617 = vmatpush.msra.mxu0 %v792
        %1618 = vmatpush.msra.mxu0 %v791
        %1619 = vmatpush.msra.mxu0 %v790
        %1620 = vmatmul.f32.gmra.mxu0 %v1578
        %v1621 = vpop.f32.mrf.mxu0
        %v1622 = vadd.f32 0.0, %v1621
        %1623 = vmatmul.f32.gmra.mxu0 %v1581
        %v1624 = vpop.f32.mrf.mxu0
        %v1625 = vadd.f32 0.0, %v1624
        %1626 = vmatmul.f32.gmra.mxu0 %v1584
        %v1627 = vpop.f32.mrf.mxu0
        %v1628 = vadd.f32 0.0, %v1627
        %1629 = vmatmul.f32.gmra.mxu0 %v1587
        %v1630 = vpop.f32.mrf.mxu0
        %v1631 = vadd.f32 0.0, %v1630
        %1632 = vmatmul.f32.gmra.mxu0 %v1590
        %v1633 = vpop.f32.mrf.mxu0
        %v1634 = vadd.f32 0.0, %v1633
        %1635 = vmatmul.f32.gmra.mxu0 %v1593
        %v1636 = vpop.f32.mrf.mxu0
        %v1637 = vadd.f32 0.0, %v1636
        %1638 = vmatmul.f32.gmra.mxu0 %v1596
        %v1639 = vpop.f32.mrf.mxu0
        %v1640 = vadd.f32 0.0, %v1639
        %1641 = vmatmul.f32.gmra.mxu0 %v1599
        %v1642 = vpop.f32.mrf.mxu0
        %v1643 = vadd.f32 0.0, %v1642
        %1644 = vmatmul.f32.gmra.mxu0 %v1602
        %v1645 = vpop.f32.mrf.mxu0
        %v1646 = vadd.f32 0.0, %v1645
        %1647 = vdwg.mxu0
        %s1648 = scalar_lea.vmem [#allocation2], 32
        %v1649 = vld [vmem:[%s1648] sm:$0xff]
        %v1651 = vsel %vm1020, %v1622, 0
        %v1654 = vsel %vm1020, %v1625, 0
        %v1657 = vsel %vm1020, %v1628, 0
        %v1660 = vsel %vm1020, %v1631, 0
        %v1663 = vsel %vm1020, %v1634, 0
        %v1666 = vsel %vm1020, %v1637, 0
        %v1669 = vsel %vm1020, %v1640, 0
        %v1672 = vsel %vm1020, %v1643, 0
        %v1675 = vsel %vm1020, %v1646, 0
        %1677 = vmatpush.msra.mxu0 0.0
        %1678 = vmatpush.msra.mxu0 0.0
        %1679 = vmatpush.msra.mxu0 0.0
        %1680 = vmatpush.msra.mxu0 0.0
        %1681 = vmatpush.msra.mxu0 0.0
        %1682 = vmatpush.msra.mxu0 0.0
        %1683 = vmatpush.msra.mxu0 0.0
        %1684 = vmatpush.msra.mxu0 0.0
        %1685 = vmatpush.msra.mxu0 0.0
        %1686 = vmatpush.msra.mxu0 0.0
        %1687 = vmatpush.msra.mxu0 0.0
        %1688 = vmatpush.msra.mxu0 0.0
        %1689 = vmatpush.msra.mxu0 0.0
        %1690 = vmatpush.msra.mxu0 0.0
        %1691 = vmatpush.msra.mxu0 0.0
        %1692 = vmatpush.msra.mxu0 %v1649
        %1693 = vmatmul.f32.gmra.mxu0 %v1651
        %v1694 = vpop.f32.mrf.mxu0
        %v1695 = vadd.f32 0.0, %v1694
        %1696 = vmatmul.f32.gmra.mxu0 %v1654
        %v1697 = vpop.f32.mrf.mxu0
        %v1698 = vadd.f32 0.0, %v1697
        %1699 = vmatmul.f32.gmra.mxu0 %v1657
        %v1700 = vpop.f32.mrf.mxu0
        %v1701 = vadd.f32 0.0, %v1700
        %1702 = vmatmul.f32.gmra.mxu0 %v1660
        %v1703 = vpop.f32.mrf.mxu0
        %v1704 = vadd.f32 0.0, %v1703
        %1705 = vmatmul.f32.gmra.mxu0 %v1663
        %v1706 = vpop.f32.mrf.mxu0
        %v1707 = vadd.f32 0.0, %v1706
        %1708 = vmatmul.f32.gmra.mxu0 %v1666
        %v1709 = vpop.f32.mrf.mxu0
        %v1710 = vadd.f32 0.0, %v1709
        %1711 = vmatmul.f32.gmra.mxu0 %v1669
        %v1712 = vpop.f32.mrf.mxu0
        %v1713 = vadd.f32 0.0, %v1712
        %1714 = vmatmul.f32.gmra.mxu0 %v1672
        %v1715 = vpop.f32.mrf.mxu0
        %v1716 = vadd.f32 0.0, %v1715
        %1717 = vmatmul.f32.gmra.mxu0 %v1675
        %v1718 = vpop.f32.mrf.mxu0
        %v1719 = vadd.f32 0.0, %v1718
        %1720 = vdwg.mxu0
        %v1721 = vadd.f32 %v1532, %v1695
        %v1722 = vadd.f32 %v1533, %v1698
        %v1723 = vadd.f32 %v1534, %v1701
        %v1724 = vadd.f32 %v1535, %v1704
        %v1725 = vadd.f32 %v1536, %v1707
        %v1726 = vadd.f32 %v1537, %v1710
        %v1727 = vadd.f32 %v1538, %v1713
        %v1728 = vadd.f32 %v1539, %v1716
        %v1729 = vadd.f32 %v1540, %v1719
        %v1730 = vadd.s32 %v800, 5
        %v1731 = vadd.s32 %v801, 5
        %v1732 = vadd.s32 %v802, 5
        %v1733 = vadd.s32 %v803, 5
        %v1734 = vadd.s32 %v804, 5
        %v1735 = vadd.s32 %v805, 5
        %v1736 = vadd.s32 %v806, 5
        %v1737 = vadd.s32 %v807, 5
        %v1738 = vadd.s32 %v808, 5
        %vm1739 = vcmp.eq.s32.totalorder %v810, %v1730
        %vm1740 = vcmp.eq.s32.totalorder %v810, %v1731
        %vm1741 = vcmp.eq.s32.totalorder %v810, %v1732
        %vm1742 = vcmp.eq.s32.totalorder %v810, %v1733
        %vm1743 = vcmp.eq.s32.totalorder %v810, %v1734
        %vm1744 = vcmp.eq.s32.totalorder %v810, %v1735
        %vm1745 = vcmp.eq.s32.totalorder %v810, %v1736
        %vm1746 = vcmp.eq.s32.totalorder %v810, %v1737
        %vm1747 = vcmp.eq.s32.totalorder %v810, %v1738
        %v1748 = vsel %vm1739, 1, 0
        %v1749 = vsel %vm1740, 1, 0
        %v1750 = vsel %vm1741, 1, 0
        %v1751 = vsel %vm1742, 1, 0
        %v1752 = vsel %vm1743, 1, 0
        %v1753 = vsel %vm1744, 1, 0
        %v1754 = vsel %vm1745, 1, 0
        %v1755 = vsel %vm1746, 1, 0
        %v1756 = vsel %vm1747, 1, 0
        %v1757 = vcvt.s32.f32 %v1748
        %v1758 = vcvt.s32.f32 %v1749
        %v1759 = vcvt.s32.f32 %v1750
        %v1760 = vcvt.s32.f32 %v1751
        %v1761 = vcvt.s32.f32 %v1752
        %v1762 = vcvt.s32.f32 %v1753
        %v1763 = vcvt.s32.f32 %v1754
        %v1764 = vcvt.s32.f32 %v1755
        %v1765 = vcvt.s32.f32 %v1756
        %v1767 = vsel %vm838, %v1757, 0
        %v1770 = vsel %vm838, %v1758, 0
        %v1773 = vsel %vm838, %v1759, 0
        %v1776 = vsel %vm838, %v1760, 0
        %v1779 = vsel %vm838, %v1761, 0
        %v1782 = vsel %vm838, %v1762, 0
        %v1785 = vsel %vm838, %v1763, 0
        %v1788 = vsel %vm838, %v1764, 0
        %v1791 = vsel %vm838, %v1765, 0
        %1793 = vmatpush.msra.mxu0 0.0
        %1794 = vmatpush.msra.mxu0 0.0
        %1795 = vmatpush.msra.mxu0 0.0
        %1796 = vmatpush.msra.mxu0 0.0
        %1797 = vmatpush.msra.mxu0 0.0
        %1798 = vmatpush.msra.mxu0 0.0
        %1799 = vmatpush.msra.mxu0 0.0
        %1800 = vmatpush.msra.mxu0 %v798
        %1801 = vmatpush.msra.mxu0 %v797
        %1802 = vmatpush.msra.mxu0 %v796
        %1803 = vmatpush.msra.mxu0 %v795
        %1804 = vmatpush.msra.mxu0 %v794
        %1805 = vmatpush.msra.mxu0 %v793
        %1806 = vmatpush.msra.mxu0 %v792
        %1807 = vmatpush.msra.mxu0 %v791
        %1808 = vmatpush.msra.mxu0 %v790
        %1809 = vmatmul.f32.gmra.mxu0 %v1767
        %v1810 = vpop.f32.mrf.mxu0
        %v1811 = vadd.f32 0.0, %v1810
        %1812 = vmatmul.f32.gmra.mxu0 %v1770
        %v1813 = vpop.f32.mrf.mxu0
        %v1814 = vadd.f32 0.0, %v1813
        %1815 = vmatmul.f32.gmra.mxu0 %v1773
        %v1816 = vpop.f32.mrf.mxu0
        %v1817 = vadd.f32 0.0, %v1816
        %1818 = vmatmul.f32.gmra.mxu0 %v1776
        %v1819 = vpop.f32.mrf.mxu0
        %v1820 = vadd.f32 0.0, %v1819
        %1821 = vmatmul.f32.gmra.mxu0 %v1779
        %v1822 = vpop.f32.mrf.mxu0
        %v1823 = vadd.f32 0.0, %v1822
        %1824 = vmatmul.f32.gmra.mxu0 %v1782
        %v1825 = vpop.f32.mrf.mxu0
        %v1826 = vadd.f32 0.0, %v1825
        %1827 = vmatmul.f32.gmra.mxu0 %v1785
        %v1828 = vpop.f32.mrf.mxu0
        %v1829 = vadd.f32 0.0, %v1828
        %1830 = vmatmul.f32.gmra.mxu0 %v1788
        %v1831 = vpop.f32.mrf.mxu0
        %v1832 = vadd.f32 0.0, %v1831
        %1833 = vmatmul.f32.gmra.mxu0 %v1791
        %v1834 = vpop.f32.mrf.mxu0
        %v1835 = vadd.f32 0.0, %v1834
        %1836 = vdwg.mxu0
        %s1837 = scalar_lea.vmem [#allocation2], 40
        %v1838 = vld [vmem:[%s1837] sm:$0xff]
        %v1840 = vsel %vm1020, %v1811, 0
        %v1843 = vsel %vm1020, %v1814, 0
        %v1846 = vsel %vm1020, %v1817, 0
        %v1849 = vsel %vm1020, %v1820, 0
        %v1852 = vsel %vm1020, %v1823, 0
        %v1855 = vsel %vm1020, %v1826, 0
        %v1858 = vsel %vm1020, %v1829, 0
        %v1861 = vsel %vm1020, %v1832, 0
        %v1864 = vsel %vm1020, %v1835, 0
        %1866 = vmatpush.msra.mxu0 0.0
        %1867 = vmatpush.msra.mxu0 0.0
        %1868 = vmatpush.msra.mxu0 0.0
        %1869 = vmatpush.msra.mxu0 0.0
        %1870 = vmatpush.msra.mxu0 0.0
        %1871 = vmatpush.msra.mxu0 0.0
        %1872 = vmatpush.msra.mxu0 0.0
        %1873 = vmatpush.msra.mxu0 0.0
        %1874 = vmatpush.msra.mxu0 0.0
        %1875 = vmatpush.msra.mxu0 0.0
        %1876 = vmatpush.msra.mxu0 0.0
        %1877 = vmatpush.msra.mxu0 0.0
        %1878 = vmatpush.msra.mxu0 0.0
        %1879 = vmatpush.msra.mxu0 0.0
        %1880 = vmatpush.msra.mxu0 0.0
        %1881 = vmatpush.msra.mxu0 %v1838
        %1882 = vmatmul.f32.gmra.mxu0 %v1840
        %v1883 = vpop.f32.mrf.mxu0
        %v1884 = vadd.f32 0.0, %v1883
        %1885 = vmatmul.f32.gmra.mxu0 %v1843
        %v1886 = vpop.f32.mrf.mxu0
        %v1887 = vadd.f32 0.0, %v1886
        %1888 = vmatmul.f32.gmra.mxu0 %v1846
        %v1889 = vpop.f32.mrf.mxu0
        %v1890 = vadd.f32 0.0, %v1889
        %1891 = vmatmul.f32.gmra.mxu0 %v1849
        %v1892 = vpop.f32.mrf.mxu0
        %v1893 = vadd.f32 0.0, %v1892
        %1894 = vmatmul.f32.gmra.mxu0 %v1852
        %v1895 = vpop.f32.mrf.mxu0
        %v1896 = vadd.f32 0.0, %v1895
        %1897 = vmatmul.f32.gmra.mxu0 %v1855
        %v1898 = vpop.f32.mrf.mxu0
        %v1899 = vadd.f32 0.0, %v1898
        %1900 = vmatmul.f32.gmra.mxu0 %v1858
        %v1901 = vpop.f32.mrf.mxu0
        %v1902 = vadd.f32 0.0, %v1901
        %1903 = vmatmul.f32.gmra.mxu0 %v1861
        %v1904 = vpop.f32.mrf.mxu0
        %v1905 = vadd.f32 0.0, %v1904
        %1906 = vmatmul.f32.gmra.mxu0 %v1864
        %v1907 = vpop.f32.mrf.mxu0
        %v1908 = vadd.f32 0.0, %v1907
        %1909 = vdwg.mxu0
        %v1910 = vadd.f32 %v1721, %v1884
        %v1911 = vadd.f32 %v1722, %v1887
        %v1912 = vadd.f32 %v1723, %v1890
        %v1913 = vadd.f32 %v1724, %v1893
        %v1914 = vadd.f32 %v1725, %v1896
        %v1915 = vadd.f32 %v1726, %v1899
        %v1916 = vadd.f32 %v1727, %v1902
        %v1917 = vadd.f32 %v1728, %v1905
        %v1918 = vadd.f32 %v1729, %v1908
        %v1919 = vadd.s32 %v800, 6
        %v1920 = vadd.s32 %v801, 6
        %v1921 = vadd.s32 %v802, 6
        %v1922 = vadd.s32 %v803, 6
        %v1923 = vadd.s32 %v804, 6
        %v1924 = vadd.s32 %v805, 6
        %v1925 = vadd.s32 %v806, 6
        %v1926 = vadd.s32 %v807, 6
        %v1927 = vadd.s32 %v808, 6
        %vm1928 = vcmp.eq.s32.totalorder %v810, %v1919
        %vm1929 = vcmp.eq.s32.totalorder %v810, %v1920
        %vm1930 = vcmp.eq.s32.totalorder %v810, %v1921
        %vm1931 = vcmp.eq.s32.totalorder %v810, %v1922
        %vm1932 = vcmp.eq.s32.totalorder %v810, %v1923
        %vm1933 = vcmp.eq.s32.totalorder %v810, %v1924
        %vm1934 = vcmp.eq.s32.totalorder %v810, %v1925
        %vm1935 = vcmp.eq.s32.totalorder %v810, %v1926
        %vm1936 = vcmp.eq.s32.totalorder %v810, %v1927
        %v1937 = vsel %vm1928, 1, 0
        %v1938 = vsel %vm1929, 1, 0
        %v1939 = vsel %vm1930, 1, 0
        %v1940 = vsel %vm1931, 1, 0
        %v1941 = vsel %vm1932, 1, 0
        %v1942 = vsel %vm1933, 1, 0
        %v1943 = vsel %vm1934, 1, 0
        %v1944 = vsel %vm1935, 1, 0
        %v1945 = vsel %vm1936, 1, 0
        %v1946 = vcvt.s32.f32 %v1937
        %v1947 = vcvt.s32.f32 %v1938
        %v1948 = vcvt.s32.f32 %v1939
        %v1949 = vcvt.s32.f32 %v1940
        %v1950 = vcvt.s32.f32 %v1941
        %v1951 = vcvt.s32.f32 %v1942
        %v1952 = vcvt.s32.f32 %v1943
        %v1953 = vcvt.s32.f32 %v1944
        %v1954 = vcvt.s32.f32 %v1945
        %v1956 = vsel %vm838, %v1946, 0
        %v1959 = vsel %vm838, %v1947, 0
        %v1962 = vsel %vm838, %v1948, 0
        %v1965 = vsel %vm838, %v1949, 0
        %v1968 = vsel %vm838, %v1950, 0
        %v1971 = vsel %vm838, %v1951, 0
        %v1974 = vsel %vm838, %v1952, 0
        %v1977 = vsel %vm838, %v1953, 0
        %v1980 = vsel %vm838, %v1954, 0
        %1982 = vmatpush.msra.mxu0 0.0
        %1983 = vmatpush.msra.mxu0 0.0
        %1984 = vmatpush.msra.mxu0 0.0
        %1985 = vmatpush.msra.mxu0 0.0
        %1986 = vmatpush.msra.mxu0 0.0
        %1987 = vmatpush.msra.mxu0 0.0
        %1988 = vmatpush.msra.mxu0 0.0
        %1989 = vmatpush.msra.mxu0 %v798
        %1990 = vmatpush.msra.mxu0 %v797
        %1991 = vmatpush.msra.mxu0 %v796
        %1992 = vmatpush.msra.mxu0 %v795
        %1993 = vmatpush.msra.mxu0 %v794
        %1994 = vmatpush.msra.mxu0 %v793
        %1995 = vmatpush.msra.mxu0 %v792
        %1996 = vmatpush.msra.mxu0 %v791
        %1997 = vmatpush.msra.mxu0 %v790
        %1998 = vmatmul.f32.gmra.mxu0 %v1956
        %v1999 = vpop.f32.mrf.mxu0
        %v2000 = vadd.f32 0.0, %v1999
        %2001 = vmatmul.f32.gmra.mxu0 %v1959
        %v2002 = vpop.f32.mrf.mxu0
        %v2003 = vadd.f32 0.0, %v2002
        %2004 = vmatmul.f32.gmra.mxu0 %v1962
        %v2005 = vpop.f32.mrf.mxu0
        %v2006 = vadd.f32 0.0, %v2005
        %2007 = vmatmul.f32.gmra.mxu0 %v1965
        %v2008 = vpop.f32.mrf.mxu0
        %v2009 = vadd.f32 0.0, %v2008
        %2010 = vmatmul.f32.gmra.mxu0 %v1968
        %v2011 = vpop.f32.mrf.mxu0
        %v2012 = vadd.f32 0.0, %v2011
        %2013 = vmatmul.f32.gmra.mxu0 %v1971
        %v2014 = vpop.f32.mrf.mxu0
        %v2015 = vadd.f32 0.0, %v2014
        %2016 = vmatmul.f32.gmra.mxu0 %v1974
        %v2017 = vpop.f32.mrf.mxu0
        %v2018 = vadd.f32 0.0, %v2017
        %2019 = vmatmul.f32.gmra.mxu0 %v1977
        %v2020 = vpop.f32.mrf.mxu0
        %v2021 = vadd.f32 0.0, %v2020
        %2022 = vmatmul.f32.gmra.mxu0 %v1980
        %v2023 = vpop.f32.mrf.mxu0
        %v2024 = vadd.f32 0.0, %v2023
        %2025 = vdwg.mxu0
        %s2026 = scalar_lea.vmem [#allocation2], 48
        %v2027 = vld [vmem:[%s2026] sm:$0xff]
        %v2029 = vsel %vm1020, %v2000, 0
        %v2032 = vsel %vm1020, %v2003, 0
        %v2035 = vsel %vm1020, %v2006, 0
        %v2038 = vsel %vm1020, %v2009, 0
        %v2041 = vsel %vm1020, %v2012, 0
        %v2044 = vsel %vm1020, %v2015, 0
        %v2047 = vsel %vm1020, %v2018, 0
        %v2050 = vsel %vm1020, %v2021, 0
        %v2053 = vsel %vm1020, %v2024, 0
        %2055 = vmatpush.msra.mxu0 0.0
        %2056 = vmatpush.msra.mxu0 0.0
        %2057 = vmatpush.msra.mxu0 0.0
        %2058 = vmatpush.msra.mxu0 0.0
        %2059 = vmatpush.msra.mxu0 0.0
        %2060 = vmatpush.msra.mxu0 0.0
        %2061 = vmatpush.msra.mxu0 0.0
        %2062 = vmatpush.msra.mxu0 0.0
        %2063 = vmatpush.msra.mxu0 0.0
        %2064 = vmatpush.msra.mxu0 0.0
        %2065 = vmatpush.msra.mxu0 0.0
        %2066 = vmatpush.msra.mxu0 0.0
        %2067 = vmatpush.msra.mxu0 0.0
        %2068 = vmatpush.msra.mxu0 0.0
        %2069 = vmatpush.msra.mxu0 0.0
        %2070 = vmatpush.msra.mxu0 %v2027
        %2071 = vmatmul.f32.gmra.mxu0 %v2029
        %v2072 = vpop.f32.mrf.mxu0
        %v2073 = vadd.f32 0.0, %v2072
        %2074 = vmatmul.f32.gmra.mxu0 %v2032
        %v2075 = vpop.f32.mrf.mxu0
        %v2076 = vadd.f32 0.0, %v2075
        %2077 = vmatmul.f32.gmra.mxu0 %v2035
        %v2078 = vpop.f32.mrf.mxu0
        %v2079 = vadd.f32 0.0, %v2078
        %2080 = vmatmul.f32.gmra.mxu0 %v2038
        %v2081 = vpop.f32.mrf.mxu0
        %v2082 = vadd.f32 0.0, %v2081
        %2083 = vmatmul.f32.gmra.mxu0 %v2041
        %v2084 = vpop.f32.mrf.mxu0
        %v2085 = vadd.f32 0.0, %v2084
        %2086 = vmatmul.f32.gmra.mxu0 %v2044
        %v2087 = vpop.f32.mrf.mxu0
        %v2088 = vadd.f32 0.0, %v2087
        %2089 = vmatmul.f32.gmra.mxu0 %v2047
        %v2090 = vpop.f32.mrf.mxu0
        %v2091 = vadd.f32 0.0, %v2090
        %2092 = vmatmul.f32.gmra.mxu0 %v2050
        %v2093 = vpop.f32.mrf.mxu0
        %v2094 = vadd.f32 0.0, %v2093
        %2095 = vmatmul.f32.gmra.mxu0 %v2053
        %v2096 = vpop.f32.mrf.mxu0
        %v2097 = vadd.f32 0.0, %v2096
        %2098 = vdwg.mxu0
        %v2099 = vadd.f32 %v1910, %v2073
        %v2100 = vadd.f32 %v1911, %v2076
        %v2101 = vadd.f32 %v1912, %v2079
        %v2102 = vadd.f32 %v1913, %v2082
        %v2103 = vadd.f32 %v1914, %v2085
        %v2104 = vadd.f32 %v1915, %v2088
        %v2105 = vadd.f32 %v1916, %v2091
        %v2106 = vadd.f32 %v1917, %v2094
        %v2107 = vadd.f32 %v1918, %v2097
        %v2108 = vadd.s32 %v800, 7
        %v2109 = vadd.s32 %v801, 7
        %v2110 = vadd.s32 %v802, 7
        %v2111 = vadd.s32 %v803, 7
        %v2112 = vadd.s32 %v804, 7
        %v2113 = vadd.s32 %v805, 7
        %v2114 = vadd.s32 %v806, 7
        %v2115 = vadd.s32 %v807, 7
        %v2116 = vadd.s32 %v808, 7
        %vm2117 = vcmp.eq.s32.totalorder %v810, %v2108
        %vm2118 = vcmp.eq.s32.totalorder %v810, %v2109
        %vm2119 = vcmp.eq.s32.totalorder %v810, %v2110
        %vm2120 = vcmp.eq.s32.totalorder %v810, %v2111
        %vm2121 = vcmp.eq.s32.totalorder %v810, %v2112
        %vm2122 = vcmp.eq.s32.totalorder %v810, %v2113
        %vm2123 = vcmp.eq.s32.totalorder %v810, %v2114
        %vm2124 = vcmp.eq.s32.totalorder %v810, %v2115
        %vm2125 = vcmp.eq.s32.totalorder %v810, %v2116
        %v2126 = vsel %vm2117, 1, 0
        %v2127 = vsel %vm2118, 1, 0
        %v2128 = vsel %vm2119, 1, 0
        %v2129 = vsel %vm2120, 1, 0
        %v2130 = vsel %vm2121, 1, 0
        %v2131 = vsel %vm2122, 1, 0
        %v2132 = vsel %vm2123, 1, 0
        %v2133 = vsel %vm2124, 1, 0
        %v2134 = vsel %vm2125, 1, 0
        %v2135 = vcvt.s32.f32 %v2126
        %v2136 = vcvt.s32.f32 %v2127
        %v2137 = vcvt.s32.f32 %v2128
        %v2138 = vcvt.s32.f32 %v2129
        %v2139 = vcvt.s32.f32 %v2130
        %v2140 = vcvt.s32.f32 %v2131
        %v2141 = vcvt.s32.f32 %v2132
        %v2142 = vcvt.s32.f32 %v2133
        %v2143 = vcvt.s32.f32 %v2134
        %v2145 = vsel %vm838, %v2135, 0
        %v2148 = vsel %vm838, %v2136, 0
        %v2151 = vsel %vm838, %v2137, 0
        %v2154 = vsel %vm838, %v2138, 0
        %v2157 = vsel %vm838, %v2139, 0
        %v2160 = vsel %vm838, %v2140, 0
        %v2163 = vsel %vm838, %v2141, 0
        %v2166 = vsel %vm838, %v2142, 0
        %v2169 = vsel %vm838, %v2143, 0
        %2171 = vmatpush.msra.mxu0 0.0
        %2172 = vmatpush.msra.mxu0 0.0
        %2173 = vmatpush.msra.mxu0 0.0
        %2174 = vmatpush.msra.mxu0 0.0
        %2175 = vmatpush.msra.mxu0 0.0
        %2176 = vmatpush.msra.mxu0 0.0
        %2177 = vmatpush.msra.mxu0 0.0
        %2178 = vmatpush.msra.mxu0 %v798
        %2179 = vmatpush.msra.mxu0 %v797
        %2180 = vmatpush.msra.mxu0 %v796
        %2181 = vmatpush.msra.mxu0 %v795
        %2182 = vmatpush.msra.mxu0 %v794
        %2183 = vmatpush.msra.mxu0 %v793
        %2184 = vmatpush.msra.mxu0 %v792
        %2185 = vmatpush.msra.mxu0 %v791
        %2186 = vmatpush.msra.mxu0 %v790
        %2187 = vmatmul.f32.gmra.mxu0 %v2145
        %v2188 = vpop.f32.mrf.mxu0
        %v2189 = vadd.f32 0.0, %v2188
        %2190 = vmatmul.f32.gmra.mxu0 %v2148
        %v2191 = vpop.f32.mrf.mxu0
        %v2192 = vadd.f32 0.0, %v2191
        %2193 = vmatmul.f32.gmra.mxu0 %v2151
        %v2194 = vpop.f32.mrf.mxu0
        %v2195 = vadd.f32 0.0, %v2194
        %2196 = vmatmul.f32.gmra.mxu0 %v2154
        %v2197 = vpop.f32.mrf.mxu0
        %v2198 = vadd.f32 0.0, %v2197
        %2199 = vmatmul.f32.gmra.mxu0 %v2157
        %v2200 = vpop.f32.mrf.mxu0
        %v2201 = vadd.f32 0.0, %v2200
        %2202 = vmatmul.f32.gmra.mxu0 %v2160
        %v2203 = vpop.f32.mrf.mxu0
        %v2204 = vadd.f32 0.0, %v2203
        %2205 = vmatmul.f32.gmra.mxu0 %v2163
        %v2206 = vpop.f32.mrf.mxu0
        %v2207 = vadd.f32 0.0, %v2206
        %2208 = vmatmul.f32.gmra.mxu0 %v2166
        %v2209 = vpop.f32.mrf.mxu0
        %v2210 = vadd.f32 0.0, %v2209
        %2211 = vmatmul.f32.gmra.mxu0 %v2169
        %v2212 = vpop.f32.mrf.mxu0
        %v2213 = vadd.f32 0.0, %v2212
        %2214 = vdwg.mxu0
        %s2215 = scalar_lea.vmem [#allocation2], 56
        %v2216 = vld [vmem:[%s2215] sm:$0xff]
        %v2218 = vsel %vm1020, %v2189, 0
        %v2221 = vsel %vm1020, %v2192, 0
        %v2224 = vsel %vm1020, %v2195, 0
        %v2227 = vsel %vm1020, %v2198, 0
        %v2230 = vsel %vm1020, %v2201, 0
        %v2233 = vsel %vm1020, %v2204, 0
        %v2236 = vsel %vm1020, %v2207, 0
        %v2239 = vsel %vm1020, %v2210, 0
        %v2242 = vsel %vm1020, %v2213, 0
        %2244 = vmatpush.msra.mxu0 0.0
        %2245 = vmatpush.msra.mxu0 0.0
        %2246 = vmatpush.msra.mxu0 0.0
        %2247 = vmatpush.msra.mxu0 0.0
        %2248 = vmatpush.msra.mxu0 0.0
        %2249 = vmatpush.msra.mxu0 0.0
        %2250 = vmatpush.msra.mxu0 0.0
        %2251 = vmatpush.msra.mxu0 0.0
        %2252 = vmatpush.msra.mxu0 0.0
        %2253 = vmatpush.msra.mxu0 0.0
        %2254 = vmatpush.msra.mxu0 0.0
        %2255 = vmatpush.msra.mxu0 0.0
        %2256 = vmatpush.msra.mxu0 0.0
        %2257 = vmatpush.msra.mxu0 0.0
        %2258 = vmatpush.msra.mxu0 0.0
        %2259 = vmatpush.msra.mxu0 %v2216
        %2260 = vmatmul.f32.gmra.mxu0 %v2218
        %v2261 = vpop.f32.mrf.mxu0
        %v2262 = vadd.f32 0.0, %v2261
        %2263 = vmatmul.f32.gmra.mxu0 %v2221
        %v2264 = vpop.f32.mrf.mxu0
        %v2265 = vadd.f32 0.0, %v2264
        %2266 = vmatmul.f32.gmra.mxu0 %v2224
        %v2267 = vpop.f32.mrf.mxu0
        %v2268 = vadd.f32 0.0, %v2267
        %2269 = vmatmul.f32.gmra.mxu0 %v2227
        %v2270 = vpop.f32.mrf.mxu0
        %v2271 = vadd.f32 0.0, %v2270
        %2272 = vmatmul.f32.gmra.mxu0 %v2230
        %v2273 = vpop.f32.mrf.mxu0
        %v2274 = vadd.f32 0.0, %v2273
        %2275 = vmatmul.f32.gmra.mxu0 %v2233
        %v2276 = vpop.f32.mrf.mxu0
        %v2277 = vadd.f32 0.0, %v2276
        %2278 = vmatmul.f32.gmra.mxu0 %v2236
        %v2279 = vpop.f32.mrf.mxu0
        %v2280 = vadd.f32 0.0, %v2279
        %2281 = vmatmul.f32.gmra.mxu0 %v2239
        %v2282 = vpop.f32.mrf.mxu0
        %v2283 = vadd.f32 0.0, %v2282
        %2284 = vmatmul.f32.gmra.mxu0 %v2242
        %v2285 = vpop.f32.mrf.mxu0
        %v2286 = vadd.f32 0.0, %v2285
        %2287 = vdwg.mxu0
        %v2288 = vadd.f32 %v2099, %v2262
        %v2289 = vadd.f32 %v2100, %v2265
        %v2290 = vadd.f32 %v2101, %v2268
        %v2291 = vadd.f32 %v2102, %v2271
        %v2292 = vadd.f32 %v2103, %v2274
        %v2293 = vadd.f32 %v2104, %v2277
        %v2294 = vadd.f32 %v2105, %v2280
        %v2295 = vadd.f32 %v2106, %v2283
        %v2296 = vadd.f32 %v2107, %v2286
        %v2297 = vld [vmem:[#allocation4] sm:$0x1]
        %v2299 = vperm.slane %v2297, 0
        %v2301 = vadd.f32 %v2288, %v2299
        %v2302 = vadd.f32 %v2289, %v2299
        %v2303 = vadd.f32 %v2290, %v2299
        %v2304 = vadd.f32 %v2291, %v2299
        %v2305 = vadd.f32 %v2292, %v2299
        %v2306 = vadd.f32 %v2293, %v2299
        %v2307 = vadd.f32 %v2294, %v2299
        %v2308 = vadd.f32 %v2295, %v2299
        %v2309 = vadd.f32 %v2296, %v2299
        %v2310 = vmul.u32 %v800, 2
        %v2311 = vmul.u32 %v801, 2
        %v2312 = vmul.u32 %v802, 2
        %v2313 = vmul.u32 %v803, 2
        %vm2314 = vcmp.eq.s32.totalorder %v810, %v2310
        %vm2315 = vcmp.eq.s32.totalorder %v810, %v2311
        %vm2316 = vcmp.eq.s32.totalorder %v810, %v2312
        %vm2317 = vcmp.eq.s32.totalorder %v810, %v2313
        %v2318 = vsel %vm2314, 1, 0
        %v2319 = vsel %vm2315, 1, 0
        %v2320 = vsel %vm2316, 1, 0
        %v2321 = vsel %vm2317, 1, 0
        %v2322 = vcvt.s32.f32 %v2318
        %v2323 = vcvt.s32.f32 %v2319
        %v2324 = vcvt.s32.f32 %v2320
        %v2325 = vcvt.s32.f32 %v2321
        %vm2326 = vcmask 531456
        %v2328 = vsel %vm2326, %v2322, 0
        %v2331 = vsel %vm2326, %v2323, 0
        %v2334 = vsel %vm2326, %v2324, 0
        %v2337 = vsel %vm2326, %v2325, 0
        %vm2339 = vcmask 1040384
        %v2341 = vsel %vm2339, %v2309, 0
        %2343 = vmatpush.msra.mxu0 0.0
        %2344 = vmatpush.msra.mxu0 0.0
        %2345 = vmatpush.msra.mxu0 0.0
        %2346 = vmatpush.msra.mxu0 0.0
        %2347 = vmatpush.msra.mxu0 0.0
        %2348 = vmatpush.msra.mxu0 0.0
        %2349 = vmatpush.msra.mxu0 0.0
        %2350 = vmatpush.msra.mxu0 %v2341
        %2351 = vmatpush.msra.mxu0 %v2308
        %2352 = vmatpush.msra.mxu0 %v2307
        %2353 = vmatpush.msra.mxu0 %v2306
        %2354 = vmatpush.msra.mxu0 %v2305
        %2355 = vmatpush.msra.mxu0 %v2304
        %2356 = vmatpush.msra.mxu0 %v2303
        %2357 = vmatpush.msra.mxu0 %v2302
        %2358 = vmatpush.msra.mxu0 %v2301
        %2359 = vmatmul.f32.gmra.mxu0 %v2328
        %v2360 = vpop.f32.mrf.mxu0
        %v2361 = vadd.f32 0.0, %v2360
        %2362 = vmatmul.f32.gmra.mxu0 %v2331
        %v2363 = vpop.f32.mrf.mxu0
        %v2364 = vadd.f32 0.0, %v2363
        %2365 = vmatmul.f32.gmra.mxu0 %v2334
        %v2366 = vpop.f32.mrf.mxu0
        %v2367 = vadd.f32 0.0, %v2366
        %2368 = vmatmul.f32.gmra.mxu0 %v2337
        %v2369 = vpop.f32.mrf.mxu0
        %v2370 = vadd.f32 0.0, %v2369
        %2371 = vdwg.mxu0
        %v2372 = vadd.s32 %v2310, 1
        %v2373 = vadd.s32 %v2311, 1
        %v2374 = vadd.s32 %v2312, 1
        %v2375 = vadd.s32 %v2313, 1
        %vm2376 = vcmp.eq.s32.totalorder %v810, %v2372
        %vm2377 = vcmp.eq.s32.totalorder %v810, %v2373
        %vm2378 = vcmp.eq.s32.totalorder %v810, %v2374
        %vm2379 = vcmp.eq.s32.totalorder %v810, %v2375
        %v2380 = vsel %vm2376, 1, 0
        %v2381 = vsel %vm2377, 1, 0
        %v2382 = vsel %vm2378, 1, 0
        %v2383 = vsel %vm2379, 1, 0
        %v2384 = vcvt.s32.f32 %v2380
        %v2385 = vcvt.s32.f32 %v2381
        %v2386 = vcvt.s32.f32 %v2382
        %v2387 = vcvt.s32.f32 %v2383
        %v2389 = vsel %vm2326, %v2384, 0
        %v2392 = vsel %vm2326, %v2385, 0
        %v2395 = vsel %vm2326, %v2386, 0
        %v2398 = vsel %vm2326, %v2387, 0
        %2400 = vmatpush.msra.mxu0 0.0
        %2401 = vmatpush.msra.mxu0 0.0
        %2402 = vmatpush.msra.mxu0 0.0
        %2403 = vmatpush.msra.mxu0 0.0
        %2404 = vmatpush.msra.mxu0 0.0
        %2405 = vmatpush.msra.mxu0 0.0
        %2406 = vmatpush.msra.mxu0 0.0
        %2407 = vmatpush.msra.mxu0 %v2341
        %2408 = vmatpush.msra.mxu0 %v2308
        %2409 = vmatpush.msra.mxu0 %v2307
        %2410 = vmatpush.msra.mxu0 %v2306
        %2411 = vmatpush.msra.mxu0 %v2305
        %2412 = vmatpush.msra.mxu0 %v2304
        %2413 = vmatpush.msra.mxu0 %v2303
        %2414 = vmatpush.msra.mxu0 %v2302
        %2415 = vmatpush.msra.mxu0 %v2301
        %2416 = vmatmul.f32.gmra.mxu0 %v2389
        %v2417 = vpop.f32.mrf.mxu0
        %v2418 = vadd.f32 0.0, %v2417
        %2419 = vmatmul.f32.gmra.mxu0 %v2392
        %v2420 = vpop.f32.mrf.mxu0
        %v2421 = vadd.f32 0.0, %v2420
        %2422 = vmatmul.f32.gmra.mxu0 %v2395
        %v2423 = vpop.f32.mrf.mxu0
        %v2424 = vadd.f32 0.0, %v2423
        %2425 = vmatmul.f32.gmra.mxu0 %v2398
        %v2426 = vpop.f32.mrf.mxu0
        %v2427 = vadd.f32 0.0, %v2426
        %2428 = vdwg.mxu0
        %v2429 = vmax.f32 %v2361, %v2418
        %v2430 = vmax.f32 %v2364, %v2421
        %v2431 = vmax.f32 %v2367, %v2424
        %v2432 = vmax.f32 %v2370, %v2427
        %v2433 = vmax.f32 %v2429, 0.0
        %v2434 = vmax.f32 %v2430, 0.0
        %v2435 = vmax.f32 %v2431, 0.0
        %v2436 = vmax.f32 %v2432, 0.0
        %v2437 = vadd.s32 %v800, 4294967295
        %v2438 = vadd.s32 %v801, 4294967295
        %v2439 = vadd.s32 %v802, 4294967295
        %v2440 = vadd.s32 %v803, 4294967295
        %vm2441 = vcmp.eq.s32.totalorder %v810, %v2437
        %vm2442 = vcmp.eq.s32.totalorder %v810, %v2438
        %vm2443 = vcmp.eq.s32.totalorder %v810, %v2439
        %vm2444 = vcmp.eq.s32.totalorder %v810, %v2440
        %v2445 = vsel %vm2441, 1, 0
        %v2446 = vsel %vm2442, 1, 0
        %v2447 = vsel %vm2443, 1, 0
        %v2448 = vsel %vm2444, 1, 0
        %v2449 = vcvt.s32.f32 %v2445
        %v2450 = vcvt.s32.f32 %v2446
        %v2451 = vcvt.s32.f32 %v2447
        %v2452 = vcvt.s32.f32 %v2448
        %vm2453 = vcmask 261120
        %v2455 = vsel %vm2453, %v2449, 0
        %v2458 = vsel %vm2453, %v2450, 0
        %v2461 = vsel %vm2453, %v2451, 0
        %v2464 = vsel %vm2453, %v2452, 0
        %2466 = vmatpush.msra.mxu0 0.0
        %2467 = vmatpush.msra.mxu0 0.0
        %2468 = vmatpush.msra.mxu0 0.0
        %2469 = vmatpush.msra.mxu0 0.0
        %2470 = vmatpush.msra.mxu0 0.0
        %2471 = vmatpush.msra.mxu0 0.0
        %2472 = vmatpush.msra.mxu0 0.0
        %2473 = vmatpush.msra.mxu0 0.0
        %2474 = vmatpush.msra.mxu0 0.0
        %2475 = vmatpush.msra.mxu0 0.0
        %2476 = vmatpush.msra.mxu0 0.0
        %2477 = vmatpush.msra.mxu0 0.0
        %2478 = vmatpush.msra.mxu0 %v2436
        %2479 = vmatpush.msra.mxu0 %v2435
        %2480 = vmatpush.msra.mxu0 %v2434
        %2481 = vmatpush.msra.mxu0 %v2433
        %2482 = vmatmul.f32.gmra.mxu0 %v2455
        %v2483 = vpop.f32.mrf.mxu0
        %v2484 = vadd.f32 0.0, %v2483
        %2485 = vmatmul.f32.gmra.mxu0 %v2458
        %v2486 = vpop.f32.mrf.mxu0
        %v2487 = vadd.f32 0.0, %v2486
        %2488 = vmatmul.f32.gmra.mxu0 %v2461
        %v2489 = vpop.f32.mrf.mxu0
        %v2490 = vadd.f32 0.0, %v2489
        %2491 = vmatmul.f32.gmra.mxu0 %v2464
        %v2492 = vpop.f32.mrf.mxu0
        %v2493 = vadd.f32 0.0, %v2492
        %2494 = vdwg.mxu0
        %v2495 = vsel %vm2453, %v938, 0
        %v2497 = vsel %vm2453, %v939, 0
        %v2499 = vsel %vm2453, %v940, 0
        %v2501 = vsel %vm2453, %v941, 0
        %2503 = vmatpush.msra.mxu0 0.0
        %2504 = vmatpush.msra.mxu0 0.0
        %2505 = vmatpush.msra.mxu0 0.0
        %2506 = vmatpush.msra.mxu0 0.0
        %2507 = vmatpush.msra.mxu0 0.0
        %2508 = vmatpush.msra.mxu0 0.0
        %2509 = vmatpush.msra.mxu0 0.0
        %2510 = vmatpush.msra.mxu0 0.0
        %2511 = vmatpush.msra.mxu0 0.0
        %2512 = vmatpush.msra.mxu0 0.0
        %2513 = vmatpush.msra.mxu0 0.0
        %2514 = vmatpush.msra.mxu0 0.0
        %2515 = vmatpush.msra.mxu0 %v2436
        %2516 = vmatpush.msra.mxu0 %v2435
        %2517 = vmatpush.msra.mxu0 %v2434
        %2518 = vmatpush.msra.mxu0 %v2433
        %2519 = vmatmul.f32.gmra.mxu0 %v2495
        %v2520 = vpop.f32.mrf.mxu0
        %v2521 = vadd.f32 0.0, %v2520
        %2522 = vmatmul.f32.gmra.mxu0 %v2497
        %v2523 = vpop.f32.mrf.mxu0
        %v2524 = vadd.f32 0.0, %v2523
        %2525 = vmatmul.f32.gmra.mxu0 %v2499
        %v2526 = vpop.f32.mrf.mxu0
        %v2527 = vadd.f32 0.0, %v2526
        %2528 = vmatmul.f32.gmra.mxu0 %v2501
        %v2529 = vpop.f32.mrf.mxu0
        %v2530 = vadd.f32 0.0, %v2529
        %2531 = vdwg.mxu0
        %v2532 = vld [vmem:[#allocation6] sm:$0xff]
        %v2533 = vld [vmem:[#allocation6 + $0x8] sm:$0xff]
        %s2534 = scalar_lea.vmem [#allocation6], 16
        %v2535 = vld [vmem:[%s2534] sm:$0xff]
        %v2536 = vld [vmem:[%s2534 + $0x8] sm:$0xff]
        %vm2537 = vcmask 130048
        %v2539 = vsel %vm2537, %v2433, 0
        %v2542 = vsel %vm2537, %v2434, 0
        %v2545 = vsel %vm2537, %v2435, 0
        %v2548 = vsel %vm2537, %v2436, 0
        %2550 = vmatpush.msra.mxu0 0.0
        %2551 = vmatpush.msra.mxu0 0.0
        %2552 = vmatpush.msra.mxu0 0.0
        %2553 = vmatpush.msra.mxu0 0.0
        %2554 = vmatpush.msra.mxu0 0.0
        %2555 = vmatpush.msra.mxu0 0.0
        %2556 = vmatpush.msra.mxu0 0.0
        %2557 = vmatpush.msra.mxu0 0.0
        %2558 = vmatpush.msra.mxu0 0.0
        %2559 = vmatpush.msra.mxu0 0.0
        %2560 = vmatpush.msra.mxu0 0.0
        %2561 = vmatpush.msra.mxu0 0.0
        %2562 = vmatpush.msra.mxu0 0.0
        %2563 = vmatpush.msra.mxu0 0.0
        %2564 = vmatpush.msra.mxu0 %v2536
        %2565 = vmatpush.msra.mxu0 %v2535
        %2566 = vmatmul.f32.gmra.mxu0 %v2539
        %v2567 = vpop.f32.mrf.mxu0
        %v2568 = vadd.f32 0.0, %v2567
        %2569 = vmatmul.f32.gmra.mxu0 %v2542
        %v2570 = vpop.f32.mrf.mxu0
        %v2571 = vadd.f32 0.0, %v2570
        %2572 = vmatmul.f32.gmra.mxu0 %v2545
        %v2573 = vpop.f32.mrf.mxu0
        %v2574 = vadd.f32 0.0, %v2573
        %2575 = vmatmul.f32.gmra.mxu0 %v2548
        %v2576 = vpop.f32.mrf.mxu0
        %v2577 = vadd.f32 0.0, %v2576
        %2578 = vdwg.mxu0
        %v2580 = vsel %vm2537, %v2484, 0
        %v2583 = vsel %vm2537, %v2487, 0
        %v2586 = vsel %vm2537, %v2490, 0
        %v2589 = vsel %vm2537, %v2493, 0
        %2591 = vmatpush.msra.mxu0 0.0
        %2592 = vmatpush.msra.mxu0 0.0
        %2593 = vmatpush.msra.mxu0 0.0
        %2594 = vmatpush.msra.mxu0 0.0
        %2595 = vmatpush.msra.mxu0 0.0
        %2596 = vmatpush.msra.mxu0 0.0
        %2597 = vmatpush.msra.mxu0 0.0
        %2598 = vmatpush.msra.mxu0 0.0
        %2599 = vmatpush.msra.mxu0 0.0
        %2600 = vmatpush.msra.mxu0 0.0
        %2601 = vmatpush.msra.mxu0 0.0
        %2602 = vmatpush.msra.mxu0 0.0
        %2603 = vmatpush.msra.mxu0 0.0
        %2604 = vmatpush.msra.mxu0 0.0
        %2605 = vmatpush.msra.mxu0 %v2533
        %2606 = vmatpush.msra.mxu0 %v2532
        %2607 = vmatmul.f32.gmra.mxu0 %v2580
        %v2608 = vpop.f32.mrf.mxu0
        %v2609 = vadd.f32 %v2568, %v2608
        %2610 = vmatmul.f32.gmra.mxu0 %v2583
        %v2611 = vpop.f32.mrf.mxu0
        %v2612 = vadd.f32 %v2571, %v2611
        %2613 = vmatmul.f32.gmra.mxu0 %v2586
        %v2614 = vpop.f32.mrf.mxu0
        %v2615 = vadd.f32 %v2574, %v2614
        %2616 = vmatmul.f32.gmra.mxu0 %v2589
        %v2617 = vpop.f32.mrf.mxu0
        %v2618 = vadd.f32 %v2577, %v2617
        %2619 = vdwg.mxu0
        %s2620 = scalar_lea.vmem [#allocation6], 32
        %v2621 = vld [vmem:[%s2620] sm:$0xff]
        %v2622 = vld [vmem:[%s2620 + $0x8] sm:$0xff]
        %v2624 = vsel %vm2537, %v2521, 0
        %v2627 = vsel %vm2537, %v2524, 0
        %v2630 = vsel %vm2537, %v2527, 0
        %v2633 = vsel %vm2537, %v2530, 0
        %2635 = vmatpush.msra.mxu0 0.0
        %2636 = vmatpush.msra.mxu0 0.0
        %2637 = vmatpush.msra.mxu0 0.0
        %2638 = vmatpush.msra.mxu0 0.0
        %2639 = vmatpush.msra.mxu0 0.0
        %2640 = vmatpush.msra.mxu0 0.0
        %2641 = vmatpush.msra.mxu0 0.0
        %2642 = vmatpush.msra.mxu0 0.0
        %2643 = vmatpush.msra.mxu0 0.0
        %2644 = vmatpush.msra.mxu0 0.0
        %2645 = vmatpush.msra.mxu0 0.0
        %2646 = vmatpush.msra.mxu0 0.0
        %2647 = vmatpush.msra.mxu0 0.0
        %2648 = vmatpush.msra.mxu0 0.0
        %2649 = vmatpush.msra.mxu0 %v2622
        %2650 = vmatpush.msra.mxu0 %v2621
        %2651 = vmatmul.f32.gmra.mxu0 %v2624
        %v2652 = vpop.f32.mrf.mxu0
        %v2653 = vadd.f32 0.0, %v2652
        %2654 = vmatmul.f32.gmra.mxu0 %v2627
        %v2655 = vpop.f32.mrf.mxu0
        %v2656 = vadd.f32 0.0, %v2655
        %2657 = vmatmul.f32.gmra.mxu0 %v2630
        %v2658 = vpop.f32.mrf.mxu0
        %v2659 = vadd.f32 0.0, %v2658
        %2660 = vmatmul.f32.gmra.mxu0 %v2633
        %v2661 = vpop.f32.mrf.mxu0
        %v2662 = vadd.f32 0.0, %v2661
        %2663 = vdwg.mxu0
        %v2664 = vadd.f32 %v2609, %v2653
        %v2665 = vadd.f32 %v2612, %v2656
        %v2666 = vadd.f32 %v2615, %v2659
        %v2667 = vadd.f32 %v2618, %v2662
        %v2668 = vld [vmem:[#allocation7] sm:$0x1]
        %v2670 = vperm.slane %v2668, 0
        %v2672 = vadd.f32 %v2664, %v2670
        %v2673 = vadd.f32 %v2665, %v2670
        %v2674 = vadd.f32 %v2666, %v2670
        %v2675 = vadd.f32 %v2667, %v2670
        %v2676 = vsel %vm2453, %v2322, 0
        %v2678 = vsel %vm2453, %v2323, 0
        %2680 = vmatpush.msra.mxu0 0.0
        %2681 = vmatpush.msra.mxu0 0.0
        %2682 = vmatpush.msra.mxu0 0.0
        %2683 = vmatpush.msra.mxu0 0.0
        %2684 = vmatpush.msra.mxu0 0.0
        %2685 = vmatpush.msra.mxu0 0.0
        %2686 = vmatpush.msra.mxu0 0.0
        %2687 = vmatpush.msra.mxu0 0.0
        %2688 = vmatpush.msra.mxu0 0.0
        %2689 = vmatpush.msra.mxu0 0.0
        %2690 = vmatpush.msra.mxu0 0.0
        %2691 = vmatpush.msra.mxu0 0.0
        %2692 = vmatpush.msra.mxu0 %v2675
        %2693 = vmatpush.msra.mxu0 %v2674
        %2694 = vmatpush.msra.mxu0 %v2673
        %2695 = vmatpush.msra.mxu0 %v2672
        %2696 = vmatmul.f32.gmra.mxu0 %v2676
        %v2697 = vpop.f32.mrf.mxu0
        %v2698 = vadd.f32 0.0, %v2697
        %2699 = vmatmul.f32.gmra.mxu0 %v2678
        %v2700 = vpop.f32.mrf.mxu0
        %v2701 = vadd.f32 0.0, %v2700
        %2702 = vdwg.mxu0
        %v2703 = vsel %vm2453, %v2384, 0
        %v2705 = vsel %vm2453, %v2385, 0
        %2707 = vmatpush.msra.mxu0 0.0
        %2708 = vmatpush.msra.mxu0 0.0
        %2709 = vmatpush.msra.mxu0 0.0
        %2710 = vmatpush.msra.mxu0 0.0
        %2711 = vmatpush.msra.mxu0 0.0
        %2712 = vmatpush.msra.mxu0 0.0
        %2713 = vmatpush.msra.mxu0 0.0
        %2714 = vmatpush.msra.mxu0 0.0
        %2715 = vmatpush.msra.mxu0 0.0
        %2716 = vmatpush.msra.mxu0 0.0
        %2717 = vmatpush.msra.mxu0 0.0
        %2718 = vmatpush.msra.mxu0 0.0
        %2719 = vmatpush.msra.mxu0 %v2675
        %2720 = vmatpush.msra.mxu0 %v2674
        %2721 = vmatpush.msra.mxu0 %v2673
        %2722 = vmatpush.msra.mxu0 %v2672
        %2723 = vmatmul.f32.gmra.mxu0 %v2703
        %v2724 = vpop.f32.mrf.mxu0
        %v2725 = vadd.f32 0.0, %v2724
        %2726 = vmatmul.f32.gmra.mxu0 %v2705
        %v2727 = vpop.f32.mrf.mxu0
        %v2728 = vadd.f32 0.0, %v2727
        %2729 = vdwg.mxu0
        %v2730 = vmax.f32 %v2698, %v2725
        %v2731 = vmax.f32 %v2701, %v2728
        %v2732 = vmax.f32 %v2730, 0.0
        %v2733 = vmax.f32 %v2731, 0.0
        %v2734 = vsel %vm2537, %v2449, 0
        %v2736 = vsel %vm2537, %v2450, 0
        %2738 = vmatpush.msra.mxu0 0.0
        %2739 = vmatpush.msra.mxu0 0.0
        %2740 = vmatpush.msra.mxu0 0.0
        %2741 = vmatpush.msra.mxu0 0.0
        %2742 = vmatpush.msra.mxu0 0.0
        %2743 = vmatpush.msra.mxu0 0.0
        %2744 = vmatpush.msra.mxu0 0.0
        %2745 = vmatpush.msra.mxu0 0.0
        %2746 = vmatpush.msra.mxu0 0.0
        %2747 = vmatpush.msra.mxu0 0.0
        %2748 = vmatpush.msra.mxu0 0.0
        %2749 = vmatpush.msra.mxu0 0.0
        %2750 = vmatpush.msra.mxu0 0.0
        %2751 = vmatpush.msra.mxu0 0.0
        %2752 = vmatpush.msra.mxu0 %v2733
        %2753 = vmatpush.msra.mxu0 %v2732
        %2754 = vmatmul.f32.gmra.mxu0 %v2734
        %v2755 = vpop.f32.mrf.mxu0
        %v2756 = vadd.f32 0.0, %v2755
        %2757 = vmatmul.f32.gmra.mxu0 %v2736
        %v2758 = vpop.f32.mrf.mxu0
        %v2759 = vadd.f32 0.0, %v2758
        %2760 = vdwg.mxu0
        %v2761 = vsel %vm2537, %v938, 0
        %v2763 = vsel %vm2537, %v939, 0
        %2765 = vmatpush.msra.mxu0 0.0
        %2766 = vmatpush.msra.mxu0 0.0
        %2767 = vmatpush.msra.mxu0 0.0
        %2768 = vmatpush.msra.mxu0 0.0
        %2769 = vmatpush.msra.mxu0 0.0
        %2770 = vmatpush.msra.mxu0 0.0
        %2771 = vmatpush.msra.mxu0 0.0
        %2772 = vmatpush.msra.mxu0 0.0
        %2773 = vmatpush.msra.mxu0 0.0
        %2774 = vmatpush.msra.mxu0 0.0
        %2775 = vmatpush.msra.mxu0 0.0
        %2776 = vmatpush.msra.mxu0 0.0
        %2777 = vmatpush.msra.mxu0 0.0
        %2778 = vmatpush.msra.mxu0 0.0
        %2779 = vmatpush.msra.mxu0 %v2733
        %2780 = vmatpush.msra.mxu0 %v2732
        %2781 = vmatmul.f32.gmra.mxu0 %v2761
        %v2782 = vpop.f32.mrf.mxu0
        %v2783 = vadd.f32 0.0, %v2782
        %2784 = vmatmul.f32.gmra.mxu0 %v2763
        %v2785 = vpop.f32.mrf.mxu0
        %v2786 = vadd.f32 0.0, %v2785
        %2787 = vdwg.mxu0
        %v2788 = vld [vmem:[#allocation9] sm:$0xff]
        %v2789 = vld [vmem:[#allocation9 + $0x8] sm:$0xff]
        %v2790 = vld [vmem:[#allocation9 + $0x10] sm:$0xff]
        %v2791 = vld [vmem:[#allocation9 + $0x18] sm:$0xff]
        %s2792 = scalar_lea.vmem [#allocation9], 32
        %v2793 = vld [vmem:[%s2792] sm:$0xff]
        %v2794 = vld [vmem:[%s2792 + $0x8] sm:$0xff]
        %v2795 = vld [vmem:[%s2792 + $0x10] sm:$0xff]
        %v2796 = vld [vmem:[%s2792 + $0x18] sm:$0xff]
        %v2798 = vsel %vm2453, %v2732, 0
        %v2801 = vsel %vm2453, %v2733, 0
        %2803 = vmatpush.msra.mxu0 0.0
        %2804 = vmatpush.msra.mxu0 0.0
        %2805 = vmatpush.msra.mxu0 0.0
        %2806 = vmatpush.msra.mxu0 0.0
        %2807 = vmatpush.msra.mxu0 0.0
        %2808 = vmatpush.msra.mxu0 0.0
        %2809 = vmatpush.msra.mxu0 0.0
        %2810 = vmatpush.msra.mxu0 0.0
        %2811 = vmatpush.msra.mxu0 0.0
        %2812 = vmatpush.msra.mxu0 0.0
        %2813 = vmatpush.msra.mxu0 0.0
        %2814 = vmatpush.msra.mxu0 0.0
        %2815 = vmatpush.msra.mxu0 %v2796
        %2816 = vmatpush.msra.mxu0 %v2795
        %2817 = vmatpush.msra.mxu0 %v2794
        %2818 = vmatpush.msra.mxu0 %v2793
        %2819 = vmatmul.f32.gmra.mxu0 %v2798
        %v2820 = vpop.f32.mrf.mxu0
        %v2821 = vadd.f32 0.0, %v2820
        %2822 = vmatmul.f32.gmra.mxu0 %v2801
        %v2823 = vpop.f32.mrf.mxu0
        %v2824 = vadd.f32 0.0, %v2823
        %2825 = vdwg.mxu0
        %v2827 = vsel %vm2453, %v2756, 0
        %v2830 = vsel %vm2453, %v2759, 0
        %2832 = vmatpush.msra.mxu0 0.0
        %2833 = vmatpush.msra.mxu0 0.0
        %2834 = vmatpush.msra.mxu0 0.0
        %2835 = vmatpush.msra.mxu0 0.0
        %2836 = vmatpush.msra.mxu0 0.0
        %2837 = vmatpush.msra.mxu0 0.0
        %2838 = vmatpush.msra.mxu0 0.0
        %2839 = vmatpush.msra.mxu0 0.0
        %2840 = vmatpush.msra.mxu0 0.0
        %2841 = vmatpush.msra.mxu0 0.0
        %2842 = vmatpush.msra.mxu0 0.0
        %2843 = vmatpush.msra.mxu0 0.0
        %2844 = vmatpush.msra.mxu0 %v2791
        %2845 = vmatpush.msra.mxu0 %v2790
        %2846 = vmatpush.msra.mxu0 %v2789
        %2847 = vmatpush.msra.mxu0 %v2788
        %2848 = vmatmul.f32.gmra.mxu0 %v2827
        %v2849 = vpop.f32.mrf.mxu0
        %v2850 = vadd.f32 %v2821, %v2849
        %2851 = vmatmul.f32.gmra.mxu0 %v2830
        %v2852 = vpop.f32.mrf.mxu0
        %v2853 = vadd.f32 %v2824, %v2852
        %2854 = vdwg.mxu0
        %s2855 = scalar_lea.vmem [#allocation9], 64
        %v2856 = vld [vmem:[%s2855] sm:$0xff]
        %v2857 = vld [vmem:[%s2855 + $0x8] sm:$0xff]
        %v2858 = vld [vmem:[%s2855 + $0x10] sm:$0xff]
        %v2859 = vld [vmem:[%s2855 + $0x18] sm:$0xff]
        %v2861 = vsel %vm2453, %v2783, 0
        %v2864 = vsel %vm2453, %v2786, 0
        %2866 = vmatpush.msra.mxu0 0.0
        %2867 = vmatpush.msra.mxu0 0.0
        %2868 = vmatpush.msra.mxu0 0.0
        %2869 = vmatpush.msra.mxu0 0.0
        %2870 = vmatpush.msra.mxu0 0.0
        %2871 = vmatpush.msra.mxu0 0.0
        %2872 = vmatpush.msra.mxu0 0.0
        %2873 = vmatpush.msra.mxu0 0.0
        %2874 = vmatpush.msra.mxu0 0.0
        %2875 = vmatpush.msra.mxu0 0.0
        %2876 = vmatpush.msra.mxu0 0.0
        %2877 = vmatpush.msra.mxu0 0.0
        %2878 = vmatpush.msra.mxu0 %v2859
        %2879 = vmatpush.msra.mxu0 %v2858
        %2880 = vmatpush.msra.mxu0 %v2857
        %2881 = vmatpush.msra.mxu0 %v2856
        %2882 = vmatmul.f32.gmra.mxu0 %v2861
        %v2883 = vpop.f32.mrf.mxu0
        %v2884 = vadd.f32 0.0, %v2883
        %2885 = vmatmul.f32.gmra.mxu0 %v2864
        %v2886 = vpop.f32.mrf.mxu0
        %v2887 = vadd.f32 0.0, %v2886
        %2888 = vdwg.mxu0
        %v2889 = vadd.f32 %v2850, %v2884
        %v2890 = vadd.f32 %v2853, %v2887
        %v2891 = vld [vmem:[#allocation10] sm:$0x1]
        %v2893 = vperm.slane %v2891, 0
        %v2895 = vadd.f32 %v2889, %v2893
        %v2896 = vadd.f32 %v2890, %v2893
        %v2897 = vsel %vm2537, %v2322, 0
        %2899 = vmatpush.msra.mxu0 0.0
        %2900 = vmatpush.msra.mxu0 0.0
        %2901 = vmatpush.msra.mxu0 0.0
        %2902 = vmatpush.msra.mxu0 0.0
        %2903 = vmatpush.msra.mxu0 0.0
        %2904 = vmatpush.msra.mxu0 0.0
        %2905 = vmatpush.msra.mxu0 0.0
        %2906 = vmatpush.msra.mxu0 0.0
        %2907 = vmatpush.msra.mxu0 0.0
        %2908 = vmatpush.msra.mxu0 0.0
        %2909 = vmatpush.msra.mxu0 0.0
        %2910 = vmatpush.msra.mxu0 0.0
        %2911 = vmatpush.msra.mxu0 0.0
        %2912 = vmatpush.msra.mxu0 0.0
        %2913 = vmatpush.msra.mxu0 %v2896
        %2914 = vmatpush.msra.mxu0 %v2895
        %2915 = vmatmul.f32.gmra.mxu0 %v2897
        %v2916 = vpop.f32.mrf.mxu0
        %v2917 = vadd.f32 0.0, %v2916
        %2918 = vdwg.mxu0
        %v2919 = vsel %vm2537, %v2384, 0
        %2921 = vmatpush.msra.mxu0 0.0
        %2922 = vmatpush.msra.mxu0 0.0
        %2923 = vmatpush.msra.mxu0 0.0
        %2924 = vmatpush.msra.mxu0 0.0
        %2925 = vmatpush.msra.mxu0 0.0
        %2926 = vmatpush.msra.mxu0 0.0
        %2927 = vmatpush.msra.mxu0 0.0
        %2928 = vmatpush.msra.mxu0 0.0
        %2929 = vmatpush.msra.mxu0 0.0
        %2930 = vmatpush.msra.mxu0 0.0
        %2931 = vmatpush.msra.mxu0 0.0
        %2932 = vmatpush.msra.mxu0 0.0
        %2933 = vmatpush.msra.mxu0 0.0
        %2934 = vmatpush.msra.mxu0 0.0
        %2935 = vmatpush.msra.mxu0 %v2896
        %2936 = vmatpush.msra.mxu0 %v2895
        %2937 = vmatmul.f32.gmra.mxu0 %v2919
        %v2938 = vpop.f32.mrf.mxu0
        %v2939 = vadd.f32 0.0, %v2938
        %2940 = vdwg.mxu0
        %v2941 = vmax.f32 %v2917, %v2939
        %v2942 = vmax.f32 %v2941, 0.0
        %v2943 = vsel %vm1020, %v2449, 0
        %2945 = vmatpush.msra.mxu0 0.0
        %2946 = vmatpush.msra.mxu0 0.0
        %2947 = vmatpush.msra.mxu0 0.0
        %2948 = vmatpush.msra.mxu0 0.0
        %2949 = vmatpush.msra.mxu0 0.0
        %2950 = vmatpush.msra.mxu0 0.0
        %2951 = vmatpush.msra.mxu0 0.0
        %2952 = vmatpush.msra.mxu0 0.0
        %2953 = vmatpush.msra.mxu0 0.0
        %2954 = vmatpush.msra.mxu0 0.0
        %2955 = vmatpush.msra.mxu0 0.0
        %2956 = vmatpush.msra.mxu0 0.0
        %2957 = vmatpush.msra.mxu0 0.0
        %2958 = vmatpush.msra.mxu0 0.0
        %2959 = vmatpush.msra.mxu0 0.0
        %2960 = vmatpush.msra.mxu0 %v2942
        %2961 = vmatmul.f32.gmra.mxu0 %v2943
        %v2962 = vpop.f32.mrf.mxu0
        %v2963 = vadd.f32 0.0, %v2962
        %2964 = vdwg.mxu0
        %v2965 = vsel %vm1020, %v938, 0
        %2967 = vmatpush.msra.mxu0 0.0
        %2968 = vmatpush.msra.mxu0 0.0
        %2969 = vmatpush.msra.mxu0 0.0
        %2970 = vmatpush.msra.mxu0 0.0
        %2971 = vmatpush.msra.mxu0 0.0
        %2972 = vmatpush.msra.mxu0 0.0
        %2973 = vmatpush.msra.mxu0 0.0
        %2974 = vmatpush.msra.mxu0 0.0
        %2975 = vmatpush.msra.mxu0 0.0
        %2976 = vmatpush.msra.mxu0 0.0
        %2977 = vmatpush.msra.mxu0 0.0
        %2978 = vmatpush.msra.mxu0 0.0
        %2979 = vmatpush.msra.mxu0 0.0
        %2980 = vmatpush.msra.mxu0 0.0
        %2981 = vmatpush.msra.mxu0 0.0
        %2982 = vmatpush.msra.mxu0 %v2942
        %2983 = vmatmul.f32.gmra.mxu0 %v2965
        %v2984 = vpop.f32.mrf.mxu0
        %v2985 = vadd.f32 0.0, %v2984
        %2986 = vdwg.mxu0
        %v2987 = vld [vmem:[%s7] sm:$0xff]
        %v2988 = vld [vmem:[%s7 + $0x8] sm:$0xff]
        %v2989 = vld [vmem:[%s7 + $0x10] sm:$0xff]
        %v2990 = vld [vmem:[%s7 + $0x18] sm:$0xff]
        %v2991 = vld [vmem:[%s7 + $0x20] sm:$0xff]
        %v2992 = vld [vmem:[%s7 + $0x28] sm:$0xff]
        %v2993 = vld [vmem:[%s7 + $0x30] sm:$0xff]
        %v2994 = vld [vmem:[%s7 + $0x38] sm:$0xff]
        %s2995 = scalar_lea.vmem %s7, 64
        %v2996 = vld [vmem:[%s2995] sm:$0xff]
        %v2997 = vld [vmem:[%s2995 + $0x8] sm:$0xff]
        %v2998 = vld [vmem:[%s2995 + $0x10] sm:$0xff]
        %v2999 = vld [vmem:[%s2995 + $0x18] sm:$0xff]
        %v3000 = vld [vmem:[%s2995 + $0x20] sm:$0xff]
        %v3001 = vld [vmem:[%s2995 + $0x28] sm:$0xff]
        %v3002 = vld [vmem:[%s2995 + $0x30] sm:$0xff]
        %v3003 = vld [vmem:[%s2995 + $0x38] sm:$0xff]
        %vm3004 = vcmask 523264
        %v3006 = vsel %vm3004, %v2942, 0
        %3008 = vmatpush.msra.mxu0 0.0
        %3009 = vmatpush.msra.mxu0 0.0
        %3010 = vmatpush.msra.mxu0 0.0
        %3011 = vmatpush.msra.mxu0 0.0
        %3012 = vmatpush.msra.mxu0 0.0
        %3013 = vmatpush.msra.mxu0 0.0
        %3014 = vmatpush.msra.mxu0 0.0
        %3015 = vmatpush.msra.mxu0 0.0
        %3016 = vmatpush.msra.mxu0 %v3003
        %3017 = vmatpush.msra.mxu0 %v3002
        %3018 = vmatpush.msra.mxu0 %v3001
        %3019 = vmatpush.msra.mxu0 %v3000
        %3020 = vmatpush.msra.mxu0 %v2999
        %3021 = vmatpush.msra.mxu0 %v2998
        %3022 = vmatpush.msra.mxu0 %v2997
        %3023 = vmatpush.msra.mxu0 %v2996
        %3024 = vmatmul.f32.gmra.mxu0 %v3006
        %v3025 = vpop.f32.mrf.mxu0
        %v3026 = vadd.f32 0.0, %v3025
        %3027 = vdwg.mxu0
        %v3029 = vsel %vm3004, %v2963, 0
        %3031 = vmatpush.msra.mxu0 0.0
        %3032 = vmatpush.msra.mxu0 0.0
        %3033 = vmatpush.msra.mxu0 0.0
        %3034 = vmatpush.msra.mxu0 0.0
        %3035 = vmatpush.msra.mxu0 0.0
        %3036 = vmatpush.msra.mxu0 0.0
        %3037 = vmatpush.msra.mxu0 0.0
        %3038 = vmatpush.msra.mxu0 0.0
        %3039 = vmatpush.msra.mxu0 %v2994
        %3040 = vmatpush.msra.mxu0 %v2993
        %3041 = vmatpush.msra.mxu0 %v2992
        %3042 = vmatpush.msra.mxu0 %v2991
        %3043 = vmatpush.msra.mxu0 %v2990
        %3044 = vmatpush.msra.mxu0 %v2989
        %3045 = vmatpush.msra.mxu0 %v2988
        %3046 = vmatpush.msra.mxu0 %v2987
        %3047 = vmatmul.f32.gmra.mxu0 %v3029
        %v3048 = vpop.f32.mrf.mxu0
        %v3049 = vadd.f32 %v3026, %v3048
        %3050 = vdwg.mxu0
        %s3051 = scalar_lea.vmem %s7, 128
        %v3052 = vld [vmem:[%s3051] sm:$0xff]
        %v3053 = vld [vmem:[%s3051 + $0x8] sm:$0xff]
        %v3054 = vld [vmem:[%s3051 + $0x10] sm:$0xff]
        %v3055 = vld [vmem:[%s3051 + $0x18] sm:$0xff]
        %v3056 = vld [vmem:[%s3051 + $0x20] sm:$0xff]
        %v3057 = vld [vmem:[%s3051 + $0x28] sm:$0xff]
        %v3058 = vld [vmem:[%s3051 + $0x30] sm:$0xff]
        %v3059 = vld [vmem:[%s3051 + $0x38] sm:$0xff]
        %v3061 = vsel %vm3004, %v2985, 0
        %3063 = vmatpush.msra.mxu0 0.0
        %3064 = vmatpush.msra.mxu0 0.0
        %3065 = vmatpush.msra.mxu0 0.0
        %3066 = vmatpush.msra.mxu0 0.0
        %3067 = vmatpush.msra.mxu0 0.0
        %3068 = vmatpush.msra.mxu0 0.0
        %3069 = vmatpush.msra.mxu0 0.0
        %3070 = vmatpush.msra.mxu0 0.0
        %3071 = vmatpush.msra.mxu0 %v3059
        %3072 = vmatpush.msra.mxu0 %v3058
        %3073 = vmatpush.msra.mxu0 %v3057
        %3074 = vmatpush.msra.mxu0 %v3056
        %3075 = vmatpush.msra.mxu0 %v3055
        %3076 = vmatpush.msra.mxu0 %v3054
        %3077 = vmatpush.msra.mxu0 %v3053
        %3078 = vmatpush.msra.mxu0 %v3052
        %3079 = vmatmul.f32.gmra.mxu0 %v3061
        %v3080 = vpop.f32.mrf.mxu0
        %v3081 = vadd.f32 0.0, %v3080
        %3082 = vdwg.mxu0
        %v3083 = vadd.f32 %v3049, %v3081
        %v3084 = vld [vmem:[#allocation12] sm:$0x1]
        %v3086 = vperm.slane %v3084, 0
        %v3088 = vadd.f32 %v3083, %v3086
        %v3089 = vsel %vm1020, %v2322, 0
        %3091 = vmatpush.msra.mxu0 0.0
        %3092 = vmatpush.msra.mxu0 0.0
        %3093 = vmatpush.msra.mxu0 0.0
        %3094 = vmatpush.msra.mxu0 0.0
        %3095 = vmatpush.msra.mxu0 0.0
        %3096 = vmatpush.msra.mxu0 0.0
        %3097 = vmatpush.msra.mxu0 0.0
        %3098 = vmatpush.msra.mxu0 0.0
        %3099 = vmatpush.msra.mxu0 0.0
        %3100 = vmatpush.msra.mxu0 0.0
        %3101 = vmatpush.msra.mxu0 0.0
        %3102 = vmatpush.msra.mxu0 0.0
        %3103 = vmatpush.msra.mxu0 0.0
        %3104 = vmatpush.msra.mxu0 0.0
        %3105 = vmatpush.msra.mxu0 0.0
        %3106 = vmatpush.msra.mxu0 %v3088
        %3107 = vmatmul.f32.gmra.mxu0 %v3089
        %v3108 = vpop.f32.mrf.mxu0
        %v3109 = vadd.f32 0.0, %v3108
        %3110 = vdwg.mxu0
        %v3111 = vsel %vm1020, %v2384, 0
        %3113 = vmatpush.msra.mxu0 0.0
        %3114 = vmatpush.msra.mxu0 0.0
        %3115 = vmatpush.msra.mxu0 0.0
        %3116 = vmatpush.msra.mxu0 0.0
        %3117 = vmatpush.msra.mxu0 0.0
        %3118 = vmatpush.msra.mxu0 0.0
        %3119 = vmatpush.msra.mxu0 0.0
        %3120 = vmatpush.msra.mxu0 0.0
        %3121 = vmatpush.msra.mxu0 0.0
        %3122 = vmatpush.msra.mxu0 0.0
        %3123 = vmatpush.msra.mxu0 0.0
        %3124 = vmatpush.msra.mxu0 0.0
        %3125 = vmatpush.msra.mxu0 0.0
        %3126 = vmatpush.msra.mxu0 0.0
        %3127 = vmatpush.msra.mxu0 0.0
        %3128 = vmatpush.msra.mxu0 %v3088
        %3129 = vmatmul.f32.gmra.mxu0 %v3111
        %v3130 = vpop.f32.mrf.mxu0
        %v3131 = vadd.f32 0.0, %v3130
        %3132 = vdwg.mxu0
        %v3133 = vmax.f32 %v3109, %v3131
        %v3134 = vmax.f32 %v3133, 0.0
        %vm3135 = vcmask 31744
        %v3136 = vsel %vm3135, %v2449, 0
        %vm3138 = vcmask 1043456
        %v3140 = vsel %vm3138, %v3134, 0
        %3142 = vmatpush.msra.mxu0 0.0
        %3143 = vmatpush.msra.mxu0 0.0
        %3144 = vmatpush.msra.mxu0 0.0
        %3145 = vmatpush.msra.mxu0 0.0
        %3146 = vmatpush.msra.mxu0 0.0
        %3147 = vmatpush.msra.mxu0 0.0
        %3148 = vmatpush.msra.mxu0 0.0
        %3149 = vmatpush.msra.mxu0 0.0
        %3150 = vmatpush.msra.mxu0 0.0
        %3151 = vmatpush.msra.mxu0 0.0
        %3152 = vmatpush.msra.mxu0 0.0
        %3153 = vmatpush.msra.mxu0 0.0
        %3154 = vmatpush.msra.mxu0 0.0
        %3155 = vmatpush.msra.mxu0 0.0
        %3156 = vmatpush.msra.mxu0 0.0
        %3157 = vmatpush.msra.mxu0 %v3140
        %3158 = vmatmul.f32.gmra.mxu0 %v3136
        %v3159 = vpop.f32.mrf.mxu0
        %v3160 = vadd.f32 0.0, %v3159
        %3161 = vdwg.mxu0
        %v3162 = vsel %vm3135, %v938, 0
        %3164 = vmatpush.msra.mxu0 0.0
        %3165 = vmatpush.msra.mxu0 0.0
        %3166 = vmatpush.msra.mxu0 0.0
        %3167 = vmatpush.msra.mxu0 0.0
        %3168 = vmatpush.msra.mxu0 0.0
        %3169 = vmatpush.msra.mxu0 0.0
        %3170 = vmatpush.msra.mxu0 0.0
        %3171 = vmatpush.msra.mxu0 0.0
        %3172 = vmatpush.msra.mxu0 0.0
        %3173 = vmatpush.msra.mxu0 0.0
        %3174 = vmatpush.msra.mxu0 0.0
        %3175 = vmatpush.msra.mxu0 0.0
        %3176 = vmatpush.msra.mxu0 0.0
        %3177 = vmatpush.msra.mxu0 0.0
        %3178 = vmatpush.msra.mxu0 0.0
        %3179 = vmatpush.msra.mxu0 %v3140
        %3180 = vmatmul.f32.gmra.mxu0 %v3162
        %v3181 = vpop.f32.mrf.mxu0
        %v3182 = vadd.f32 0.0, %v3181
        %3183 = vdwg.mxu0
        %v3184 = vld [vmem:[#allocation13] sm:$0xff]
        %v3185 = vld [vmem:[#allocation13 + $0x8] sm:$0xff]
        %v3186 = vld [vmem:[#allocation13 + $0x10] sm:$0xff]
        %v3187 = vld [vmem:[#allocation13 + $0x18] sm:$0xff]
        %v3188 = vld [vmem:[#allocation13 + $0x20] sm:$0xff]
        %v3189 = vld [vmem:[#allocation13 + $0x28] sm:$0xff]
        %v3190 = vld [vmem:[#allocation13 + $0x30] sm:$0xff]
        %v3191 = vld [vmem:[#allocation13 + $0x38] sm:$0xff]
        %s3192 = scalar_lea.vmem [#allocation13], 64
        %v3193 = vld [vmem:[%s3192] sm:$0xff]
        %v3194 = vld [vmem:[%s3192 + $0x8] sm:$0xff]
        %v3195 = vld [vmem:[%s3192 + $0x10] sm:$0xff]
        %v3196 = vld [vmem:[%s3192 + $0x18] sm:$0xff]
        %v3197 = vld [vmem:[%s3192 + $0x20] sm:$0xff]
        %v3198 = vld [vmem:[%s3192 + $0x28] sm:$0xff]
        %v3199 = vld [vmem:[%s3192 + $0x30] sm:$0xff]
        %v3200 = vld [vmem:[%s3192 + $0x38] sm:$0xff]
        %v3201 = vsel %vm3004, %v3134, 0
        %3203 = vmatpush.msra.mxu0 0.0
        %3204 = vmatpush.msra.mxu0 0.0
        %3205 = vmatpush.msra.mxu0 0.0
        %3206 = vmatpush.msra.mxu0 0.0
        %3207 = vmatpush.msra.mxu0 0.0
        %3208 = vmatpush.msra.mxu0 0.0
        %3209 = vmatpush.msra.mxu0 0.0
        %3210 = vmatpush.msra.mxu0 0.0
        %3211 = vmatpush.msra.mxu0 %v3200
        %3212 = vmatpush.msra.mxu0 %v3199
        %3213 = vmatpush.msra.mxu0 %v3198
        %3214 = vmatpush.msra.mxu0 %v3197
        %3215 = vmatpush.msra.mxu0 %v3196
        %3216 = vmatpush.msra.mxu0 %v3195
        %3217 = vmatpush.msra.mxu0 %v3194
        %3218 = vmatpush.msra.mxu0 %v3193
        %3219 = vmatmul.f32.gmra.mxu0 %v3201
        %v3220 = vpop.f32.mrf.mxu0
        %v3221 = vadd.f32 0.0, %v3220
        %3222 = vdwg.mxu0
        %v3224 = vsel %vm3004, %v3160, 0
        %3226 = vmatpush.msra.mxu0 0.0
        %3227 = vmatpush.msra.mxu0 0.0
        %3228 = vmatpush.msra.mxu0 0.0
        %3229 = vmatpush.msra.mxu0 0.0
        %3230 = vmatpush.msra.mxu0 0.0
        %3231 = vmatpush.msra.mxu0 0.0
        %3232 = vmatpush.msra.mxu0 0.0
        %3233 = vmatpush.msra.mxu0 0.0
        %3234 = vmatpush.msra.mxu0 %v3191
        %3235 = vmatpush.msra.mxu0 %v3190
        %3236 = vmatpush.msra.mxu0 %v3189
        %3237 = vmatpush.msra.mxu0 %v3188
        %3238 = vmatpush.msra.mxu0 %v3187
        %3239 = vmatpush.msra.mxu0 %v3186
        %3240 = vmatpush.msra.mxu0 %v3185
        %3241 = vmatpush.msra.mxu0 %v3184
        %3242 = vmatmul.f32.gmra.mxu0 %v3224
        %v3243 = vpop.f32.mrf.mxu0
        %v3244 = vadd.f32 %v3221, %v3243
        %3245 = vdwg.mxu0
        %s3246 = scalar_lea.vmem [#allocation13], 128
        %v3247 = vld [vmem:[%s3246] sm:$0xff]
        %v3248 = vld [vmem:[%s3246 + $0x8] sm:$0xff]
        %v3249 = vld [vmem:[%s3246 + $0x10] sm:$0xff]
        %v3250 = vld [vmem:[%s3246 + $0x18] sm:$0xff]
        %v3251 = vld [vmem:[%s3246 + $0x20] sm:$0xff]
        %v3252 = vld [vmem:[%s3246 + $0x28] sm:$0xff]
        %v3253 = vld [vmem:[%s3246 + $0x30] sm:$0xff]
        %v3254 = vld [vmem:[%s3246 + $0x38] sm:$0xff]
        %v3256 = vsel %vm3004, %v3182, 0
        %3258 = vmatpush.msra.mxu0 0.0
        %3259 = vmatpush.msra.mxu0 0.0
        %3260 = vmatpush.msra.mxu0 0.0
        %3261 = vmatpush.msra.mxu0 0.0
        %3262 = vmatpush.msra.mxu0 0.0
        %3263 = vmatpush.msra.mxu0 0.0
        %3264 = vmatpush.msra.mxu0 0.0
        %3265 = vmatpush.msra.mxu0 0.0
        %3266 = vmatpush.msra.mxu0 %v3254
        %3267 = vmatpush.msra.mxu0 %v3253
        %3268 = vmatpush.msra.mxu0 %v3252
        %3269 = vmatpush.msra.mxu0 %v3251
        %3270 = vmatpush.msra.mxu0 %v3250
        %3271 = vmatpush.msra.mxu0 %v3249
        %3272 = vmatpush.msra.mxu0 %v3248
        %3273 = vmatpush.msra.mxu0 %v3247
        %3274 = vmatmul.f32.gmra.mxu0 %v3256
        %v3275 = vpop.f32.mrf.mxu0
        %v3276 = vadd.f32 0.0, %v3275
        %3277 = vdwg.mxu0
        %v3278 = vadd.f32 %v3244, %v3276
        %v3279 = vld [vmem:[%s10] sm:$0x1]
        %v3281 = vperm.slane %v3279, 0
        %v3283 = vadd.f32 %v3278, %v3281
        %v3284 = vsel %vm3135, %v2322, 0
        %v3287 = vsel %vm3138, %v3283, 0
        %3289 = vmatpush.msra.mxu0 0.0
        %3290 = vmatpush.msra.mxu0 0.0
        %3291 = vmatpush.msra.mxu0 0.0
        %3292 = vmatpush.msra.mxu0 0.0
        %3293 = vmatpush.msra.mxu0 0.0
        %3294 = vmatpush.msra.mxu0 0.0
        %3295 = vmatpush.msra.mxu0 0.0
        %3296 = vmatpush.msra.mxu0 0.0
        %3297 = vmatpush.msra.mxu0 0.0
        %3298 = vmatpush.msra.mxu0 0.0
        %3299 = vmatpush.msra.mxu0 0.0
        %3300 = vmatpush.msra.mxu0 0.0
        %3301 = vmatpush.msra.mxu0 0.0
        %3302 = vmatpush.msra.mxu0 0.0
        %3303 = vmatpush.msra.mxu0 0.0
        %3304 = vmatpush.msra.mxu0 %v3287
        %3305 = vmatmul.f32.gmra.mxu0 %v3284
        %v3306 = vpop.f32.mrf.mxu0
        %v3307 = vadd.f32 0.0, %v3306
        %3308 = vdwg.mxu0
        %v3309 = vsel %vm3135, %v2384, 0
        %3311 = vmatpush.msra.mxu0 0.0
        %3312 = vmatpush.msra.mxu0 0.0
        %3313 = vmatpush.msra.mxu0 0.0
        %3314 = vmatpush.msra.mxu0 0.0
        %3315 = vmatpush.msra.mxu0 0.0
        %3316 = vmatpush.msra.mxu0 0.0
        %3317 = vmatpush.msra.mxu0 0.0
        %3318 = vmatpush.msra.mxu0 0.0
        %3319 = vmatpush.msra.mxu0 0.0
        %3320 = vmatpush.msra.mxu0 0.0
        %3321 = vmatpush.msra.mxu0 0.0
        %3322 = vmatpush.msra.mxu0 0.0
        %3323 = vmatpush.msra.mxu0 0.0
        %3324 = vmatpush.msra.mxu0 0.0
        %3325 = vmatpush.msra.mxu0 0.0
        %3326 = vmatpush.msra.mxu0 %v3287
        %3327 = vmatmul.f32.gmra.mxu0 %v3309
        %v3328 = vpop.f32.mrf.mxu0
        %v3329 = vadd.f32 0.0, %v3328
        %3330 = vdwg.mxu0
        %v3331 = vmax.f32 %v3307, %v3329
        %v3332 = vmax.f32 %v3331, 0.0
        %vm3333 = vcmask 15360
        %v3334 = vsel %vm3333, %v2449, 0
        %vm3336 = vcmask 1041408
        %v3338 = vsel %vm3336, %v3332, 0
        %3340 = vmatpush.msra.mxu0 0.0
        %3341 = vmatpush.msra.mxu0 0.0
        %3342 = vmatpush.msra.mxu0 0.0
        %3343 = vmatpush.msra.mxu0 0.0
        %3344 = vmatpush.msra.mxu0 0.0
        %3345 = vmatpush.msra.mxu0 0.0
        %3346 = vmatpush.msra.mxu0 0.0
        %3347 = vmatpush.msra.mxu0 0.0
        %3348 = vmatpush.msra.mxu0 0.0
        %3349 = vmatpush.msra.mxu0 0.0
        %3350 = vmatpush.msra.mxu0 0.0
        %3351 = vmatpush.msra.mxu0 0.0
        %3352 = vmatpush.msra.mxu0 0.0
        %3353 = vmatpush.msra.mxu0 0.0
        %3354 = vmatpush.msra.mxu0 0.0
        %3355 = vmatpush.msra.mxu0 %v3338
        %3356 = vmatmul.f32.gmra.mxu0 %v3334
        %v3357 = vpop.f32.mrf.mxu0
        %v3358 = vadd.f32 0.0, %v3357
        %3359 = vdwg.mxu0
        %v3360 = vsel %vm3333, %v938, 0
        %3362 = vmatpush.msra.mxu0 0.0
        %3363 = vmatpush.msra.mxu0 0.0
        %3364 = vmatpush.msra.mxu0 0.0
        %3365 = vmatpush.msra.mxu0 0.0
        %3366 = vmatpush.msra.mxu0 0.0
        %3367 = vmatpush.msra.mxu0 0.0
        %3368 = vmatpush.msra.mxu0 0.0
        %3369 = vmatpush.msra.mxu0 0.0
        %3370 = vmatpush.msra.mxu0 0.0
        %3371 = vmatpush.msra.mxu0 0.0
        %3372 = vmatpush.msra.mxu0 0.0
        %3373 = vmatpush.msra.mxu0 0.0
        %3374 = vmatpush.msra.mxu0 0.0
        %3375 = vmatpush.msra.mxu0 0.0
        %3376 = vmatpush.msra.mxu0 0.0
        %3377 = vmatpush.msra.mxu0 %v3338
        %3378 = vmatmul.f32.gmra.mxu0 %v3360
        %v3379 = vpop.f32.mrf.mxu0
        %v3380 = vadd.f32 0.0, %v3379
        %3381 = vdwg.mxu0
        %v3382 = vld [vmem:[#allocation15] sm:$0xff]
        %v3383 = vld [vmem:[#allocation15 + $0x8] sm:$0xff]
        %v3384 = vld [vmem:[#allocation15 + $0x10] sm:$0xff]
        %v3385 = vld [vmem:[#allocation15 + $0x18] sm:$0xff]
        %v3386 = vld [vmem:[#allocation15 + $0x20] sm:$0xff]
        %v3387 = vld [vmem:[#allocation15 + $0x28] sm:$0xff]
        %v3388 = vld [vmem:[#allocation15 + $0x30] sm:$0xff]
        %v3389 = vld [vmem:[#allocation15 + $0x38] sm:$0xff]
        %s3390 = scalar_lea.vmem [#allocation15], 64
        %v3391 = vld [vmem:[%s3390] sm:$0xff]
        %v3392 = vld [vmem:[%s3390 + $0x8] sm:$0xff]
        %v3393 = vld [vmem:[%s3390 + $0x10] sm:$0xff]
        %v3394 = vld [vmem:[%s3390 + $0x18] sm:$0xff]
        %v3395 = vld [vmem:[%s3390 + $0x20] sm:$0xff]
        %v3396 = vld [vmem:[%s3390 + $0x28] sm:$0xff]
        %v3397 = vld [vmem:[%s3390 + $0x30] sm:$0xff]
        %v3398 = vld [vmem:[%s3390 + $0x38] sm:$0xff]
        %v3399 = vsel %vm3004, %v3332, 0
        %3401 = vmatpush.msra.mxu0 0.0
        %3402 = vmatpush.msra.mxu0 0.0
        %3403 = vmatpush.msra.mxu0 0.0
        %3404 = vmatpush.msra.mxu0 0.0
        %3405 = vmatpush.msra.mxu0 0.0
        %3406 = vmatpush.msra.mxu0 0.0
        %3407 = vmatpush.msra.mxu0 0.0
        %3408 = vmatpush.msra.mxu0 0.0
        %3409 = vmatpush.msra.mxu0 %v3398
        %3410 = vmatpush.msra.mxu0 %v3397
        %3411 = vmatpush.msra.mxu0 %v3396
        %3412 = vmatpush.msra.mxu0 %v3395
        %3413 = vmatpush.msra.mxu0 %v3394
        %3414 = vmatpush.msra.mxu0 %v3393
        %3415 = vmatpush.msra.mxu0 %v3392
        %3416 = vmatpush.msra.mxu0 %v3391
        %3417 = vmatmul.f32.gmra.mxu0 %v3399
        %v3418 = vpop.f32.mrf.mxu0
        %v3419 = vadd.f32 0.0, %v3418
        %3420 = vdwg.mxu0
        %v3422 = vsel %vm3004, %v3358, 0
        %3424 = vmatpush.msra.mxu0 0.0
        %3425 = vmatpush.msra.mxu0 0.0
        %3426 = vmatpush.msra.mxu0 0.0
        %3427 = vmatpush.msra.mxu0 0.0
        %3428 = vmatpush.msra.mxu0 0.0
        %3429 = vmatpush.msra.mxu0 0.0
        %3430 = vmatpush.msra.mxu0 0.0
        %3431 = vmatpush.msra.mxu0 0.0
        %3432 = vmatpush.msra.mxu0 %v3389
        %3433 = vmatpush.msra.mxu0 %v3388
        %3434 = vmatpush.msra.mxu0 %v3387
        %3435 = vmatpush.msra.mxu0 %v3386
        %3436 = vmatpush.msra.mxu0 %v3385
        %3437 = vmatpush.msra.mxu0 %v3384
        %3438 = vmatpush.msra.mxu0 %v3383
        %3439 = vmatpush.msra.mxu0 %v3382
        %3440 = vmatmul.f32.gmra.mxu0 %v3422
        %v3441 = vpop.f32.mrf.mxu0
        %v3442 = vadd.f32 %v3419, %v3441
        %3443 = vdwg.mxu0
        %s3444 = scalar_lea.vmem [#allocation15], 128
        %v3445 = vld [vmem:[%s3444] sm:$0xff]
        %v3446 = vld [vmem:[%s3444 + $0x8] sm:$0xff]
        %v3447 = vld [vmem:[%s3444 + $0x10] sm:$0xff]
        %v3448 = vld [vmem:[%s3444 + $0x18] sm:$0xff]
        %v3449 = vld [vmem:[%s3444 + $0x20] sm:$0xff]
        %v3450 = vld [vmem:[%s3444 + $0x28] sm:$0xff]
        %v3451 = vld [vmem:[%s3444 + $0x30] sm:$0xff]
        %v3452 = vld [vmem:[%s3444 + $0x38] sm:$0xff]
        %v3454 = vsel %vm3004, %v3380, 0
        %3456 = vmatpush.msra.mxu0 0.0
        %3457 = vmatpush.msra.mxu0 0.0
        %3458 = vmatpush.msra.mxu0 0.0
        %3459 = vmatpush.msra.mxu0 0.0
        %3460 = vmatpush.msra.mxu0 0.0
        %3461 = vmatpush.msra.mxu0 0.0
        %3462 = vmatpush.msra.mxu0 0.0
        %3463 = vmatpush.msra.mxu0 0.0
        %3464 = vmatpush.msra.mxu0 %v3452
        %3465 = vmatpush.msra.mxu0 %v3451
        %3466 = vmatpush.msra.mxu0 %v3450
        %3467 = vmatpush.msra.mxu0 %v3449
        %3468 = vmatpush.msra.mxu0 %v3448
        %3469 = vmatpush.msra.mxu0 %v3447
        %3470 = vmatpush.msra.mxu0 %v3446
        %3471 = vmatpush.msra.mxu0 %v3445
        %3472 = vmatmul.f32.gmra.mxu0 %v3454
        %v3473 = vpop.f32.mrf.mxu0
        %v3474 = vadd.f32 0.0, %v3473
        %3475 = vdwg.mxu0
        %v3476 = vadd.f32 %v3442, %v3474
        %v3477 = vld [vmem:[%s12] sm:$0x1]
        %v3479 = vperm.slane %v3477, 0
        %v3481 = vadd.f32 %v3476, %v3479
        %v3482 = vsel %vm3333, %v2322, 0
        %v3485 = vsel %vm3336, %v3481, 0
        %3487 = vmatpush.msra.mxu0 0.0
        %3488 = vmatpush.msra.mxu0 0.0
        %3489 = vmatpush.msra.mxu0 0.0
        %3490 = vmatpush.msra.mxu0 0.0
        %3491 = vmatpush.msra.mxu0 0.0
        %3492 = vmatpush.msra.mxu0 0.0
        %3493 = vmatpush.msra.mxu0 0.0
        %3494 = vmatpush.msra.mxu0 0.0
        %3495 = vmatpush.msra.mxu0 0.0
        %3496 = vmatpush.msra.mxu0 0.0
        %3497 = vmatpush.msra.mxu0 0.0
        %3498 = vmatpush.msra.mxu0 0.0
        %3499 = vmatpush.msra.mxu0 0.0
        %3500 = vmatpush.msra.mxu0 0.0
        %3501 = vmatpush.msra.mxu0 0.0
        %3502 = vmatpush.msra.mxu0 %v3485
        %3503 = vmatmul.f32.gmra.mxu0 %v3482
        %v3504 = vpop.f32.mrf.mxu0
        %v3505 = vadd.f32 0.0, %v3504
        %3506 = vdwg.mxu0
        %v3507 = vsel %vm3333, %v2384, 0
        %3509 = vmatpush.msra.mxu0 0.0
        %3510 = vmatpush.msra.mxu0 0.0
        %3511 = vmatpush.msra.mxu0 0.0
        %3512 = vmatpush.msra.mxu0 0.0
        %3513 = vmatpush.msra.mxu0 0.0
        %3514 = vmatpush.msra.mxu0 0.0
        %3515 = vmatpush.msra.mxu0 0.0
        %3516 = vmatpush.msra.mxu0 0.0
        %3517 = vmatpush.msra.mxu0 0.0
        %3518 = vmatpush.msra.mxu0 0.0
        %3519 = vmatpush.msra.mxu0 0.0
        %3520 = vmatpush.msra.mxu0 0.0
        %3521 = vmatpush.msra.mxu0 0.0
        %3522 = vmatpush.msra.mxu0 0.0
        %3523 = vmatpush.msra.mxu0 0.0
        %3524 = vmatpush.msra.mxu0 %v3485
        %3525 = vmatmul.f32.gmra.mxu0 %v3507
        %v3526 = vpop.f32.mrf.mxu0
        %v3527 = vadd.f32 0.0, %v3526
        %3528 = vdwg.mxu0
        %v3529 = vmax.f32 %v3505, %v3527
        %v3530 = vmax.f32 %v3529, 0.0
        %v3531 = vld [vmem:[#allocation16] sm:$0xff]
        %v3532 = vld [vmem:[#allocation16 + $0x8] sm:$0xff]
        %v3533 = vld [vmem:[#allocation16 + $0x10] sm:$0xff]
        %v3534 = vld [vmem:[#allocation16 + $0x18] sm:$0xff]
        %v3535 = vld [vmem:[#allocation16 + $0x20] sm:$0xff]
        %v3536 = vld [vmem:[#allocation16 + $0x28] sm:$0xff]
        %v3537 = vld [vmem:[#allocation16 + $0x30] sm:$0xff]
        %v3538 = vld [vmem:[#allocation16 + $0x38] sm:$0xff]
        %v3539 = vld [vmem:[%s14] sm:$0x1]
        %v3541 = vsel %vm3004, %v3530, 0
        %3543 = vmatpush.msra.mxu0 0.0
        %3544 = vmatpush.msra.mxu0 0.0
        %3545 = vmatpush.msra.mxu0 0.0
        %3546 = vmatpush.msra.mxu0 0.0
        %3547 = vmatpush.msra.mxu0 0.0
        %3548 = vmatpush.msra.mxu0 0.0
        %3549 = vmatpush.msra.mxu0 0.0
        %3550 = vmatpush.msra.mxu0 0.0
        %3551 = vmatpush.msra.mxu0 %v3538
        %3552 = vmatpush.msra.mxu0 %v3537
        %3553 = vmatpush.msra.mxu0 %v3536
        %3554 = vmatpush.msra.mxu0 %v3535
        %3555 = vmatpush.msra.mxu0 %v3534
        %3556 = vmatpush.msra.mxu0 %v3533
        %3557 = vmatpush.msra.mxu0 %v3532
        %3558 = vmatpush.msra.mxu0 %v3531
        %3559 = vmatmul.f32.gmra.mxu0 %v3541
        %v3560 = vpop.f32.mrf.mxu0
        %v3561 = vadd.f32 %v3539, %v3560
        %3562 = vdwg.mxu0
        %v3563 = vld [vmem:[#allocation18] sm:$0xff]
        %v3564 = vld [vmem:[#allocation18 + $0x8] sm:$0xff]
        %v3565 = vld [vmem:[#allocation18 + $0x10] sm:$0xff]
        %v3566 = vld [vmem:[#allocation18 + $0x18] sm:$0xff]
        %v3567 = vld [vmem:[#allocation18 + $0x20] sm:$0xff]
        %v3568 = vld [vmem:[#allocation18 + $0x28] sm:$0xff]
        %v3569 = vld [vmem:[#allocation18 + $0x30] sm:$0xff]
        %v3570 = vld [vmem:[#allocation18 + $0x38] sm:$0xff]
        %v3571 = vld [vmem:[#allocation18 + $0x40] sm:$0xff]
        %v3572 = vld [vmem:[#allocation18 + $0x48] sm:$0xff]
        %v3573 = vld [vmem:[#allocation18 + $0x50] sm:$0xff]
        %v3574 = vld [vmem:[#allocation18 + $0x58] sm:$0xff]
        %v3575 = vld [vmem:[#allocation18 + $0x60] sm:$0xff]
        %v3576 = vld [vmem:[#allocation18 + $0x68] sm:$0xff]
        %v3577 = vld [vmem:[#allocation18 + $0x70] sm:$0xff]
        %v3578 = vld [vmem:[#allocation18 + $0x78] sm:$0xff]
        %v3579 = vld [vmem:[#allocation18 + $0x80] sm:$0xff]
        %v3580 = vld [vmem:[#allocation18 + $0x88] sm:$0xff]
        %v3581 = vld [vmem:[#allocation18 + $0x90] sm:$0xff]
        %v3582 = vld [vmem:[#allocation18 + $0x98] sm:$0xff]
        %v3583 = vld [vmem:[#allocation18 + $0xa0] sm:$0xff]
        %v3584 = vld [vmem:[#allocation18 + $0xa8] sm:$0xff]
        %v3585 = vld [vmem:[#allocation18 + $0xb0] sm:$0xff]
        %v3586 = vld [vmem:[#allocation18 + $0xb8] sm:$0xff]
        %v3587 = vld [vmem:[#allocation18 + $0xc0] sm:$0xff]
        %v3588 = vld [vmem:[#allocation18 + $0xc8] sm:$0xff]
        %v3589 = vld [vmem:[#allocation18 + $0xd0] sm:$0xff]
        %v3590 = vld [vmem:[#allocation18 + $0xd8] sm:$0xff]
        %v3591 = vld [vmem:[#allocation18 + $0xe0] sm:$0xff]
        %v3592 = vld [vmem:[#allocation18 + $0xe8] sm:$0xff]
        %v3593 = vld [vmem:[#allocation18 + $0xf0] sm:$0xff]
        %v3594 = vld [vmem:[#allocation18 + $0xf8] sm:$0xff]
        %v3595 = vld [vmem:[#allocation18 + $0x100] sm:$0xff]
        %v3596 = vld [vmem:[#allocation18 + $0x108] sm:$0xff]
        %v3597 = vld [vmem:[#allocation18 + $0x110] sm:$0xff]
        %v3598 = vld [vmem:[#allocation18 + $0x118] sm:$0xff]
        %v3599 = vld [vmem:[#allocation18 + $0x120] sm:$0xff]
        %v3600 = vld [vmem:[#allocation18 + $0x128] sm:$0xff]
        %v3601 = vld [vmem:[#allocation18 + $0x130] sm:$0xff]
        %v3602 = vld [vmem:[#allocation18 + $0x138] sm:$0xff]
        %v3603 = vld [vmem:[#allocation18 + $0x140] sm:$0xff]
        %v3604 = vld [vmem:[#allocation18 + $0x148] sm:$0xff]
        %v3605 = vld [vmem:[#allocation18 + $0x150] sm:$0xff]
        %v3606 = vld [vmem:[#allocation18 + $0x158] sm:$0xff]
        %v3607 = vld [vmem:[#allocation18 + $0x160] sm:$0xff]
        %v3608 = vld [vmem:[#allocation18 + $0x168] sm:$0xff]
        %v3609 = vld [vmem:[#allocation18 + $0x170] sm:$0xff]
        %v3610 = vld [vmem:[#allocation18 + $0x178] sm:$0xff]
        %v3611 = vld [vmem:[%s16] sm:$0x7]
        %v3613 = vperm.slane %v3611, 0
        %v3614 = vperm.slane %v3611, 1
        %v3615 = vperm.slane %v3611, 2
        %3619 = vmatpush.msra.mxu0 %v3608
        %3620 = vmatpush.msra.mxu0 %v3605
        %3621 = vmatpush.msra.mxu0 %v3602
        %3622 = vmatpush.msra.mxu0 %v3599
        %3623 = vmatpush.msra.mxu0 %v3596
        %3624 = vmatpush.msra.mxu0 %v3593
        %3625 = vmatpush.msra.mxu0 %v3590
        %3626 = vmatpush.msra.mxu0 %v3587
        %3627 = vmatpush.msra.mxu0 %v3584
        %3628 = vmatpush.msra.mxu0 %v3581
        %3629 = vmatpush.msra.mxu0 %v3578
        %3630 = vmatpush.msra.mxu0 %v3575
        %3631 = vmatpush.msra.mxu0 %v3572
        %3632 = vmatpush.msra.mxu0 %v3569
        %3633 = vmatpush.msra.mxu0 %v3566
        %3634 = vmatpush.msra.mxu0 %v3563
        %3635 = vmatmul.f32.gmra.mxu0 %v3561
        %v3636 = vpop.f32.mrf.mxu0
        %v3637 = vadd.f32 %v3613, %v3636
        %3638 = vdwg.mxu0
        %3639 = vmatpush.msra.mxu0 %v3609
        %3640 = vmatpush.msra.mxu0 %v3606
        %3641 = vmatpush.msra.mxu0 %v3603
        %3642 = vmatpush.msra.mxu0 %v3600
        %3643 = vmatpush.msra.mxu0 %v3597
        %3644 = vmatpush.msra.mxu0 %v3594
        %3645 = vmatpush.msra.mxu0 %v3591
        %3646 = vmatpush.msra.mxu0 %v3588
        %3647 = vmatpush.msra.mxu0 %v3585
        %3648 = vmatpush.msra.mxu0 %v3582
        %3649 = vmatpush.msra.mxu0 %v3579
        %3650 = vmatpush.msra.mxu0 %v3576
        %3651 = vmatpush.msra.mxu0 %v3573
        %3652 = vmatpush.msra.mxu0 %v3570
        %3653 = vmatpush.msra.mxu0 %v3567
        %3654 = vmatpush.msra.mxu0 %v3564
        %3655 = vmatmul.f32.gmra.mxu0 %v3561
        %v3656 = vpop.f32.mrf.mxu0
        %v3657 = vadd.f32 %v3614, %v3656
        %3658 = vdwg.mxu0
        %3659 = vmatpush.msra.mxu0 %v3610
        %3660 = vmatpush.msra.mxu0 %v3607
        %3661 = vmatpush.msra.mxu0 %v3604
        %3662 = vmatpush.msra.mxu0 %v3601
        %3663 = vmatpush.msra.mxu0 %v3598
        %3664 = vmatpush.msra.mxu0 %v3595
        %3665 = vmatpush.msra.mxu0 %v3592
        %3666 = vmatpush.msra.mxu0 %v3589
        %3667 = vmatpush.msra.mxu0 %v3586
        %3668 = vmatpush.msra.mxu0 %v3583
        %3669 = vmatpush.msra.mxu0 %v3580
        %3670 = vmatpush.msra.mxu0 %v3577
        %3671 = vmatpush.msra.mxu0 %v3574
        %3672 = vmatpush.msra.mxu0 %v3571
        %3673 = vmatpush.msra.mxu0 %v3568
        %3674 = vmatpush.msra.mxu0 %v3565
        %3675 = vmatmul.f32.gmra.mxu0 %v3561
        %v3676 = vpop.f32.mrf.mxu0
        %v3677 = vadd.f32 %v3615, %v3676
        %3678 = vdwg.mxu0
        %v3679 = vmax.f32 %v3637, 0.0
        %v3680 = vmax.f32 %v3657, 0.0
        %v3681 = vmax.f32 %v3677, 0.0
        %v3682 = vld [vmem:[#allocation19] sm:$0xff]
        %v3683 = vld [vmem:[#allocation19 + $0x8] sm:$0xff]
        %v3684 = vld [vmem:[#allocation19 + $0x10] sm:$0xff]
        %v3685 = vld [vmem:[#allocation19 + $0x18] sm:$0xff]
        %v3686 = vld [vmem:[#allocation19 + $0x20] sm:$0xff]
        %v3687 = vld [vmem:[#allocation19 + $0x28] sm:$0xff]
        %v3688 = vld [vmem:[#allocation19 + $0x30] sm:$0xff]
        %v3689 = vld [vmem:[#allocation19 + $0x38] sm:$0xff]
        %v3690 = vld [vmem:[#allocation19 + $0x40] sm:$0xff]
        %v3691 = vld [vmem:[#allocation19 + $0x48] sm:$0xff]
        %v3692 = vld [vmem:[#allocation19 + $0x50] sm:$0xff]
        %v3693 = vld [vmem:[#allocation19 + $0x58] sm:$0xff]
        %v3694 = vld [vmem:[#allocation19 + $0x60] sm:$0xff]
        %v3695 = vld [vmem:[#allocation19 + $0x68] sm:$0xff]
        %v3696 = vld [vmem:[#allocation19 + $0x70] sm:$0xff]
        %v3697 = vld [vmem:[#allocation19 + $0x78] sm:$0xff]
        %v3698 = vld [vmem:[#allocation19 + $0x80] sm:$0xff]
        %v3699 = vld [vmem:[#allocation19 + $0x88] sm:$0xff]
        %v3700 = vld [vmem:[#allocation19 + $0x90] sm:$0xff]
        %v3701 = vld [vmem:[#allocation19 + $0x98] sm:$0xff]
        %v3702 = vld [vmem:[#allocation19 + $0xa0] sm:$0xff]
        %v3703 = vld [vmem:[#allocation19 + $0xa8] sm:$0xff]
        %v3704 = vld [vmem:[#allocation19 + $0xb0] sm:$0xff]
        %v3705 = vld [vmem:[#allocation19 + $0xb8] sm:$0xff]
        %v3706 = vld [vmem:[#allocation19 + $0xc0] sm:$0xff]
        %v3707 = vld [vmem:[#allocation19 + $0xc8] sm:$0xff]
        %v3708 = vld [vmem:[#allocation19 + $0xd0] sm:$0xff]
        %v3709 = vld [vmem:[#allocation19 + $0xd8] sm:$0xff]
        %v3710 = vld [vmem:[#allocation19 + $0xe0] sm:$0xff]
        %v3711 = vld [vmem:[#allocation19 + $0xe8] sm:$0xff]
        %v3712 = vld [vmem:[#allocation19 + $0xf0] sm:$0xff]
        %v3713 = vld [vmem:[#allocation19 + $0xf8] sm:$0xff]
        %v3714 = vld [vmem:[#allocation19 + $0x100] sm:$0xff]
        %v3715 = vld [vmem:[#allocation19 + $0x108] sm:$0xff]
        %v3716 = vld [vmem:[#allocation19 + $0x110] sm:$0xff]
        %v3717 = vld [vmem:[#allocation19 + $0x118] sm:$0xff]
        %v3718 = vld [vmem:[#allocation19 + $0x120] sm:$0xff]
        %v3719 = vld [vmem:[#allocation19 + $0x128] sm:$0xff]
        %v3720 = vld [vmem:[#allocation19 + $0x130] sm:$0xff]
        %v3721 = vld [vmem:[#allocation19 + $0x138] sm:$0xff]
        %v3722 = vld [vmem:[#allocation19 + $0x140] sm:$0xff]
        %v3723 = vld [vmem:[#allocation19 + $0x148] sm:$0xff]
        %v3724 = vld [vmem:[#allocation19 + $0x150] sm:$0xff]
        %v3725 = vld [vmem:[#allocation19 + $0x158] sm:$0xff]
        %v3726 = vld [vmem:[#allocation19 + $0x160] sm:$0xff]
        %v3727 = vld [vmem:[#allocation19 + $0x168] sm:$0xff]
        %v3728 = vld [vmem:[#allocation19 + $0x170] sm:$0xff]
        %v3729 = vld [vmem:[#allocation19 + $0x178] sm:$0xff]
        %v3730 = vld [vmem:[%s18] sm:$0x1]
        %3731 = vmatpush.msra.mxu0 %v3697
        %3732 = vmatpush.msra.mxu0 %v3696
        %3733 = vmatpush.msra.mxu0 %v3695
        %3734 = vmatpush.msra.mxu0 %v3694
        %3735 = vmatpush.msra.mxu0 %v3693
        %3736 = vmatpush.msra.mxu0 %v3692
        %3737 = vmatpush.msra.mxu0 %v3691
        %3738 = vmatpush.msra.mxu0 %v3690
        %3739 = vmatpush.msra.mxu0 %v3689
        %3740 = vmatpush.msra.mxu0 %v3688
        %3741 = vmatpush.msra.mxu0 %v3687
        %3742 = vmatpush.msra.mxu0 %v3686
        %3743 = vmatpush.msra.mxu0 %v3685
        %3744 = vmatpush.msra.mxu0 %v3684
        %3745 = vmatpush.msra.mxu0 %v3683
        %3746 = vmatpush.msra.mxu0 %v3682
        %3747 = vmatmul.f32.gmra.mxu0 %v3679
        %v3748 = vpop.f32.mrf.mxu0
        %v3749 = vadd.f32 %v3730, %v3748
        %3750 = vdwg.mxu0
        %3751 = vmatpush.msra.mxu0 %v3713
        %3752 = vmatpush.msra.mxu0 %v3712
        %3753 = vmatpush.msra.mxu0 %v3711
        %3754 = vmatpush.msra.mxu0 %v3710
        %3755 = vmatpush.msra.mxu0 %v3709
        %3756 = vmatpush.msra.mxu0 %v3708
        %3757 = vmatpush.msra.mxu0 %v3707
        %3758 = vmatpush.msra.mxu0 %v3706
        %3759 = vmatpush.msra.mxu0 %v3705
        %3760 = vmatpush.msra.mxu0 %v3704
        %3761 = vmatpush.msra.mxu0 %v3703
        %3762 = vmatpush.msra.mxu0 %v3702
        %3763 = vmatpush.msra.mxu0 %v3701
        %3764 = vmatpush.msra.mxu0 %v3700
        %3765 = vmatpush.msra.mxu0 %v3699
        %3766 = vmatpush.msra.mxu0 %v3698
        %3767 = vmatmul.f32.gmra.mxu0 %v3680
        %v3768 = vpop.f32.mrf.mxu0
        %v3769 = vadd.f32 %v3749, %v3768
        %3770 = vdwg.mxu0
        %3771 = vmatpush.msra.mxu0 %v3729
        %3772 = vmatpush.msra.mxu0 %v3728
        %3773 = vmatpush.msra.mxu0 %v3727
        %3774 = vmatpush.msra.mxu0 %v3726
        %3775 = vmatpush.msra.mxu0 %v3725
        %3776 = vmatpush.msra.mxu0 %v3724
        %3777 = vmatpush.msra.mxu0 %v3723
        %3778 = vmatpush.msra.mxu0 %v3722
        %3779 = vmatpush.msra.mxu0 %v3721
        %3780 = vmatpush.msra.mxu0 %v3720
        %3781 = vmatpush.msra.mxu0 %v3719
        %3782 = vmatpush.msra.mxu0 %v3718
        %3783 = vmatpush.msra.mxu0 %v3717
        %3784 = vmatpush.msra.mxu0 %v3716
        %3785 = vmatpush.msra.mxu0 %v3715
        %3786 = vmatpush.msra.mxu0 %v3714
        %3787 = vmatmul.f32.gmra.mxu0 %v3681
        %v3788 = vpop.f32.mrf.mxu0
        %v3789 = vadd.f32 %v3769, %v3788
        %3790 = vdwg.mxu0
        %3791 = vst [vmem:[%s789] sm:$0x1] %v3789
        %p3792 = scmp.lt.s32.totalorder %s37, 1
        %s3793 = scalar_select %p3792, %s37, 1
        %s3794 = scalar_lea.vmem %s19, %s3793
        // Predicated region
        $region145: #{wdcnnp_forward.1} parent=95 // pred_check
          %p3795 = pneg %p459
        $region146: #{wdcnnp_forward.1} parent=95 // pred_check_branch
          %3797 = sbr.rel (%p3795) target = $region148
        $region147: #{wdcnnp_forward.1} parent=95 // pred_region
          _
        $region148: #{wdcnnp_forward.1} parent=95 // pred_fallthru
          _
      $region96: #{wdcnnp_forward.1} parent=5 // pred_fallthru
        _
      %p3798 = scmp.le.s32.totalorder 2, %s32
      // Predicated region
      $region149: #{wdcnnp_forward.1} parent=5 // pred_check
        %p3799 = pneg %p3798
      $region150: #{wdcnnp_forward.1} parent=5 // pred_check_branch
        %3801 = sbr.rel (%p3799) target = $region152
      $region151: #{wdcnnp_forward.1} parent=5 // pred_region
        %s3802 = ssub.s32 %s32, 2
        // Predicated region
        $region153: #{wdcnnp_forward.1} parent=151 // pred_check
          %p3803 = pneg %p465
        $region154: #{wdcnnp_forward.1} parent=151 // pred_check_branch
          %3805 = sbr.rel (%p3803) target = $region156
        $region155: #{wdcnnp_forward.1} parent=151 // pred_region
          %p3806 = scmp.lt.s32.totalorder %s38, 1
          %s3807 = scalar_select %p3806, %s38, 1
          %s3808 = scalar_lea.vmem %s19, %s3807
        $region156: #{wdcnnp_forward.1} parent=151 // pred_fallthru
          _
      $region152: #{wdcnnp_forward.1} parent=5 // pred_fallthru
        _
    $region6: #{wdcnnp_forward.1} parent=1 // loop_footer
      %s36 = sadd.s32 1, %s32
    $region7: #{wdcnnp_forward.1} parent=1 // loop_footer_branch
      %31 = sbr.rel target = $region3
    $region8: #{wdcnnp_forward.1} parent=1 // loop_exit
      _
    %3809 = vsyncpa [#allocation3], 1
    %s3810 = scalar_lea.sflag [#allocation3], 1
    %3811 = vsyncpa %s3810, 1
    %3812 = vsyncpa [#allocation5], 1
    %3813 = vsyncpa [#allocation8], 1
    %3814 = vsyncpa [#allocation11], 1
    %3815 = vsyncpa [#allocation14], 1
    %3816 = vsyncpa [#allocation17], 1
    %3817 = vsyncpa [#allocation20], 1

</llo_original>
